<compile_context>
chip_gen: v7x
topology: tpu7x:2x2x1
jax: 0.10.0
libtpu: 0.0.40
codegen_flags: <defaults>
</compile_context>

<pallas_src>
import functools

import jax
import jax.numpy as jnp
from jax.experimental import pallas as pl
from jax.experimental.pallas import tpu as pltpu


# ----------------------------- in-kernel helpers -----------------------------

def _batchnorm(x, gamma, beta, eps=1e-5):
    """BatchNorm1d, training-mode batch statistics (biased variance), eps=1e-5."""
    mean = jnp.mean(x, axis=0, keepdims=True)
    var = jnp.mean((x - mean) ** 2, axis=0, keepdims=True)
    return (x - mean) * jax.lax.rsqrt(var + eps) * gamma + beta


def _lin_plus_gat(xn, mask_f, bias, lin_w, lin_b, gat_w, gat_b,
                  att_src_bd, att_dst_bd, heads, hid):
    """relu( xn @ lin_w + lin_b  +  multi-head GAT(xn) + gat_b )."""
    # Linear branch (MXU).
    lin = jnp.dot(xn, lin_w, preferred_element_type=jnp.float32) + lin_b

    # Shared GAT projection (MXU).
    h = jnp.dot(xn, gat_w, preferred_element_type=jnp.float32)            # (N, heads*hid)

    # All heads' attention logits with two small MXU matmuls + ONE transpose.
    a_dst = jnp.dot(h, att_dst_bd, preferred_element_type=jnp.float32)    # (N, heads)
    a_src = jnp.dot(h, att_src_bd, preferred_element_type=jnp.float32)    # (N, heads)
    a_src_t = a_src.T                                                     # (heads, N)

    outs = []
    for hd in range(heads):                       # heads is small & static -> unrolled
        e = a_dst[:, hd:hd + 1] + a_src_t[hd:hd + 1, :]                   # (N, N)
        e = jnp.maximum(e, 0.2 * e)                                       # LeakyReLU(0.2)
        e = e + bias                                                      # -1e9 on non-edges
        m = jnp.max(e, axis=1, keepdims=True)
        p = jnp.exp(e - m) * mask_f                                       # un-normalized weights
        denom = jnp.sum(p, axis=1, keepdims=True)
        h_h = h[:, hd * hid:(hd + 1) * hid]
        num = jnp.dot(p, h_h, preferred_element_type=jnp.float32)         # (N, hid)
        outs.append(num * pl.reciprocal(denom, approx=True))              # fold softmax norm
    gat = outs[0] if heads == 1 else jnp.concatenate(outs, axis=1)        # (N, heads*hid)

    return jnp.maximum(lin + gat + gat_b, 0.0)                            # ReLU


# --------------------------------- kernel ------------------------------------

def _net_kernel(x_ref, adj_ref,
                bn1_g_ref, bn1_b_ref, lin1_w_ref, lin1_b_ref,
                gat1_w_ref, gat1_b_ref, att1_s_ref, att1_d_ref,
                bn3_g_ref, bn3_b_ref, lin3_w_ref, lin3_b_ref,
                gat3_w_ref, gat3_b_ref, att3_s_ref, att3_d_ref,
                o_ref, *, heads1, hid1, hid2_pad):
    # Edge mask / additive bias: computed once, reused by every head of both layers.
    mask_f = adj_ref[...].astype(jnp.float32)          # 0/1 bf16 mask upcast once
    bias = jnp.where(mask_f > 0, 0.0, jnp.float32(-1e9))

    x = x_ref[...].astype(jnp.float32)

    # ---- Layer 1: bn1 -> relu(lin1 + GAT1) ----
    xn1 = _batchnorm(x, bn1_g_ref[...], bn1_b_ref[...])
    h1 = _lin_plus_gat(xn1, mask_f, bias,
                       lin1_w_ref[...], lin1_b_ref[...],
                       gat1_w_ref[...], gat1_b_ref[...],
                       att1_s_ref[...], att1_d_ref[...],
                       heads1, hid1)

    # ---- Layer 2: bn3 -> relu(lin3 + GAT3) (single head, weights zero-padded to
    # a lane-dense width so the only HBM write is a full-width store) ----
    xn3 = _batchnorm(h1, bn3_g_ref[...], bn3_b_ref[...])
    o_ref[...] = _lin_plus_gat(xn3, mask_f, bias,
                               lin3_w_ref[...], lin3_b_ref[...],
                               gat3_w_ref[...], gat3_b_ref[...],
                               att3_s_ref[...], att3_d_ref[...],
                               1, hid2_pad)


# -------------------------------- wrapper -------------------------------------

def _block_diag(att):
    """(heads, hid) attention vectors -> (heads*hid, heads) block-diagonal matrix."""
    heads, hid = att.shape
    out = jnp.zeros((heads * hid, heads), jnp.float32)
    for h in range(heads):
        out = out.at[h * hid:(h + 1) * hid, h].set(att[h])
    return out


def _pad_cols(w, width):
    return jnp.zeros((w.shape[0], width), w.dtype).at[:, :w.shape[1]].set(w)


def _pad_rows(w, rows):
    return jnp.zeros((rows, w.shape[1]), w.dtype).at[:w.shape[0], :].set(w)


def net_forward(x, adj_bf16, params1, params2, *, heads, hidden, out_pad=128):
    """Fused bn1 -> (lin1 + GAT1) -> relu -> bn3 -> (lin3 + GAT3) -> relu."""
    N = x.shape[0]
    out_dim = params2["lin_w"].shape[1]            # = 2

    # Layer-1 attention vectors -> block-diagonal matrices for one-matmul logits.
    a1_s = _block_diag(params1["att_src"])         # (heads*hidden, heads)
    a1_d = _block_diag(params1["att_dst"])

    # Layer-2 parameters zero-padded to a lane-dense output width.
    l3_w = _pad_cols(params2["lin_w"], out_pad)
    l3_b = _pad_cols(params2["lin_b"], out_pad)
    g3_w = _pad_cols(params2["gat_w"], out_pad)
    g3_b = _pad_cols(params2["gat_b"], out_pad)
    a3_s = _pad_rows(_block_diag(params2["att_src"]), out_pad)   # (out_pad, 1)
    a3_d = _pad_rows(_block_diag(params2["att_dst"]), out_pad)

    args = (x, adj_bf16,
            params1["bn_gamma"], params1["bn_beta"],
            params1["lin_w"], params1["lin_b"],
            params1["gat_w"], params1["gat_b"], a1_s, a1_d,
            params2["bn_gamma"], params2["bn_beta"],
            l3_w, l3_b, g3_w, g3_b, a3_s, a3_d)

    kernel = functools.partial(_net_kernel, heads1=heads, hid1=hidden,
                               hid2_pad=out_pad)
    vmem = pl.BlockSpec(memory_space=pltpu.MemorySpace.VMEM)
    out = pl.pallas_call(
        kernel,
        out_shape=jax.ShapeDtypeStruct((N, out_pad), jnp.float32),
        in_specs=[vmem] * len(args),
        out_specs=vmem,
    )(*args)
    return out[:, :out_dim]


def _glorot(key, shape):
    fan_in, fan_out = shape[0], shape[-1]
    lim = (6.0 / (fan_in + fan_out)) ** 0.5
    return jax.random.uniform(key, shape, jnp.float32, -lim, lim)


if __name__ == "__main__":
    # Small synthetic graph consistent with the module's shapes.
    N = 128            # number of nodes
    F_IN = 32          # data.x.size(1) after timestamp-fold concat (synthetic)
    HIDDEN = 8
    HEADS = 4
    H1 = HIDDEN * HEADS
    E = 512            # number of edges

    keys = iter(jax.random.split(jax.random.PRNGKey(0), 16))

    x = jax.random.normal(next(keys), (N, F_IN), jnp.float32)

    # edge_index -> dense adjacency mask (adj[dst, src] = 1), plus self-loops.
    # Stored as bfloat16: the mask is exactly 0/1 so the cast is lossless.
    src = jax.random.randint(next(keys), (E,), 0, N)
    dst = jax.random.randint(next(keys), (E,), 0, N)
    adj = jnp.zeros((N, N), jnp.float32).at[dst, src].set(1.0)
    adj = jnp.maximum(adj, jnp.eye(N, dtype=jnp.float32))
    adj_bf16 = adj.astype(jnp.bfloat16)

    # Deterministic parameter init (reset_parameters equivalent; bn gamma=1, beta=0).
    params1 = dict(
        bn_gamma=jnp.ones((1, F_IN), jnp.float32),
        bn_beta=jnp.zeros((1, F_IN), jnp.float32),
        lin_w=_glorot(next(keys), (F_IN, H1)),
        lin_b=jnp.zeros((1, H1), jnp.float32),
        gat_w=_glorot(next(keys), (F_IN, H1)),
        gat_b=jnp.zeros((1, H1), jnp.float32),
        att_src=_glorot(next(keys), (HEADS, HIDDEN)),
        att_dst=_glorot(next(keys), (HEADS, HIDDEN)),
    )
    params2 = dict(
        bn_gamma=jnp.ones((1, H1), jnp.float32),
        bn_beta=jnp.zeros((1, H1), jnp.float32),
        lin_w=_glorot(next(keys), (H1, 2)),
        lin_b=jnp.zeros((1, 2), jnp.float32),
        gat_w=_glorot(next(keys), (H1, 2)),
        gat_b=jnp.zeros((1, 2), jnp.float32),
        att_src=_glorot(next(keys), (1, 2)),
        att_dst=_glorot(next(keys), (1, 2)),
    )

    fwd = jax.jit(functools.partial(net_forward, heads=HEADS, hidden=HIDDEN))
    out = fwd(x, adj_bf16, params1, params2)
    out = jax.block_until_ready(out)

    assert out.shape == (N, 2)
    assert bool(jnp.all(jnp.isfinite(out)))
    assert bool(jnp.all(out >= 0.0))  # final ReLU
    print("KERNEL_OK")
</pallas_src>

<mosaic_0001>
module attributes {stable_mosaic.version = 11 : i64} {
  func.func @_net_kernel(%arg0: memref<128x32xf32, #tpu.memory_space<vmem>>, %arg1: memref<128x128xbf16, #tpu.memory_space<vmem>>, %arg2: memref<1x32xf32, #tpu.memory_space<vmem>>, %arg3: memref<1x32xf32, #tpu.memory_space<vmem>>, %arg4: memref<32x32xf32, #tpu.memory_space<vmem>>, %arg5: memref<1x32xf32, #tpu.memory_space<vmem>>, %arg6: memref<32x32xf32, #tpu.memory_space<vmem>>, %arg7: memref<1x32xf32, #tpu.memory_space<vmem>>, %arg8: memref<32x4xf32, #tpu.memory_space<vmem>>, %arg9: memref<32x4xf32, #tpu.memory_space<vmem>>, %arg10: memref<1x32xf32, #tpu.memory_space<vmem>>, %arg11: memref<1x32xf32, #tpu.memory_space<vmem>>, %arg12: memref<32x128xf32, #tpu.memory_space<vmem>>, %arg13: memref<1x128xf32, #tpu.memory_space<vmem>>, %arg14: memref<32x128xf32, #tpu.memory_space<vmem>>, %arg15: memref<1x128xf32, #tpu.memory_space<vmem>>, %arg16: memref<128x1xf32, #tpu.memory_space<vmem>>, %arg17: memref<128x1xf32, #tpu.memory_space<vmem>>, %arg18: memref<128x128xf32, #tpu.memory_space<vmem>>) attributes {dimension_semantics = [], scalar_prefetch = 0 : i64, scratch_operands = 0 : i64, tpu.core_type = #tpu.core_type<tc>} {
    %c0 = arith.constant 0 : index
    %c0_0 = arith.constant 0 : index
    %0 = vector.load %arg1[%c0, %c0_0] : memref<128x128xbf16, #tpu.memory_space<vmem>>, vector<128x128xbf16>
    %1 = arith.extf %0 : vector<128x128xbf16> to vector<128x128xf32>
    %cst = arith.constant 0.000000e+00 : f32
    %2 = vector.broadcast %cst : f32 to vector<128x128xf32>
    %3 = arith.cmpf ogt, %1, %2 : vector<128x128xf32>
    %cst_1 = arith.constant 0.000000e+00 : f32
    %cst_2 = arith.constant -1.000000e+09 : f32
    %4 = vector.broadcast %cst_1 : f32 to vector<128x128xf32>
    %5 = vector.broadcast %cst_2 : f32 to vector<128x128xf32>
    %6 = arith.select %3, %4, %5 : vector<128x128xi1>, vector<128x128xf32>
    %c0_3 = arith.constant 0 : index
    %c0_4 = arith.constant 0 : index
    %7 = vector.load %arg0[%c0_3, %c0_4] : memref<128x32xf32, #tpu.memory_space<vmem>>, vector<128x32xf32>
    %c0_5 = arith.constant 0 : index
    %c0_6 = arith.constant 0 : index
    %8 = vector.load %arg2[%c0_5, %c0_6] : memref<1x32xf32, #tpu.memory_space<vmem>>, vector<1x32xf32>
    %c0_7 = arith.constant 0 : index
    %c0_8 = arith.constant 0 : index
    %9 = vector.load %arg3[%c0_7, %c0_8] : memref<1x32xf32, #tpu.memory_space<vmem>>, vector<1x32xf32>
    %cst_9 = arith.constant dense<0.000000e+00> : vector<32xf32>
    %10 = vector.multi_reduction <add>, %7, %cst_9 [0] : vector<128x32xf32> to vector<32xf32>
    %11 = vector.shape_cast %10 : vector<32xf32> to vector<1x32xf32>
    %cst_10 = arith.constant 1.280000e+02 : f32
    %12 = vector.broadcast %cst_10 : f32 to vector<1x32xf32>
    %13 = arith.divf %11, %12 : vector<1x32xf32>
    %14 = vector.broadcast %13 : vector<1x32xf32> to vector<128x32xf32>
    %15 = arith.subf %7, %14 : vector<128x32xf32>
    %16 = arith.mulf %15, %15 : vector<128x32xf32>
    %cst_11 = arith.constant dense<0.000000e+00> : vector<32xf32>
    %17 = vector.multi_reduction <add>, %16, %cst_11 [0] : vector<128x32xf32> to vector<32xf32>
    %18 = vector.shape_cast %17 : vector<32xf32> to vector<1x32xf32>
    %cst_12 = arith.constant 1.280000e+02 : f32
    %19 = vector.broadcast %cst_12 : f32 to vector<1x32xf32>
    %20 = arith.divf %18, %19 : vector<1x32xf32>
    %21 = vector.broadcast %13 : vector<1x32xf32> to vector<128x32xf32>
    %22 = arith.subf %7, %21 : vector<128x32xf32>
    %cst_13 = arith.constant 9.99999974E-6 : f32
    %23 = vector.broadcast %cst_13 : f32 to vector<1x32xf32>
    %24 = arith.addf %20, %23 : vector<1x32xf32>
    %25 = math.rsqrt %24 : vector<1x32xf32>
    %26 = vector.broadcast %25 : vector<1x32xf32> to vector<128x32xf32>
    %27 = arith.mulf %22, %26 : vector<128x32xf32>
    %28 = vector.broadcast %8 : vector<1x32xf32> to vector<128x32xf32>
    %29 = arith.mulf %27, %28 : vector<128x32xf32>
    %30 = vector.broadcast %9 : vector<1x32xf32> to vector<128x32xf32>
    %31 = arith.addf %29, %30 : vector<128x32xf32>
    %c0_14 = arith.constant 0 : index
    %c0_15 = arith.constant 0 : index
    %32 = vector.load %arg4[%c0_14, %c0_15] : memref<32x32xf32, #tpu.memory_space<vmem>>, vector<32x32xf32>
    %c0_16 = arith.constant 0 : index
    %c0_17 = arith.constant 0 : index
    %33 = vector.load %arg5[%c0_16, %c0_17] : memref<1x32xf32, #tpu.memory_space<vmem>>, vector<1x32xf32>
    %c0_18 = arith.constant 0 : index
    %c0_19 = arith.constant 0 : index
    %34 = vector.load %arg6[%c0_18, %c0_19] : memref<32x32xf32, #tpu.memory_space<vmem>>, vector<32x32xf32>
    %c0_20 = arith.constant 0 : index
    %c0_21 = arith.constant 0 : index
    %35 = vector.load %arg7[%c0_20, %c0_21] : memref<1x32xf32, #tpu.memory_space<vmem>>, vector<1x32xf32>
    %c0_22 = arith.constant 0 : index
    %c0_23 = arith.constant 0 : index
    %36 = vector.load %arg8[%c0_22, %c0_23] : memref<32x4xf32, #tpu.memory_space<vmem>>, vector<32x4xf32>
    %c0_24 = arith.constant 0 : index
    %c0_25 = arith.constant 0 : index
    %37 = vector.load %arg9[%c0_24, %c0_25] : memref<32x4xf32, #tpu.memory_space<vmem>>, vector<32x4xf32>
    %cst_26 = arith.constant dense<0.000000e+00> : vector<128x32xf32>
    %38 = tpu.matmul %31, %32, %cst_26 {dimension_numbers = #tpu.dot_dimension_numbers<[1], [0], [0], [1], [0, 0, 1, 1], [], []>} : vector<128x32xf32>, vector<32x32xf32>, vector<128x32xf32> -> vector<128x32xf32>
    %39 = vector.broadcast %33 : vector<1x32xf32> to vector<128x32xf32>
    %40 = arith.addf %38, %39 : vector<128x32xf32>
    %cst_27 = arith.constant dense<0.000000e+00> : vector<128x32xf32>
    %41 = tpu.matmul %31, %34, %cst_27 {dimension_numbers = #tpu.dot_dimension_numbers<[1], [0], [0], [1], [0, 0, 1, 1], [], []>} : vector<128x32xf32>, vector<32x32xf32>, vector<128x32xf32> -> vector<128x32xf32>
    %cst_28 = arith.constant dense<0.000000e+00> : vector<128x4xf32>
    %42 = tpu.matmul %41, %37, %cst_28 {dimension_numbers = #tpu.dot_dimension_numbers<[1], [0], [0], [1], [0, 0, 1, 1], [], []>} : vector<128x32xf32>, vector<32x4xf32>, vector<128x4xf32> -> vector<128x4xf32>
    %cst_29 = arith.constant dense<0.000000e+00> : vector<128x4xf32>
    %43 = tpu.matmul %41, %36, %cst_29 {dimension_numbers = #tpu.dot_dimension_numbers<[1], [0], [0], [1], [0, 0, 1, 1], [], []>} : vector<128x32xf32>, vector<32x4xf32>, vector<128x4xf32> -> vector<128x4xf32>
    %44 = tpu.transpose %43, [1, 0] : vector<128x4xf32> -> vector<4x128xf32>
    %45 = vector.extract_strided_slice %42 {offsets = [0, 0], sizes = [128, 1], strides = [1, 1]} : vector<128x4xf32> to vector<128x1xf32>
    %46 = vector.extract_strided_slice %44 {offsets = [0, 0], sizes = [1, 128], strides = [1, 1]} : vector<4x128xf32> to vector<1x128xf32>
    %47 = vector.broadcast %45 : vector<128x1xf32> to vector<128x128xf32>
    %48 = vector.broadcast %46 : vector<1x128xf32> to vector<128x128xf32>
    %49 = arith.addf %47, %48 : vector<128x128xf32>
    %cst_30 = arith.constant 2.000000e-01 : f32
    %50 = vector.broadcast %cst_30 : f32 to vector<128x128xf32>
    %51 = arith.mulf %50, %49 : vector<128x128xf32>
    %52 = arith.maximumf %49, %51 : vector<128x128xf32>
    %53 = arith.addf %52, %6 : vector<128x128xf32>
    %cst_31 = arith.constant dense<0xFF800000> : vector<128xf32>
    %54 = vector.multi_reduction <maximumf>, %53, %cst_31 [1] : vector<128x128xf32> to vector<128xf32>
    %55 = vector.shape_cast %54 : vector<128xf32> to vector<128x1xf32>
    %56 = vector.broadcast %55 : vector<128x1xf32> to vector<128x128xf32>
    %57 = arith.subf %53, %56 : vector<128x128xf32>
    %58 = math.exp %57 : vector<128x128xf32>
    %59 = arith.mulf %58, %1 : vector<128x128xf32>
    %cst_32 = arith.constant dense<0.000000e+00> : vector<128xf32>
    %60 = vector.multi_reduction <add>, %59, %cst_32 [1] : vector<128x128xf32> to vector<128xf32>
    %61 = vector.shape_cast %60 : vector<128xf32> to vector<128x1xf32>
    %62 = vector.extract_strided_slice %41 {offsets = [0, 0], sizes = [128, 8], strides = [1, 1]} : vector<128x32xf32> to vector<128x8xf32>
    %cst_33 = arith.constant dense<0.000000e+00> : vector<128x8xf32>
    %63 = tpu.matmul %59, %62, %cst_33 {dimension_numbers = #tpu.dot_dimension_numbers<[1], [0], [0], [1], [0, 0, 1, 1], [], []>} : vector<128x128xf32>, vector<128x8xf32>, vector<128x8xf32> -> vector<128x8xf32>
    %64 = tpu.reciprocal %61 {approx = true} : vector<128x1xf32> -> vector<128x1xf32>
    %65 = vector.broadcast %64 : vector<128x1xf32> to vector<128x8xf32>
    %66 = arith.mulf %63, %65 : vector<128x8xf32>
    %67 = vector.extract_strided_slice %42 {offsets = [0, 1], sizes = [128, 1], strides = [1, 1]} : vector<128x4xf32> to vector<128x1xf32>
    %68 = vector.extract_strided_slice %44 {offsets = [1, 0], sizes = [1, 128], strides = [1, 1]} : vector<4x128xf32> to vector<1x128xf32>
    %69 = vector.broadcast %67 : vector<128x1xf32> to vector<128x128xf32>
    %70 = vector.broadcast %68 : vector<1x128xf32> to vector<128x128xf32>
    %71 = arith.addf %69, %70 : vector<128x128xf32>
    %cst_34 = arith.constant 2.000000e-01 : f32
    %72 = vector.broadcast %cst_34 : f32 to vector<128x128xf32>
    %73 = arith.mulf %72, %71 : vector<128x128xf32>
    %74 = arith.maximumf %71, %73 : vector<128x128xf32>
    %75 = arith.addf %74, %6 : vector<128x128xf32>
    %cst_35 = arith.constant dense<0xFF800000> : vector<128xf32>
    %76 = vector.multi_reduction <maximumf>, %75, %cst_35 [1] : vector<128x128xf32> to vector<128xf32>
    %77 = vector.shape_cast %76 : vector<128xf32> to vector<128x1xf32>
    %78 = vector.broadcast %77 : vector<128x1xf32> to vector<128x128xf32>
    %79 = arith.subf %75, %78 : vector<128x128xf32>
    %80 = math.exp %79 : vector<128x128xf32>
    %81 = arith.mulf %80, %1 : vector<128x128xf32>
    %cst_36 = arith.constant dense<0.000000e+00> : vector<128xf32>
    %82 = vector.multi_reduction <add>, %81, %cst_36 [1] : vector<128x128xf32> to vector<128xf32>
    %83 = vector.shape_cast %82 : vector<128xf32> to vector<128x1xf32>
    %84 = vector.extract_strided_slice %41 {offsets = [0, 8], sizes = [128, 8], strides = [1, 1]} : vector<128x32xf32> to vector<128x8xf32>
    %cst_37 = arith.constant dense<0.000000e+00> : vector<128x8xf32>
    %85 = tpu.matmul %81, %84, %cst_37 {dimension_numbers = #tpu.dot_dimension_numbers<[1], [0], [0], [1], [0, 0, 1, 1], [], []>} : vector<128x128xf32>, vector<128x8xf32>, vector<128x8xf32> -> vector<128x8xf32>
    %86 = tpu.reciprocal %83 {approx = true} : vector<128x1xf32> -> vector<128x1xf32>
    %87 = vector.broadcast %86 : vector<128x1xf32> to vector<128x8xf32>
    %88 = arith.mulf %85, %87 : vector<128x8xf32>
    %89 = vector.extract_strided_slice %42 {offsets = [0, 2], sizes = [128, 1], strides = [1, 1]} : vector<128x4xf32> to vector<128x1xf32>
    %90 = vector.extract_strided_slice %44 {offsets = [2, 0], sizes = [1, 128], strides = [1, 1]} : vector<4x128xf32> to vector<1x128xf32>
    %91 = vector.broadcast %89 : vector<128x1xf32> to vector<128x128xf32>
    %92 = vector.broadcast %90 : vector<1x128xf32> to vector<128x128xf32>
    %93 = arith.addf %91, %92 : vector<128x128xf32>
    %cst_38 = arith.constant 2.000000e-01 : f32
    %94 = vector.broadcast %cst_38 : f32 to vector<128x128xf32>
    %95 = arith.mulf %94, %93 : vector<128x128xf32>
    %96 = arith.maximumf %93, %95 : vector<128x128xf32>
    %97 = arith.addf %96, %6 : vector<128x128xf32>
    %cst_39 = arith.constant dense<0xFF800000> : vector<128xf32>
    %98 = vector.multi_reduction <maximumf>, %97, %cst_39 [1] : vector<128x128xf32> to vector<128xf32>
    %99 = vector.shape_cast %98 : vector<128xf32> to vector<128x1xf32>
    %100 = vector.broadcast %99 : vector<128x1xf32> to vector<128x128xf32>
    %101 = arith.subf %97, %100 : vector<128x128xf32>
    %102 = math.exp %101 : vector<128x128xf32>
    %103 = arith.mulf %102, %1 : vector<128x128xf32>
    %cst_40 = arith.constant dense<0.000000e+00> : vector<128xf32>
    %104 = vector.multi_reduction <add>, %103, %cst_40 [1] : vector<128x128xf32> to vector<128xf32>
    %105 = vector.shape_cast %104 : vector<128xf32> to vector<128x1xf32>
    %106 = vector.extract_strided_slice %41 {offsets = [0, 16], sizes = [128, 8], strides = [1, 1]} : vector<128x32xf32> to vector<128x8xf32>
    %cst_41 = arith.constant dense<0.000000e+00> : vector<128x8xf32>
    %107 = tpu.matmul %103, %106, %cst_41 {dimension_numbers = #tpu.dot_dimension_numbers<[1], [0], [0], [1], [0, 0, 1, 1], [], []>} : vector<128x128xf32>, vector<128x8xf32>, vector<128x8xf32> -> vector<128x8xf32>
    %108 = tpu.reciprocal %105 {approx = true} : vector<128x1xf32> -> vector<128x1xf32>
    %109 = vector.broadcast %108 : vector<128x1xf32> to vector<128x8xf32>
    %110 = arith.mulf %107, %109 : vector<128x8xf32>
    %111 = vector.extract_strided_slice %42 {offsets = [0, 3], sizes = [128, 1], strides = [1, 1]} : vector<128x4xf32> to vector<128x1xf32>
    %112 = vector.extract_strided_slice %44 {offsets = [3, 0], sizes = [1, 128], strides = [1, 1]} : vector<4x128xf32> to vector<1x128xf32>
    %113 = vector.broadcast %111 : vector<128x1xf32> to vector<128x128xf32>
    %114 = vector.broadcast %112 : vector<1x128xf32> to vector<128x128xf32>
    %115 = arith.addf %113, %114 : vector<128x128xf32>
    %cst_42 = arith.constant 2.000000e-01 : f32
    %116 = vector.broadcast %cst_42 : f32 to vector<128x128xf32>
    %117 = arith.mulf %116, %115 : vector<128x128xf32>
    %118 = arith.maximumf %115, %117 : vector<128x128xf32>
    %119 = arith.addf %118, %6 : vector<128x128xf32>
    %cst_43 = arith.constant dense<0xFF800000> : vector<128xf32>
    %120 = vector.multi_reduction <maximumf>, %119, %cst_43 [1] : vector<128x128xf32> to vector<128xf32>
    %121 = vector.shape_cast %120 : vector<128xf32> to vector<128x1xf32>
    %122 = vector.broadcast %121 : vector<128x1xf32> to vector<128x128xf32>
    %123 = arith.subf %119, %122 : vector<128x128xf32>
    %124 = math.exp %123 : vector<128x128xf32>
    %125 = arith.mulf %124, %1 : vector<128x128xf32>
    %cst_44 = arith.constant dense<0.000000e+00> : vector<128xf32>
    %126 = vector.multi_reduction <add>, %125, %cst_44 [1] : vector<128x128xf32> to vector<128xf32>
    %127 = vector.shape_cast %126 : vector<128xf32> to vector<128x1xf32>
    %128 = vector.extract_strided_slice %41 {offsets = [0, 24], sizes = [128, 8], strides = [1, 1]} : vector<128x32xf32> to vector<128x8xf32>
    %cst_45 = arith.constant dense<0.000000e+00> : vector<128x8xf32>
    %129 = tpu.matmul %125, %128, %cst_45 {dimension_numbers = #tpu.dot_dimension_numbers<[1], [0], [0], [1], [0, 0, 1, 1], [], []>} : vector<128x128xf32>, vector<128x8xf32>, vector<128x8xf32> -> vector<128x8xf32>
    %130 = tpu.reciprocal %127 {approx = true} : vector<128x1xf32> -> vector<128x1xf32>
    %131 = vector.broadcast %130 : vector<128x1xf32> to vector<128x8xf32>
    %132 = arith.mulf %129, %131 : vector<128x8xf32>
    %133 = tpu.concatenate %66, %88, %110, %132 in 1 : vector<128x8xf32>, vector<128x8xf32>, vector<128x8xf32>, vector<128x8xf32> -> vector<128x32xf32>
    %134 = arith.addf %40, %133 : vector<128x32xf32>
    %135 = vector.broadcast %35 : vector<1x32xf32> to vector<128x32xf32>
    %136 = arith.addf %134, %135 : vector<128x32xf32>
    %cst_46 = arith.constant 0.000000e+00 : f32
    %137 = vector.broadcast %cst_46 : f32 to vector<128x32xf32>
    %138 = arith.maximumf %136, %137 : vector<128x32xf32>
    %c0_47 = arith.constant 0 : index
    %c0_48 = arith.constant 0 : index
    %139 = vector.load %arg10[%c0_47, %c0_48] : memref<1x32xf32, #tpu.memory_space<vmem>>, vector<1x32xf32>
    %c0_49 = arith.constant 0 : index
    %c0_50 = arith.constant 0 : index
    %140 = vector.load %arg11[%c0_49, %c0_50] : memref<1x32xf32, #tpu.memory_space<vmem>>, vector<1x32xf32>
    %cst_51 = arith.constant dense<0.000000e+00> : vector<32xf32>
    %141 = vector.multi_reduction <add>, %138, %cst_51 [0] : vector<128x32xf32> to vector<32xf32>
    %142 = vector.shape_cast %141 : vector<32xf32> to vector<1x32xf32>
    %cst_52 = arith.constant 1.280000e+02 : f32
    %143 = vector.broadcast %cst_52 : f32 to vector<1x32xf32>
    %144 = arith.divf %142, %143 : vector<1x32xf32>
    %145 = vector.broadcast %144 : vector<1x32xf32> to vector<128x32xf32>
    %146 = arith.subf %138, %145 : vector<128x32xf32>
    %147 = arith.mulf %146, %146 : vector<128x32xf32>
    %cst_53 = arith.constant dense<0.000000e+00> : vector<32xf32>
    %148 = vector.multi_reduction <add>, %147, %cst_53 [0] : vector<128x32xf32> to vector<32xf32>
    %149 = vector.shape_cast %148 : vector<32xf32> to vector<1x32xf32>
    %cst_54 = arith.constant 1.280000e+02 : f32
    %150 = vector.broadcast %cst_54 : f32 to vector<1x32xf32>
    %151 = arith.divf %149, %150 : vector<1x32xf32>
    %152 = vector.broadcast %144 : vector<1x32xf32> to vector<128x32xf32>
    %153 = arith.subf %138, %152 : vector<128x32xf32>
    %cst_55 = arith.constant 9.99999974E-6 : f32
    %154 = vector.broadcast %cst_55 : f32 to vector<1x32xf32>
    %155 = arith.addf %151, %154 : vector<1x32xf32>
    %156 = math.rsqrt %155 : vector<1x32xf32>
    %157 = vector.broadcast %156 : vector<1x32xf32> to vector<128x32xf32>
    %158 = arith.mulf %153, %157 : vector<128x32xf32>
    %159 = vector.broadcast %139 : vector<1x32xf32> to vector<128x32xf32>
    %160 = arith.mulf %158, %159 : vector<128x32xf32>
    %161 = vector.broadcast %140 : vector<1x32xf32> to vector<128x32xf32>
    %162 = arith.addf %160, %161 : vector<128x32xf32>
    %c0_56 = arith.constant 0 : index
    %c0_57 = arith.constant 0 : index
    %163 = vector.load %arg12[%c0_56, %c0_57] : memref<32x128xf32, #tpu.memory_space<vmem>>, vector<32x128xf32>
    %c0_58 = arith.constant 0 : index
    %c0_59 = arith.constant 0 : index
    %164 = vector.load %arg13[%c0_58, %c0_59] : memref<1x128xf32, #tpu.memory_space<vmem>>, vector<1x128xf32>
    %c0_60 = arith.constant 0 : index
    %c0_61 = arith.constant 0 : index
    %165 = vector.load %arg14[%c0_60, %c0_61] : memref<32x128xf32, #tpu.memory_space<vmem>>, vector<32x128xf32>
    %c0_62 = arith.constant 0 : index
    %c0_63 = arith.constant 0 : index
    %166 = vector.load %arg15[%c0_62, %c0_63] : memref<1x128xf32, #tpu.memory_space<vmem>>, vector<1x128xf32>
    %c0_64 = arith.constant 0 : index
    %c0_65 = arith.constant 0 : index
    %167 = vector.load %arg16[%c0_64, %c0_65] : memref<128x1xf32, #tpu.memory_space<vmem>>, vector<128x1xf32>
    %c0_66 = arith.constant 0 : index
    %c0_67 = arith.constant 0 : index
    %168 = vector.load %arg17[%c0_66, %c0_67] : memref<128x1xf32, #tpu.memory_space<vmem>>, vector<128x1xf32>
    %cst_68 = arith.constant dense<0.000000e+00> : vector<128x128xf32>
    %169 = tpu.matmul %162, %163, %cst_68 {dimension_numbers = #tpu.dot_dimension_numbers<[1], [0], [0], [1], [0, 0, 1, 1], [], []>} : vector<128x32xf32>, vector<32x128xf32>, vector<128x128xf32> -> vector<128x128xf32>
    %170 = vector.broadcast %164 : vector<1x128xf32> to vector<128x128xf32>
    %171 = arith.addf %169, %170 : vector<128x128xf32>
    %cst_69 = arith.constant dense<0.000000e+00> : vector<128x128xf32>
    %172 = tpu.matmul %162, %165, %cst_69 {dimension_numbers = #tpu.dot_dimension_numbers<[1], [0], [0], [1], [0, 0, 1, 1], [], []>} : vector<128x32xf32>, vector<32x128xf32>, vector<128x128xf32> -> vector<128x128xf32>
    %cst_70 = arith.constant dense<0.000000e+00> : vector<128x1xf32>
    %173 = tpu.matmul %172, %168, %cst_70 {dimension_numbers = #tpu.dot_dimension_numbers<[1], [0], [0], [1], [0, 0, 1, 1], [], []>} : vector<128x128xf32>, vector<128x1xf32>, vector<128x1xf32> -> vector<128x1xf32>
    %cst_71 = arith.constant dense<0.000000e+00> : vector<128x1xf32>
    %174 = tpu.matmul %172, %167, %cst_71 {dimension_numbers = #tpu.dot_dimension_numbers<[1], [0], [0], [1], [0, 0, 1, 1], [], []>} : vector<128x128xf32>, vector<128x1xf32>, vector<128x1xf32> -> vector<128x1xf32>
    %175 = tpu.transpose %174, [1, 0] : vector<128x1xf32> -> vector<1x128xf32>
    %176 = vector.broadcast %173 : vector<128x1xf32> to vector<128x128xf32>
    %177 = vector.broadcast %175 : vector<1x128xf32> to vector<128x128xf32>
    %178 = arith.addf %176, %177 : vector<128x128xf32>
    %cst_72 = arith.constant 2.000000e-01 : f32
    %179 = vector.broadcast %cst_72 : f32 to vector<128x128xf32>
    %180 = arith.mulf %179, %178 : vector<128x128xf32>
    %181 = arith.maximumf %178, %180 : vector<128x128xf32>
    %182 = arith.addf %181, %6 : vector<128x128xf32>
    %cst_73 = arith.constant dense<0xFF800000> : vector<128xf32>
    %183 = vector.multi_reduction <maximumf>, %182, %cst_73 [1] : vector<128x128xf32> to vector<128xf32>
    %184 = vector.shape_cast %183 : vector<128xf32> to vector<128x1xf32>
    %185 = vector.broadcast %184 : vector<128x1xf32> to vector<128x128xf32>
    %186 = arith.subf %182, %185 : vector<128x128xf32>
    %187 = math.exp %186 : vector<128x128xf32>
    %188 = arith.mulf %187, %1 : vector<128x128xf32>
    %cst_74 = arith.constant dense<0.000000e+00> : vector<128xf32>
    %189 = vector.multi_reduction <add>, %188, %cst_74 [1] : vector<128x128xf32> to vector<128xf32>
    %190 = vector.shape_cast %189 : vector<128xf32> to vector<128x1xf32>
    %cst_75 = arith.constant dense<0.000000e+00> : vector<128x128xf32>
    %191 = tpu.matmul %188, %172, %cst_75 {dimension_numbers = #tpu.dot_dimension_numbers<[1], [0], [0], [1], [0, 0, 1, 1], [], []>} : vector<128x128xf32>, vector<128x128xf32>, vector<128x128xf32> -> vector<128x128xf32>
    %192 = tpu.reciprocal %190 {approx = true} : vector<128x1xf32> -> vector<128x1xf32>
    %193 = vector.broadcast %192 : vector<128x1xf32> to vector<128x128xf32>
    %194 = arith.mulf %191, %193 : vector<128x128xf32>
    %195 = arith.addf %171, %194 : vector<128x128xf32>
    %196 = vector.broadcast %166 : vector<1x128xf32> to vector<128x128xf32>
    %197 = arith.addf %195, %196 : vector<128x128xf32>
    %cst_76 = arith.constant 0.000000e+00 : f32
    %198 = vector.broadcast %cst_76 : f32 to vector<128x128xf32>
    %199 = arith.maximumf %197, %198 : vector<128x128xf32>
    %c0_77 = arith.constant 0 : index
    %c0_78 = arith.constant 0 : index
    %200 = vector.load %arg18[%c0_77, %c0_78] : memref<128x128xf32, #tpu.memory_space<vmem>>, vector<128x128xf32>
    tpu.vector_store %arg18[%c0_77, %c0_78], %199 {strides = array<i32>} : memref<128x128xf32, #tpu.memory_space<vmem>>, vector<128x128xf32>,
    return
  }
}

</mosaic_0001>

<llo_original>
// kernel: net_forward.1
$region0: #{net_forward.1}
  #allocation0 [shape = 'u32[]', space=smem, size = 0x4, offset = 0x4, fixed_abs, tag = 'smem constant byte address 0x4 - core index']
  #allocation1 [shape = 'u32[144,128]{1,0:T(1,128)}', space=vmem, size = 0x12000, scoped, tag = 'internal scratch']
  %s0 = inlined_call_operand.vmem [shape: f32[128,32], index: 0, kind: input, shape index: {}]
  %s1 = inlined_call_operand.vmem [shape: bf16[128,128], index: 1, kind: input, shape index: {}]
  %s2 = inlined_call_operand.vmem [shape: f32[1,32], index: 2, kind: input, shape index: {}]
  %s3 = inlined_call_operand.vmem [shape: f32[1,32], index: 3, kind: input, shape index: {}]
  %s4 = inlined_call_operand.vmem [shape: f32[32,32], index: 4, kind: input, shape index: {}]
  %s5 = inlined_call_operand.vmem [shape: f32[1,32], index: 5, kind: input, shape index: {}]
  %s6 = inlined_call_operand.vmem [shape: f32[32,32], index: 6, kind: input, shape index: {}]
  %s7 = inlined_call_operand.vmem [shape: f32[1,32], index: 7, kind: input, shape index: {}]
  %s8 = inlined_call_operand.vmem [shape: f32[32,4], index: 8, kind: input, shape index: {}]
  %s9 = inlined_call_operand.vmem [shape: f32[32,4], index: 9, kind: input, shape index: {}]
  %s10 = inlined_call_operand.vmem [shape: f32[1,32], index: 10, kind: input, shape index: {}]
  %s11 = inlined_call_operand.vmem [shape: f32[1,32], index: 11, kind: input, shape index: {}]
  %s12 = inlined_call_operand.vmem [shape: f32[32,128], index: 12, kind: input, shape index: {}]
  %s13 = inlined_call_operand.vmem [shape: f32[1,128], index: 13, kind: input, shape index: {}]
  %s14 = inlined_call_operand.vmem [shape: f32[32,128], index: 14, kind: input, shape index: {}]
  %s15 = inlined_call_operand.vmem [shape: f32[1,128], index: 15, kind: input, shape index: {}]
  %s16 = inlined_call_operand.vmem [shape: f32[128,1], index: 16, kind: input, shape index: {}]
  %s17 = inlined_call_operand.vmem [shape: f32[128,1], index: 17, kind: input, shape index: {}]
  %s18 = inlined_call_operand.vmem [shape: f32[128,128], index: 18, kind: output, shape index: {}]
  %s19 = sld [smem:[#allocation0]]
  $region82: #{net_forward.1} parent=0
    _
  %s21 = ssub.s32 1, %s19
  %s22 = scalar_select 0, %s21, %s19
  // Predicated region
  $region2: #{net_forward.1} parent=0 // pred_check
    _
  $region3: #{net_forward.1} parent=0 // pred_check_branch
    %24 = sbr.rel (0) target = $region5
  $region4: #{net_forward.1} parent=0 // pred_region
    _
  $region5: #{net_forward.1} parent=0 // pred_fallthru
    _
  // Predicated region
  $region6: #{net_forward.1} parent=0 // pred_check
    _
  $region7: #{net_forward.1} parent=0 // pred_check_branch
    %26 = sbr.rel (0) target = $region9
  $region8: #{net_forward.1} parent=0 // pred_region
    _
  $region9: #{net_forward.1} parent=0 // pred_fallthru
    _
  // Predicated region
  $region10: #{net_forward.1} parent=0 // pred_check
    _
  $region11: #{net_forward.1} parent=0 // pred_check_branch
    %28 = sbr.rel (0) target = $region13
  $region12: #{net_forward.1} parent=0 // pred_region
    _
  $region13: #{net_forward.1} parent=0 // pred_fallthru
    _
  // Predicated region
  $region14: #{net_forward.1} parent=0 // pred_check
    _
  $region15: #{net_forward.1} parent=0 // pred_check_branch
    %30 = sbr.rel (0) target = $region17
  $region16: #{net_forward.1} parent=0 // pred_region
    _
  $region17: #{net_forward.1} parent=0 // pred_fallthru
    _
  // Predicated region
  $region18: #{net_forward.1} parent=0 // pred_check
    _
  $region19: #{net_forward.1} parent=0 // pred_check_branch
    %32 = sbr.rel (0) target = $region21
  $region20: #{net_forward.1} parent=0 // pred_region
    _
  $region21: #{net_forward.1} parent=0 // pred_fallthru
    _
  // Predicated region
  $region22: #{net_forward.1} parent=0 // pred_check
    _
  $region23: #{net_forward.1} parent=0 // pred_check_branch
    %34 = sbr.rel (0) target = $region25
  $region24: #{net_forward.1} parent=0 // pred_region
    _
  $region25: #{net_forward.1} parent=0 // pred_fallthru
    _
  // Predicated region
  $region26: #{net_forward.1} parent=0 // pred_check
    _
  $region27: #{net_forward.1} parent=0 // pred_check_branch
    %36 = sbr.rel (0) target = $region29
  $region28: #{net_forward.1} parent=0 // pred_region
    _
  $region29: #{net_forward.1} parent=0 // pred_fallthru
    _
  // Predicated region
  $region30: #{net_forward.1} parent=0 // pred_check
    _
  $region31: #{net_forward.1} parent=0 // pred_check_branch
    %38 = sbr.rel (0) target = $region33
  $region32: #{net_forward.1} parent=0 // pred_region
    _
  $region33: #{net_forward.1} parent=0 // pred_fallthru
    _
  // Predicated region
  $region34: #{net_forward.1} parent=0 // pred_check
    _
  $region35: #{net_forward.1} parent=0 // pred_check_branch
    %40 = sbr.rel (0) target = $region37
  $region36: #{net_forward.1} parent=0 // pred_region
    _
  $region37: #{net_forward.1} parent=0 // pred_fallthru
    _
  // Predicated region
  $region38: #{net_forward.1} parent=0 // pred_check
    _
  $region39: #{net_forward.1} parent=0 // pred_check_branch
    %42 = sbr.rel (0) target = $region41
  $region40: #{net_forward.1} parent=0 // pred_region
    _
  $region41: #{net_forward.1} parent=0 // pred_fallthru
    _
  // Predicated region
  $region42: #{net_forward.1} parent=0 // pred_check
    _
  $region43: #{net_forward.1} parent=0 // pred_check_branch
    %44 = sbr.rel (0) target = $region45
  $region44: #{net_forward.1} parent=0 // pred_region
    _
  $region45: #{net_forward.1} parent=0 // pred_fallthru
    _
  // Predicated region
  $region46: #{net_forward.1} parent=0 // pred_check
    _
  $region47: #{net_forward.1} parent=0 // pred_check_branch
    %46 = sbr.rel (0) target = $region49
  $region48: #{net_forward.1} parent=0 // pred_region
    _
  $region49: #{net_forward.1} parent=0 // pred_fallthru
    _
  // Predicated region
  $region50: #{net_forward.1} parent=0 // pred_check
    _
  $region51: #{net_forward.1} parent=0 // pred_check_branch
    %48 = sbr.rel (0) target = $region53
  $region52: #{net_forward.1} parent=0 // pred_region
    _
  $region53: #{net_forward.1} parent=0 // pred_fallthru
    _
  // Predicated region
  $region54: #{net_forward.1} parent=0 // pred_check
    _
  $region55: #{net_forward.1} parent=0 // pred_check_branch
    %50 = sbr.rel (0) target = $region57
  $region56: #{net_forward.1} parent=0 // pred_region
    _
  $region57: #{net_forward.1} parent=0 // pred_fallthru
    _
  // Predicated region
  $region58: #{net_forward.1} parent=0 // pred_check
    _
  $region59: #{net_forward.1} parent=0 // pred_check_branch
    %52 = sbr.rel (0) target = $region61
  $region60: #{net_forward.1} parent=0 // pred_region
    _
  $region61: #{net_forward.1} parent=0 // pred_fallthru
    _
  // Predicated region
  $region62: #{net_forward.1} parent=0 // pred_check
    _
  $region63: #{net_forward.1} parent=0 // pred_check_branch
    %54 = sbr.rel (0) target = $region65
  $region64: #{net_forward.1} parent=0 // pred_region
    _
  $region65: #{net_forward.1} parent=0 // pred_fallthru
    _
  // Predicated region
  $region66: #{net_forward.1} parent=0 // pred_check
    _
  $region67: #{net_forward.1} parent=0 // pred_check_branch
    %56 = sbr.rel (0) target = $region69
  $region68: #{net_forward.1} parent=0 // pred_region
    _
  $region69: #{net_forward.1} parent=0 // pred_fallthru
    _
  // Predicated region
  $region70: #{net_forward.1} parent=0 // pred_check
    _
  $region71: #{net_forward.1} parent=0 // pred_check_branch
    %58 = sbr.rel (0) target = $region73
  $region72: #{net_forward.1} parent=0 // pred_region
    _
  $region73: #{net_forward.1} parent=0 // pred_fallthru
    _
  %v59 = vld [vmem:[%s1] sm:$0xf]
  %v60 = vld [vmem:[%s1 + $0x4] sm:$0xf]
  %v61 = vld [vmem:[%s1 + $0x8] sm:$0xf]
  %v62 = vld [vmem:[%s1 + $0xc] sm:$0xf]
  %v63 = vld [vmem:[%s1 + $0x10] sm:$0xf]
  %v64 = vld [vmem:[%s1 + $0x14] sm:$0xf]
  %v65 = vld [vmem:[%s1 + $0x18] sm:$0xf]
  %v66 = vld [vmem:[%s1 + $0x1c] sm:$0xf]
  %v67 = vld [vmem:[%s1 + $0x20] sm:$0xf]
  %v68 = vld [vmem:[%s1 + $0x24] sm:$0xf]
  %v69 = vld [vmem:[%s1 + $0x28] sm:$0xf]
  %v70 = vld [vmem:[%s1 + $0x2c] sm:$0xf]
  %v71 = vld [vmem:[%s1 + $0x30] sm:$0xf]
  %v72 = vld [vmem:[%s1 + $0x34] sm:$0xf]
  %v73 = vld [vmem:[%s1 + $0x38] sm:$0xf]
  %v74 = vld [vmem:[%s1 + $0x3c] sm:$0xf]
  %v75 = vunpack.c.l.bf16 %v59
  %v76 = vunpack.c.l.bf16 %v60
  %v77 = vunpack.c.l.bf16 %v61
  %v78 = vunpack.c.l.bf16 %v62
  %v79 = vunpack.c.l.bf16 %v63
  %v80 = vunpack.c.l.bf16 %v64
  %v81 = vunpack.c.l.bf16 %v65
  %v82 = vunpack.c.l.bf16 %v66
  %v83 = vunpack.c.l.bf16 %v67
  %v84 = vunpack.c.l.bf16 %v68
  %v85 = vunpack.c.l.bf16 %v69
  %v86 = vunpack.c.l.bf16 %v70
  %v87 = vunpack.c.l.bf16 %v71
  %v88 = vunpack.c.l.bf16 %v72
  %v89 = vunpack.c.l.bf16 %v73
  %v90 = vunpack.c.l.bf16 %v74
  %vm91 = vcmp.gt.f32.partialorder %v75, 0.0
  %vm92 = vcmp.gt.f32.partialorder %v76, 0.0
  %vm93 = vcmp.gt.f32.partialorder %v77, 0.0
  %vm94 = vcmp.gt.f32.partialorder %v78, 0.0
  %vm95 = vcmp.gt.f32.partialorder %v79, 0.0
  %vm96 = vcmp.gt.f32.partialorder %v80, 0.0
  %vm97 = vcmp.gt.f32.partialorder %v81, 0.0
  %vm98 = vcmp.gt.f32.partialorder %v82, 0.0
  %vm99 = vcmp.gt.f32.partialorder %v83, 0.0
  %vm100 = vcmp.gt.f32.partialorder %v84, 0.0
  %vm101 = vcmp.gt.f32.partialorder %v85, 0.0
  %vm102 = vcmp.gt.f32.partialorder %v86, 0.0
  %vm103 = vcmp.gt.f32.partialorder %v87, 0.0
  %vm104 = vcmp.gt.f32.partialorder %v88, 0.0
  %vm105 = vcmp.gt.f32.partialorder %v89, 0.0
  %vm106 = vcmp.gt.f32.partialorder %v90, 0.0
  %v107 = vsel %vm91, 0.0, -1e+09
  %v108 = vsel %vm92, 0.0, -1e+09
  %v109 = vsel %vm93, 0.0, -1e+09
  %v110 = vsel %vm94, 0.0, -1e+09
  %v111 = vsel %vm95, 0.0, -1e+09
  %v112 = vsel %vm96, 0.0, -1e+09
  %v113 = vsel %vm97, 0.0, -1e+09
  %v114 = vsel %vm98, 0.0, -1e+09
  %v115 = vsel %vm99, 0.0, -1e+09
  %v116 = vsel %vm100, 0.0, -1e+09
  %v117 = vsel %vm101, 0.0, -1e+09
  %v118 = vsel %vm102, 0.0, -1e+09
  %v119 = vsel %vm103, 0.0, -1e+09
  %v120 = vsel %vm104, 0.0, -1e+09
  %v121 = vsel %vm105, 0.0, -1e+09
  %v122 = vsel %vm106, 0.0, -1e+09
  %v123 = vld [vmem:[%s0] sm:$0xff]
  %v124 = vld [vmem:[%s0 + $0x8] sm:$0xff]
  %v125 = vld [vmem:[%s0 + $0x10] sm:$0xff]
  %v126 = vld [vmem:[%s0 + $0x18] sm:$0xff]
  %v127 = vld [vmem:[%s0 + $0x20] sm:$0xff]
  %v128 = vld [vmem:[%s0 + $0x28] sm:$0xff]
  %v129 = vld [vmem:[%s0 + $0x30] sm:$0xff]
  %v130 = vld [vmem:[%s0 + $0x38] sm:$0xff]
  %v131 = vld [vmem:[%s0 + $0x40] sm:$0xff]
  %v132 = vld [vmem:[%s0 + $0x48] sm:$0xff]
  %v133 = vld [vmem:[%s0 + $0x50] sm:$0xff]
  %v134 = vld [vmem:[%s0 + $0x58] sm:$0xff]
  %v135 = vld [vmem:[%s0 + $0x60] sm:$0xff]
  %v136 = vld [vmem:[%s0 + $0x68] sm:$0xff]
  %v137 = vld [vmem:[%s0 + $0x70] sm:$0xff]
  %v138 = vld [vmem:[%s0 + $0x78] sm:$0xff]
  %v139 = vld [vmem:[%s2] sm:$0x1]
  %v140 = vld [vmem:[%s3] sm:$0x1]
  %vm141 = vcmask 261120
  %v142 = vsel %vm141, %v123, 0.0
  %v143 = vsel %vm141, %v124, 0.0
  %v144 = vadd.f32 %v142, %v143
  %v145 = vsel %vm141, %v125, 0.0
  %v146 = vadd.f32 %v144, %v145
  %v147 = vsel %vm141, %v126, 0.0
  %v148 = vadd.f32 %v146, %v147
  %v149 = vsel %vm141, %v127, 0.0
  %v150 = vadd.f32 %v148, %v149
  %v151 = vsel %vm141, %v128, 0.0
  %v152 = vadd.f32 %v150, %v151
  %v153 = vsel %vm141, %v129, 0.0
  %v154 = vadd.f32 %v152, %v153
  %v155 = vsel %vm141, %v130, 0.0
  %v156 = vadd.f32 %v154, %v155
  %v157 = vsel %vm141, %v131, 0.0
  %v158 = vadd.f32 %v156, %v157
  %v159 = vsel %vm141, %v132, 0.0
  %v160 = vadd.f32 %v158, %v159
  %v161 = vsel %vm141, %v133, 0.0
  %v162 = vadd.f32 %v160, %v161
  %v163 = vsel %vm141, %v134, 0.0
  %v164 = vadd.f32 %v162, %v163
  %v165 = vsel %vm141, %v135, 0.0
  %v166 = vadd.f32 %v164, %v165
  %v167 = vsel %vm141, %v136, 0.0
  %v168 = vadd.f32 %v166, %v167
  %v169 = vsel %vm141, %v137, 0.0
  %v170 = vadd.f32 %v168, %v169
  %v171 = vsel %vm141, %v138, 0.0
  %v172 = vadd.f32 %v170, %v171
  %v173 = vrot.slane %v172, 4
  %v174 = vadd.f32 %v172, %v173
  %v175 = vrot.slane %v174, 2
  %v176 = vadd.f32 %v174, %v175
  %v177 = vrot.slane %v176, 1
  %v178 = vadd.f32 %v176, %v177
  %v179 = vrcp.pop 128.0
  %v180 = vmul.f32 %v178, %v179
  %v181 = vsub.f32 %v123, %v180
  %v182 = vsub.f32 %v124, %v180
  %v183 = vsub.f32 %v125, %v180
  %v184 = vsub.f32 %v126, %v180
  %v185 = vsub.f32 %v127, %v180
  %v186 = vsub.f32 %v128, %v180
  %v187 = vsub.f32 %v129, %v180
  %v188 = vsub.f32 %v130, %v180
  %v189 = vsub.f32 %v131, %v180
  %v190 = vsub.f32 %v132, %v180
  %v191 = vsub.f32 %v133, %v180
  %v192 = vsub.f32 %v134, %v180
  %v193 = vsub.f32 %v135, %v180
  %v194 = vsub.f32 %v136, %v180
  %v195 = vsub.f32 %v137, %v180
  %v196 = vsub.f32 %v138, %v180
  %v197 = vmul.f32 %v181, %v181
  %v198 = vmul.f32 %v182, %v182
  %v199 = vmul.f32 %v183, %v183
  %v200 = vmul.f32 %v184, %v184
  %v201 = vmul.f32 %v185, %v185
  %v202 = vmul.f32 %v186, %v186
  %v203 = vmul.f32 %v187, %v187
  %v204 = vmul.f32 %v188, %v188
  %v205 = vmul.f32 %v189, %v189
  %v206 = vmul.f32 %v190, %v190
  %v207 = vmul.f32 %v191, %v191
  %v208 = vmul.f32 %v192, %v192
  %v209 = vmul.f32 %v193, %v193
  %v210 = vmul.f32 %v194, %v194
  %v211 = vmul.f32 %v195, %v195
  %v212 = vmul.f32 %v196, %v196
  %v213 = vsel %vm141, %v197, 0.0
  %v214 = vsel %vm141, %v198, 0.0
  %v215 = vadd.f32 %v213, %v214
  %v216 = vsel %vm141, %v199, 0.0
  %v217 = vadd.f32 %v215, %v216
  %v218 = vsel %vm141, %v200, 0.0
  %v219 = vadd.f32 %v217, %v218
  %v220 = vsel %vm141, %v201, 0.0
  %v221 = vadd.f32 %v219, %v220
  %v222 = vsel %vm141, %v202, 0.0
  %v223 = vadd.f32 %v221, %v222
  %v224 = vsel %vm141, %v203, 0.0
  %v225 = vadd.f32 %v223, %v224
  %v226 = vsel %vm141, %v204, 0.0
  %v227 = vadd.f32 %v225, %v226
  %v228 = vsel %vm141, %v205, 0.0
  %v229 = vadd.f32 %v227, %v228
  %v230 = vsel %vm141, %v206, 0.0
  %v231 = vadd.f32 %v229, %v230
  %v232 = vsel %vm141, %v207, 0.0
  %v233 = vadd.f32 %v231, %v232
  %v234 = vsel %vm141, %v208, 0.0
  %v235 = vadd.f32 %v233, %v234
  %v236 = vsel %vm141, %v209, 0.0
  %v237 = vadd.f32 %v235, %v236
  %v238 = vsel %vm141, %v210, 0.0
  %v239 = vadd.f32 %v237, %v238
  %v240 = vsel %vm141, %v211, 0.0
  %v241 = vadd.f32 %v239, %v240
  %v242 = vsel %vm141, %v212, 0.0
  %v243 = vadd.f32 %v241, %v242
  %v244 = vrot.slane %v243, 4
  %v245 = vadd.f32 %v243, %v244
  %v246 = vrot.slane %v245, 2
  %v247 = vadd.f32 %v245, %v246
  %v248 = vrot.slane %v247, 1
  %v249 = vadd.f32 %v247, %v248
  %v250 = vmul.f32 %v249, %v179
  %v251 = vadd.f32 %v250, 1e-05
  %v252 = vrsqrt.pop %v251
  %v253 = vmul.f32 %v181, %v252
  %v254 = vmul.f32 %v182, %v252
  %v255 = vmul.f32 %v183, %v252
  %v256 = vmul.f32 %v184, %v252
  %v257 = vmul.f32 %v185, %v252
  %v258 = vmul.f32 %v186, %v252
  %v259 = vmul.f32 %v187, %v252
  %v260 = vmul.f32 %v188, %v252
  %v261 = vmul.f32 %v189, %v252
  %v262 = vmul.f32 %v190, %v252
  %v263 = vmul.f32 %v191, %v252
  %v264 = vmul.f32 %v192, %v252
  %v265 = vmul.f32 %v193, %v252
  %v266 = vmul.f32 %v194, %v252
  %v267 = vmul.f32 %v195, %v252
  %v268 = vmul.f32 %v196, %v252
  %v270 = vlaneseq
  %v271 = vshrl.u32 %v270, 7
  %v272 = vsub.s32 0, %v271
  %v273 = vrot.slane %v139, %v272
  %v275 = vmul.f32 %v253, %v273
  %v276 = vmul.f32 %v254, %v273
  %v277 = vmul.f32 %v255, %v273
  %v278 = vmul.f32 %v256, %v273
  %v279 = vmul.f32 %v257, %v273
  %v280 = vmul.f32 %v258, %v273
  %v281 = vmul.f32 %v259, %v273
  %v282 = vmul.f32 %v260, %v273
  %v283 = vmul.f32 %v261, %v273
  %v284 = vmul.f32 %v262, %v273
  %v285 = vmul.f32 %v263, %v273
  %v286 = vmul.f32 %v264, %v273
  %v287 = vmul.f32 %v265, %v273
  %v288 = vmul.f32 %v266, %v273
  %v289 = vmul.f32 %v267, %v273
  %v290 = vmul.f32 %v268, %v273
  %v292 = vlaneseq
  %v293 = vshrl.u32 %v292, 7
  %v294 = vsub.s32 0, %v293
  %v295 = vrot.slane %v140, %v294
  %v297 = vadd.f32 %v275, %v295
  %v298 = vadd.f32 %v276, %v295
  %v299 = vadd.f32 %v277, %v295
  %v300 = vadd.f32 %v278, %v295
  %v301 = vadd.f32 %v279, %v295
  %v302 = vadd.f32 %v280, %v295
  %v303 = vadd.f32 %v281, %v295
  %v304 = vadd.f32 %v282, %v295
  %v305 = vadd.f32 %v283, %v295
  %v306 = vadd.f32 %v284, %v295
  %v307 = vadd.f32 %v285, %v295
  %v308 = vadd.f32 %v286, %v295
  %v309 = vadd.f32 %v287, %v295
  %v310 = vadd.f32 %v288, %v295
  %v311 = vadd.f32 %v289, %v295
  %v312 = vadd.f32 %v290, %v295
  %v313 = vld [vmem:[%s4] sm:$0xff]
  %v314 = vld [vmem:[%s4 + $0x8] sm:$0xff]
  %v315 = vld [vmem:[%s4 + $0x10] sm:$0xff]
  %v316 = vld [vmem:[%s4 + $0x18] sm:$0xff]
  %v317 = vld [vmem:[%s5] sm:$0x1]
  %v318 = vld [vmem:[%s6] sm:$0xff]
  %v319 = vld [vmem:[%s6 + $0x8] sm:$0xff]
  %v320 = vld [vmem:[%s6 + $0x10] sm:$0xff]
  %v321 = vld [vmem:[%s6 + $0x18] sm:$0xff]
  %v322 = vld [vmem:[%s7] sm:$0x1]
  %v323 = vld [vmem:[%s8] sm:$0xff]
  %v324 = vld [vmem:[%s8 + $0x8] sm:$0xff]
  %v325 = vld [vmem:[%s8 + $0x10] sm:$0xff]
  %v326 = vld [vmem:[%s8 + $0x18] sm:$0xff]
  %v327 = vld [vmem:[%s9] sm:$0xff]
  %v328 = vld [vmem:[%s9 + $0x8] sm:$0xff]
  %v329 = vld [vmem:[%s9 + $0x10] sm:$0xff]
  %v330 = vld [vmem:[%s9 + $0x18] sm:$0xff]
  %v332 = vlaneseq
  %v333 = vshrl.u32 %v332, 7
  %v334 = vsub.s32 0, %v333
  %v335 = vrot.slane %v317, %v334
  %v338 = vsel %vm141, %v297, 0
  %v341 = vsel %vm141, %v298, 0
  %v344 = vsel %vm141, %v299, 0
  %v347 = vsel %vm141, %v300, 0
  %v350 = vsel %vm141, %v301, 0
  %v353 = vsel %vm141, %v302, 0
  %v356 = vsel %vm141, %v303, 0
  %v359 = vsel %vm141, %v304, 0
  %v362 = vsel %vm141, %v305, 0
  %v365 = vsel %vm141, %v306, 0
  %v368 = vsel %vm141, %v307, 0
  %v371 = vsel %vm141, %v308, 0
  %v374 = vsel %vm141, %v309, 0
  %v377 = vsel %vm141, %v310, 0
  %v380 = vsel %vm141, %v311, 0
  %v383 = vsel %vm141, %v312, 0
  %385 = vmatprep.subr.mxu0 0.0
  %386 = vmatpush1.msra.mxu0 %v313
  %387 = vmatprep.subr.mxu0 0.0
  %388 = vmatpush1.msra.mxu0 %v314
  %389 = vmatprep.subr.mxu0 0.0
  %390 = vmatpush1.msra.mxu0 %v315
  %391 = vmatprep.subr.mxu0 0.0
  %392 = vmatpush1.msra.mxu0 %v316
  %393 = vmatprep.subr.mxu0 0.0
  %394 = vmatpush1.msra.mxu0 0.0
  %395 = vmatprep.subr.mxu0 0.0
  %396 = vmatpush1.msra.mxu0 0.0
  %397 = vmatprep.subr.mxu0 0.0
  %398 = vmatpush1.msra.mxu0 0.0
  %399 = vmatprep.subr.mxu0 0.0
  %400 = vmatpush1.msra.mxu0 0.0
  %401 = vmatprep.subr.mxu0 0.0
  %402 = vmatpush1.msra.mxu0 0.0
  %403 = vmatprep.subr.mxu0 0.0
  %404 = vmatpush1.msra.mxu0 0.0
  %405 = vmatprep.subr.mxu0 0.0
  %406 = vmatpush1.msra.mxu0 0.0
  %407 = vmatprep.subr.mxu0 0.0
  %408 = vmatpush1.msra.mxu0 0.0
  %409 = vmatprep.subr.mxu0 0.0
  %410 = vmatpush1.msra.mxu0 0.0
  %411 = vmatprep.subr.mxu0 0.0
  %412 = vmatpush1.msra.mxu0 0.0
  %413 = vmatprep.subr.mxu0 0.0
  %414 = vmatpush1.msra.mxu0 0.0
  %415 = vmatprep.subr.mxu0 0.0
  %416 = vmatpush1.msra.mxu0 0.0
  %417 = vmatprep.subr.mxu0 0.0
  %418 = vmatpush1.msra.mxu0 0.0
  %419 = vmatprep.subr.mxu0 0.0
  %420 = vmatpush1.msra.mxu0 0.0
  %421 = vmatprep.subr.mxu0 0.0
  %422 = vmatpush1.msra.mxu0 0.0
  %423 = vmatprep.subr.mxu0 0.0
  %424 = vmatpush1.msra.mxu0 0.0
  %425 = vmatprep.subr.mxu0 0.0
  %426 = vmatpush1.msra.mxu0 0.0
  %427 = vmatprep.subr.mxu0 0.0
  %428 = vmatpush1.msra.mxu0 0.0
  %429 = vmatprep.subr.mxu0 0.0
  %430 = vmatpush1.msra.mxu0 0.0
  %431 = vmatprep.subr.mxu0 0.0
  %432 = vmatpush1.msra.mxu0 0.0
  %433 = vmatprep.subr.mxu0 0.0
  %434 = vmatpush1.msra.mxu0 0.0
  %435 = vmatprep.subr.mxu0 0.0
  %436 = vmatpush1.msra.mxu0 0.0
  %437 = vmatprep.subr.mxu0 0.0
  %438 = vmatpush1.msra.mxu0 0.0
  %439 = vmatprep.subr.mxu0 0.0
  %440 = vmatpush1.msra.mxu0 0.0
  %441 = vmatprep.subr.mxu0 0.0
  %442 = vmatpush1.msra.mxu0 0.0
  %443 = vmatprep.subr.mxu0 0.0
  %444 = vmatpush1.msra.mxu0 0.0
  %445 = vmatprep.subr.mxu0 0.0
  %446 = vmatpush1.msra.mxu0 0.0
  %447 = vmatprep.subr.mxu0 0.0
  %448 = vmatpush1.msra.mxu0 0.0
  %449 = vmatprep.mubr.f32.mxu0 0.0
  %450 = vmatmul.mubr.f32.gmra.mrb[0].mxu0 %v338
  %v451 = vpop.f32.mrb[0].mxu0
  %v452 = vadd.f32 %v335, %v451
  %v453 = vpop.f32.mrb[0].mxu0
  %454 = vmatprep.mubr.f32.mxu0 0.0
  %455 = vmatmul.mubr.f32.gmra.mrb[0].mxu0 %v341
  %v456 = vpop.f32.mrb[0].mxu0
  %v457 = vadd.f32 %v335, %v456
  %v458 = vpop.f32.mrb[0].mxu0
  %459 = vmatprep.mubr.f32.mxu0 0.0
  %460 = vmatmul.mubr.f32.gmra.mrb[0].mxu0 %v344
  %v461 = vpop.f32.mrb[0].mxu0
  %v462 = vadd.f32 %v335, %v461
  %v463 = vpop.f32.mrb[0].mxu0
  %464 = vmatprep.mubr.f32.mxu0 0.0
  %465 = vmatmul.mubr.f32.gmra.mrb[0].mxu0 %v347
  %v466 = vpop.f32.mrb[0].mxu0
  %v467 = vadd.f32 %v335, %v466
  %v468 = vpop.f32.mrb[0].mxu0
  %469 = vmatprep.mubr.f32.mxu0 0.0
  %470 = vmatmul.mubr.f32.gmra.mrb[0].mxu0 %v350
  %v471 = vpop.f32.mrb[0].mxu0
  %v472 = vadd.f32 %v335, %v471
  %v473 = vpop.f32.mrb[0].mxu0
  %474 = vmatprep.mubr.f32.mxu0 0.0
  %475 = vmatmul.mubr.f32.gmra.mrb[0].mxu0 %v353
  %v476 = vpop.f32.mrb[0].mxu0
  %v477 = vadd.f32 %v335, %v476
  %v478 = vpop.f32.mrb[0].mxu0
  %479 = vmatprep.mubr.f32.mxu0 0.0
  %480 = vmatmul.mubr.f32.gmra.mrb[0].mxu0 %v356
  %v481 = vpop.f32.mrb[0].mxu0
  %v482 = vadd.f32 %v335, %v481
  %v483 = vpop.f32.mrb[0].mxu0
  %484 = vmatprep.mubr.f32.mxu0 0.0
  %485 = vmatmul.mubr.f32.gmra.mrb[0].mxu0 %v359
  %v486 = vpop.f32.mrb[0].mxu0
  %v487 = vadd.f32 %v335, %v486
  %v488 = vpop.f32.mrb[0].mxu0
  %489 = vmatprep.mubr.f32.mxu0 0.0
  %490 = vmatmul.mubr.f32.gmra.mrb[0].mxu0 %v362
  %v491 = vpop.f32.mrb[0].mxu0
  %v492 = vadd.f32 %v335, %v491
  %v493 = vpop.f32.mrb[0].mxu0
  %494 = vmatprep.mubr.f32.mxu0 0.0
  %495 = vmatmul.mubr.f32.gmra.mrb[0].mxu0 %v365
  %v496 = vpop.f32.mrb[0].mxu0
  %v497 = vadd.f32 %v335, %v496
  %v498 = vpop.f32.mrb[0].mxu0
  %499 = vmatprep.mubr.f32.mxu0 0.0
  %500 = vmatmul.mubr.f32.gmra.mrb[0].mxu0 %v368
  %v501 = vpop.f32.mrb[0].mxu0
  %v502 = vadd.f32 %v335, %v501
  %v503 = vpop.f32.mrb[0].mxu0
  %504 = vmatprep.mubr.f32.mxu0 0.0
  %505 = vmatmul.mubr.f32.gmra.mrb[0].mxu0 %v371
  %v506 = vpop.f32.mrb[0].mxu0
  %v507 = vadd.f32 %v335, %v506
  %v508 = vpop.f32.mrb[0].mxu0
  %509 = vmatprep.mubr.f32.mxu0 0.0
  %510 = vmatmul.mubr.f32.gmra.mrb[0].mxu0 %v374
  %v511 = vpop.f32.mrb[0].mxu0
  %v512 = vadd.f32 %v335, %v511
  %v513 = vpop.f32.mrb[0].mxu0
  %514 = vmatprep.mubr.f32.mxu0 0.0
  %515 = vmatmul.mubr.f32.gmra.mrb[0].mxu0 %v377
  %v516 = vpop.f32.mrb[0].mxu0
  %v517 = vadd.f32 %v335, %v516
  %v518 = vpop.f32.mrb[0].mxu0
  %519 = vmatprep.mubr.f32.mxu0 0.0
  %520 = vmatmul.mubr.f32.gmra.mrb[0].mxu0 %v380
  %v521 = vpop.f32.mrb[0].mxu0
  %v522 = vadd.f32 %v335, %v521
  %v523 = vpop.f32.mrb[0].mxu0
  %524 = vmatprep.mubr.f32.mxu0 0.0
  %525 = vmatmul.mubr.f32.gmra.mrb[0].mxu0 %v383
  %v526 = vpop.f32.mrb[0].mxu0
  %v527 = vadd.f32 %v335, %v526
  %v528 = vpop.f32.mrb[0].mxu0
  %529 = vdwg.mxu0
  %530 = vmatprep.subr.mxu0 0.0
  %531 = vmatpush1.msra.mxu0 %v318
  %532 = vmatprep.subr.mxu0 0.0
  %533 = vmatpush1.msra.mxu0 %v319
  %534 = vmatprep.subr.mxu0 0.0
  %535 = vmatpush1.msra.mxu0 %v320
  %536 = vmatprep.subr.mxu0 0.0
  %537 = vmatpush1.msra.mxu0 %v321
  %538 = vmatprep.subr.mxu0 0.0
  %539 = vmatpush1.msra.mxu0 0.0
  %540 = vmatprep.subr.mxu0 0.0
  %541 = vmatpush1.msra.mxu0 0.0
  %542 = vmatprep.subr.mxu0 0.0
  %543 = vmatpush1.msra.mxu0 0.0
  %544 = vmatprep.subr.mxu0 0.0
  %545 = vmatpush1.msra.mxu0 0.0
  %546 = vmatprep.subr.mxu0 0.0
  %547 = vmatpush1.msra.mxu0 0.0
  %548 = vmatprep.subr.mxu0 0.0
  %549 = vmatpush1.msra.mxu0 0.0
  %550 = vmatprep.subr.mxu0 0.0
  %551 = vmatpush1.msra.mxu0 0.0
  %552 = vmatprep.subr.mxu0 0.0
  %553 = vmatpush1.msra.mxu0 0.0
  %554 = vmatprep.subr.mxu0 0.0
  %555 = vmatpush1.msra.mxu0 0.0
  %556 = vmatprep.subr.mxu0 0.0
  %557 = vmatpush1.msra.mxu0 0.0
  %558 = vmatprep.subr.mxu0 0.0
  %559 = vmatpush1.msra.mxu0 0.0
  %560 = vmatprep.subr.mxu0 0.0
  %561 = vmatpush1.msra.mxu0 0.0
  %562 = vmatprep.subr.mxu0 0.0
  %563 = vmatpush1.msra.mxu0 0.0
  %564 = vmatprep.subr.mxu0 0.0
  %565 = vmatpush1.msra.mxu0 0.0
  %566 = vmatprep.subr.mxu0 0.0
  %567 = vmatpush1.msra.mxu0 0.0
  %568 = vmatprep.subr.mxu0 0.0
  %569 = vmatpush1.msra.mxu0 0.0
  %570 = vmatprep.subr.mxu0 0.0
  %571 = vmatpush1.msra.mxu0 0.0
  %572 = vmatprep.subr.mxu0 0.0
  %573 = vmatpush1.msra.mxu0 0.0
  %574 = vmatprep.subr.mxu0 0.0
  %575 = vmatpush1.msra.mxu0 0.0
  %576 = vmatprep.subr.mxu0 0.0
  %577 = vmatpush1.msra.mxu0 0.0
  %578 = vmatprep.subr.mxu0 0.0
  %579 = vmatpush1.msra.mxu0 0.0
  %580 = vmatprep.subr.mxu0 0.0
  %581 = vmatpush1.msra.mxu0 0.0
  %582 = vmatprep.subr.mxu0 0.0
  %583 = vmatpush1.msra.mxu0 0.0
  %584 = vmatprep.subr.mxu0 0.0
  %585 = vmatpush1.msra.mxu0 0.0
  %586 = vmatprep.subr.mxu0 0.0
  %587 = vmatpush1.msra.mxu0 0.0
  %588 = vmatprep.subr.mxu0 0.0
  %589 = vmatpush1.msra.mxu0 0.0
  %590 = vmatprep.subr.mxu0 0.0
  %591 = vmatpush1.msra.mxu0 0.0
  %592 = vmatprep.subr.mxu0 0.0
  %593 = vmatpush1.msra.mxu0 0.0
  %594 = vmatprep.mubr.f32.mxu0 0.0
  %595 = vmatmul.mubr.f32.gmra.mrb[0].mxu0 %v338
  %v596 = vpop.f32.mrb[0].mxu0
  %v597 = vadd.f32 0.0, %v596
  %v598 = vpop.f32.mrb[0].mxu0
  %599 = vmatprep.mubr.f32.mxu0 0.0
  %600 = vmatmul.mubr.f32.gmra.mrb[0].mxu0 %v341
  %v601 = vpop.f32.mrb[0].mxu0
  %v602 = vadd.f32 0.0, %v601
  %v603 = vpop.f32.mrb[0].mxu0
  %604 = vmatprep.mubr.f32.mxu0 0.0
  %605 = vmatmul.mubr.f32.gmra.mrb[0].mxu0 %v344
  %v606 = vpop.f32.mrb[0].mxu0
  %v607 = vadd.f32 0.0, %v606
  %v608 = vpop.f32.mrb[0].mxu0
  %609 = vmatprep.mubr.f32.mxu0 0.0
  %610 = vmatmul.mubr.f32.gmra.mrb[0].mxu0 %v347
  %v611 = vpop.f32.mrb[0].mxu0
  %v612 = vadd.f32 0.0, %v611
  %v613 = vpop.f32.mrb[0].mxu0
  %614 = vmatprep.mubr.f32.mxu0 0.0
  %615 = vmatmul.mubr.f32.gmra.mrb[0].mxu0 %v350
  %v616 = vpop.f32.mrb[0].mxu0
  %v617 = vadd.f32 0.0, %v616
  %v618 = vpop.f32.mrb[0].mxu0
  %619 = vmatprep.mubr.f32.mxu0 0.0
  %620 = vmatmul.mubr.f32.gmra.mrb[0].mxu0 %v353
  %v621 = vpop.f32.mrb[0].mxu0
  %v622 = vadd.f32 0.0, %v621
  %v623 = vpop.f32.mrb[0].mxu0
  %624 = vmatprep.mubr.f32.mxu0 0.0
  %625 = vmatmul.mubr.f32.gmra.mrb[0].mxu0 %v356
  %v626 = vpop.f32.mrb[0].mxu0
  %v627 = vadd.f32 0.0, %v626
  %v628 = vpop.f32.mrb[0].mxu0
  %629 = vmatprep.mubr.f32.mxu0 0.0
  %630 = vmatmul.mubr.f32.gmra.mrb[0].mxu0 %v359
  %v631 = vpop.f32.mrb[0].mxu0
  %v632 = vadd.f32 0.0, %v631
  %v633 = vpop.f32.mrb[0].mxu0
  %634 = vmatprep.mubr.f32.mxu0 0.0
  %635 = vmatmul.mubr.f32.gmra.mrb[0].mxu0 %v362
  %v636 = vpop.f32.mrb[0].mxu0
  %v637 = vadd.f32 0.0, %v636
  %v638 = vpop.f32.mrb[0].mxu0
  %639 = vmatprep.mubr.f32.mxu0 0.0
  %640 = vmatmul.mubr.f32.gmra.mrb[0].mxu0 %v365
  %v641 = vpop.f32.mrb[0].mxu0
  %v642 = vadd.f32 0.0, %v641
  %v643 = vpop.f32.mrb[0].mxu0
  %644 = vmatprep.mubr.f32.mxu0 0.0
  %645 = vmatmul.mubr.f32.gmra.mrb[0].mxu0 %v368
  %v646 = vpop.f32.mrb[0].mxu0
  %v647 = vadd.f32 0.0, %v646
  %v648 = vpop.f32.mrb[0].mxu0
  %649 = vmatprep.mubr.f32.mxu0 0.0
  %650 = vmatmul.mubr.f32.gmra.mrb[0].mxu0 %v371
  %v651 = vpop.f32.mrb[0].mxu0
  %v652 = vadd.f32 0.0, %v651
  %v653 = vpop.f32.mrb[0].mxu0
  %654 = vmatprep.mubr.f32.mxu0 0.0
  %655 = vmatmul.mubr.f32.gmra.mrb[0].mxu0 %v374
  %v656 = vpop.f32.mrb[0].mxu0
  %v657 = vadd.f32 0.0, %v656
  %v658 = vpop.f32.mrb[0].mxu0
  %659 = vmatprep.mubr.f32.mxu0 0.0
  %660 = vmatmul.mubr.f32.gmra.mrb[0].mxu0 %v377
  %v661 = vpop.f32.mrb[0].mxu0
  %v662 = vadd.f32 0.0, %v661
  %v663 = vpop.f32.mrb[0].mxu0
  %664 = vmatprep.mubr.f32.mxu0 0.0
  %665 = vmatmul.mubr.f32.gmra.mrb[0].mxu0 %v380
  %v666 = vpop.f32.mrb[0].mxu0
  %v667 = vadd.f32 0.0, %v666
  %v668 = vpop.f32.mrb[0].mxu0
  %669 = vmatprep.mubr.f32.mxu0 0.0
  %670 = vmatmul.mubr.f32.gmra.mrb[0].mxu0 %v383
  %v671 = vpop.f32.mrb[0].mxu0
  %v672 = vadd.f32 0.0, %v671
  %v673 = vpop.f32.mrb[0].mxu0
  %674 = vdwg.mxu0
  %v676 = vsel %vm141, %v597, 0
  %v679 = vsel %vm141, %v602, 0
  %v682 = vsel %vm141, %v607, 0
  %v685 = vsel %vm141, %v612, 0
  %v688 = vsel %vm141, %v617, 0
  %v691 = vsel %vm141, %v622, 0
  %v694 = vsel %vm141, %v627, 0
  %v697 = vsel %vm141, %v632, 0
  %v700 = vsel %vm141, %v637, 0
  %v703 = vsel %vm141, %v642, 0
  %v706 = vsel %vm141, %v647, 0
  %v709 = vsel %vm141, %v652, 0
  %v712 = vsel %vm141, %v657, 0
  %v715 = vsel %vm141, %v662, 0
  %v718 = vsel %vm141, %v667, 0
  %v721 = vsel %vm141, %v672, 0
  %723 = vmatprep.subr.mxu0 0.0
  %724 = vmatpush1.msra.mxu0 %v327
  %725 = vmatprep.subr.mxu0 0.0
  %726 = vmatpush1.msra.mxu0 %v328
  %727 = vmatprep.subr.mxu0 0.0
  %728 = vmatpush1.msra.mxu0 %v329
  %729 = vmatprep.subr.mxu0 0.0
  %730 = vmatpush1.msra.mxu0 %v330
  %731 = vmatprep.subr.mxu0 0.0
  %732 = vmatpush1.msra.mxu0 0.0
  %733 = vmatprep.subr.mxu0 0.0
  %734 = vmatpush1.msra.mxu0 0.0
  %735 = vmatprep.subr.mxu0 0.0
  %736 = vmatpush1.msra.mxu0 0.0
  %737 = vmatprep.subr.mxu0 0.0
  %738 = vmatpush1.msra.mxu0 0.0
  %739 = vmatprep.subr.mxu0 0.0
  %740 = vmatpush1.msra.mxu0 0.0
  %741 = vmatprep.subr.mxu0 0.0
  %742 = vmatpush1.msra.mxu0 0.0
  %743 = vmatprep.subr.mxu0 0.0
  %744 = vmatpush1.msra.mxu0 0.0
  %745 = vmatprep.subr.mxu0 0.0
  %746 = vmatpush1.msra.mxu0 0.0
  %747 = vmatprep.subr.mxu0 0.0
  %748 = vmatpush1.msra.mxu0 0.0
  %749 = vmatprep.subr.mxu0 0.0
  %750 = vmatpush1.msra.mxu0 0.0
  %751 = vmatprep.subr.mxu0 0.0
  %752 = vmatpush1.msra.mxu0 0.0
  %753 = vmatprep.subr.mxu0 0.0
  %754 = vmatpush1.msra.mxu0 0.0
  %755 = vmatprep.subr.mxu0 0.0
  %756 = vmatpush1.msra.mxu0 0.0
  %757 = vmatprep.subr.mxu0 0.0
  %758 = vmatpush1.msra.mxu0 0.0
  %759 = vmatprep.subr.mxu0 0.0
  %760 = vmatpush1.msra.mxu0 0.0
  %761 = vmatprep.subr.mxu0 0.0
  %762 = vmatpush1.msra.mxu0 0.0
  %763 = vmatprep.subr.mxu0 0.0
  %764 = vmatpush1.msra.mxu0 0.0
  %765 = vmatprep.subr.mxu0 0.0
  %766 = vmatpush1.msra.mxu0 0.0
  %767 = vmatprep.subr.mxu0 0.0
  %768 = vmatpush1.msra.mxu0 0.0
  %769 = vmatprep.subr.mxu0 0.0
  %770 = vmatpush1.msra.mxu0 0.0
  %771 = vmatprep.subr.mxu0 0.0
  %772 = vmatpush1.msra.mxu0 0.0
  %773 = vmatprep.subr.mxu0 0.0
  %774 = vmatpush1.msra.mxu0 0.0
  %775 = vmatprep.subr.mxu0 0.0
  %776 = vmatpush1.msra.mxu0 0.0
  %777 = vmatprep.subr.mxu0 0.0
  %778 = vmatpush1.msra.mxu0 0.0
  %779 = vmatprep.subr.mxu0 0.0
  %780 = vmatpush1.msra.mxu0 0.0
  %781 = vmatprep.subr.mxu0 0.0
  %782 = vmatpush1.msra.mxu0 0.0
  %783 = vmatprep.subr.mxu0 0.0
  %784 = vmatpush1.msra.mxu0 0.0
  %785 = vmatprep.subr.mxu0 0.0
  %786 = vmatpush1.msra.mxu0 0.0
  %787 = vmatprep.mubr.f32.mxu0 0.0
  %788 = vmatmul.mubr.f32.gmra.mrb[0].mxu0 %v676
  %v789 = vpop.f32.mrb[0].mxu0
  %v790 = vadd.f32 0.0, %v789
  %v791 = vpop.f32.mrb[0].mxu0
  %792 = vmatprep.mubr.f32.mxu0 0.0
  %793 = vmatmul.mubr.f32.gmra.mrb[0].mxu0 %v679
  %v794 = vpop.f32.mrb[0].mxu0
  %v795 = vadd.f32 0.0, %v794
  %v796 = vpop.f32.mrb[0].mxu0
  %797 = vmatprep.mubr.f32.mxu0 0.0
  %798 = vmatmul.mubr.f32.gmra.mrb[0].mxu0 %v682
  %v799 = vpop.f32.mrb[0].mxu0
  %v800 = vadd.f32 0.0, %v799
  %v801 = vpop.f32.mrb[0].mxu0
  %802 = vmatprep.mubr.f32.mxu0 0.0
  %803 = vmatmul.mubr.f32.gmra.mrb[0].mxu0 %v685
  %v804 = vpop.f32.mrb[0].mxu0
  %v805 = vadd.f32 0.0, %v804
  %v806 = vpop.f32.mrb[0].mxu0
  %807 = vmatprep.mubr.f32.mxu0 0.0
  %808 = vmatmul.mubr.f32.gmra.mrb[0].mxu0 %v688
  %v809 = vpop.f32.mrb[0].mxu0
  %v810 = vadd.f32 0.0, %v809
  %v811 = vpop.f32.mrb[0].mxu0
  %812 = vmatprep.mubr.f32.mxu0 0.0
  %813 = vmatmul.mubr.f32.gmra.mrb[0].mxu0 %v691
  %v814 = vpop.f32.mrb[0].mxu0
  %v815 = vadd.f32 0.0, %v814
  %v816 = vpop.f32.mrb[0].mxu0
  %817 = vmatprep.mubr.f32.mxu0 0.0
  %818 = vmatmul.mubr.f32.gmra.mrb[0].mxu0 %v694
  %v819 = vpop.f32.mrb[0].mxu0
  %v820 = vadd.f32 0.0, %v819
  %v821 = vpop.f32.mrb[0].mxu0
  %822 = vmatprep.mubr.f32.mxu0 0.0
  %823 = vmatmul.mubr.f32.gmra.mrb[0].mxu0 %v697
  %v824 = vpop.f32.mrb[0].mxu0
  %v825 = vadd.f32 0.0, %v824
  %v826 = vpop.f32.mrb[0].mxu0
  %827 = vmatprep.mubr.f32.mxu0 0.0
  %828 = vmatmul.mubr.f32.gmra.mrb[0].mxu0 %v700
  %v829 = vpop.f32.mrb[0].mxu0
  %v830 = vadd.f32 0.0, %v829
  %v831 = vpop.f32.mrb[0].mxu0
  %832 = vmatprep.mubr.f32.mxu0 0.0
  %833 = vmatmul.mubr.f32.gmra.mrb[0].mxu0 %v703
  %v834 = vpop.f32.mrb[0].mxu0
  %v835 = vadd.f32 0.0, %v834
  %v836 = vpop.f32.mrb[0].mxu0
  %837 = vmatprep.mubr.f32.mxu0 0.0
  %838 = vmatmul.mubr.f32.gmra.mrb[0].mxu0 %v706
  %v839 = vpop.f32.mrb[0].mxu0
  %v840 = vadd.f32 0.0, %v839
  %v841 = vpop.f32.mrb[0].mxu0
  %842 = vmatprep.mubr.f32.mxu0 0.0
  %843 = vmatmul.mubr.f32.gmra.mrb[0].mxu0 %v709
  %v844 = vpop.f32.mrb[0].mxu0
  %v845 = vadd.f32 0.0, %v844
  %v846 = vpop.f32.mrb[0].mxu0
  %847 = vmatprep.mubr.f32.mxu0 0.0
  %848 = vmatmul.mubr.f32.gmra.mrb[0].mxu0 %v712
  %v849 = vpop.f32.mrb[0].mxu0
  %v850 = vadd.f32 0.0, %v849
  %v851 = vpop.f32.mrb[0].mxu0
  %852 = vmatprep.mubr.f32.mxu0 0.0
  %853 = vmatmul.mubr.f32.gmra.mrb[0].mxu0 %v715
  %v854 = vpop.f32.mrb[0].mxu0
  %v855 = vadd.f32 0.0, %v854
  %v856 = vpop.f32.mrb[0].mxu0
  %857 = vmatprep.mubr.f32.mxu0 0.0
  %858 = vmatmul.mubr.f32.gmra.mrb[0].mxu0 %v718
  %v859 = vpop.f32.mrb[0].mxu0
  %v860 = vadd.f32 0.0, %v859
  %v861 = vpop.f32.mrb[0].mxu0
  %862 = vmatprep.mubr.f32.mxu0 0.0
  %863 = vmatmul.mubr.f32.gmra.mrb[0].mxu0 %v721
  %v864 = vpop.f32.mrb[0].mxu0
  %v865 = vadd.f32 0.0, %v864
  %v866 = vpop.f32.mrb[0].mxu0
  %867 = vdwg.mxu0
  %868 = vmatprep.subr.mxu0 0.0
  %869 = vmatpush1.msra.mxu0 %v323
  %870 = vmatprep.subr.mxu0 0.0
  %871 = vmatpush1.msra.mxu0 %v324
  %872 = vmatprep.subr.mxu0 0.0
  %873 = vmatpush1.msra.mxu0 %v325
  %874 = vmatprep.subr.mxu0 0.0
  %875 = vmatpush1.msra.mxu0 %v326
  %876 = vmatprep.subr.mxu0 0.0
  %877 = vmatpush1.msra.mxu0 0.0
  %878 = vmatprep.subr.mxu0 0.0
  %879 = vmatpush1.msra.mxu0 0.0
  %880 = vmatprep.subr.mxu0 0.0
  %881 = vmatpush1.msra.mxu0 0.0
  %882 = vmatprep.subr.mxu0 0.0
  %883 = vmatpush1.msra.mxu0 0.0
  %884 = vmatprep.subr.mxu0 0.0
  %885 = vmatpush1.msra.mxu0 0.0
  %886 = vmatprep.subr.mxu0 0.0
  %887 = vmatpush1.msra.mxu0 0.0
  %888 = vmatprep.subr.mxu0 0.0
  %889 = vmatpush1.msra.mxu0 0.0
  %890 = vmatprep.subr.mxu0 0.0
  %891 = vmatpush1.msra.mxu0 0.0
  %892 = vmatprep.subr.mxu0 0.0
  %893 = vmatpush1.msra.mxu0 0.0
  %894 = vmatprep.subr.mxu0 0.0
  %895 = vmatpush1.msra.mxu0 0.0
  %896 = vmatprep.subr.mxu0 0.0
  %897 = vmatpush1.msra.mxu0 0.0
  %898 = vmatprep.subr.mxu0 0.0
  %899 = vmatpush1.msra.mxu0 0.0
  %900 = vmatprep.subr.mxu0 0.0
  %901 = vmatpush1.msra.mxu0 0.0
  %902 = vmatprep.subr.mxu0 0.0
  %903 = vmatpush1.msra.mxu0 0.0
  %904 = vmatprep.subr.mxu0 0.0
  %905 = vmatpush1.msra.mxu0 0.0
  %906 = vmatprep.subr.mxu0 0.0
  %907 = vmatpush1.msra.mxu0 0.0
  %908 = vmatprep.subr.mxu0 0.0
  %909 = vmatpush1.msra.mxu0 0.0
  %910 = vmatprep.subr.mxu0 0.0
  %911 = vmatpush1.msra.mxu0 0.0
  %912 = vmatprep.subr.mxu0 0.0
  %913 = vmatpush1.msra.mxu0 0.0
  %914 = vmatprep.subr.mxu0 0.0
  %915 = vmatpush1.msra.mxu0 0.0
  %916 = vmatprep.subr.mxu0 0.0
  %917 = vmatpush1.msra.mxu0 0.0
  %918 = vmatprep.subr.mxu0 0.0
  %919 = vmatpush1.msra.mxu0 0.0
  %920 = vmatprep.subr.mxu0 0.0
  %921 = vmatpush1.msra.mxu0 0.0
  %922 = vmatprep.subr.mxu0 0.0
  %923 = vmatpush1.msra.mxu0 0.0
  %924 = vmatprep.subr.mxu0 0.0
  %925 = vmatpush1.msra.mxu0 0.0
  %926 = vmatprep.subr.mxu0 0.0
  %927 = vmatpush1.msra.mxu0 0.0
  %928 = vmatprep.subr.mxu0 0.0
  %929 = vmatpush1.msra.mxu0 0.0
  %930 = vmatprep.subr.mxu0 0.0
  %931 = vmatpush1.msra.mxu0 0.0
  %932 = vmatprep.mubr.f32.mxu0 0.0
  %933 = vmatmul.mubr.f32.gmra.mrb[0].mxu0 %v676
  %v934 = vpop.f32.mrb[0].mxu0
  %v935 = vadd.f32 0.0, %v934
  %v936 = vpop.f32.mrb[0].mxu0
  %937 = vmatprep.mubr.f32.mxu0 0.0
  %938 = vmatmul.mubr.f32.gmra.mrb[0].mxu0 %v679
  %v939 = vpop.f32.mrb[0].mxu0
  %v940 = vadd.f32 0.0, %v939
  %v941 = vpop.f32.mrb[0].mxu0
  %942 = vmatprep.mubr.f32.mxu0 0.0
  %943 = vmatmul.mubr.f32.gmra.mrb[0].mxu0 %v682
  %v944 = vpop.f32.mrb[0].mxu0
  %v945 = vadd.f32 0.0, %v944
  %v946 = vpop.f32.mrb[0].mxu0
  %947 = vmatprep.mubr.f32.mxu0 0.0
  %948 = vmatmul.mubr.f32.gmra.mrb[0].mxu0 %v685
  %v949 = vpop.f32.mrb[0].mxu0
  %v950 = vadd.f32 0.0, %v949
  %v951 = vpop.f32.mrb[0].mxu0
  %952 = vmatprep.mubr.f32.mxu0 0.0
  %953 = vmatmul.mubr.f32.gmra.mrb[0].mxu0 %v688
  %v954 = vpop.f32.mrb[0].mxu0
  %v955 = vadd.f32 0.0, %v954
  %v956 = vpop.f32.mrb[0].mxu0
  %957 = vmatprep.mubr.f32.mxu0 0.0
  %958 = vmatmul.mubr.f32.gmra.mrb[0].mxu0 %v691
  %v959 = vpop.f32.mrb[0].mxu0
  %v960 = vadd.f32 0.0, %v959
  %v961 = vpop.f32.mrb[0].mxu0
  %962 = vmatprep.mubr.f32.mxu0 0.0
  %963 = vmatmul.mubr.f32.gmra.mrb[0].mxu0 %v694
  %v964 = vpop.f32.mrb[0].mxu0
  %v965 = vadd.f32 0.0, %v964
  %v966 = vpop.f32.mrb[0].mxu0
  %967 = vmatprep.mubr.f32.mxu0 0.0
  %968 = vmatmul.mubr.f32.gmra.mrb[0].mxu0 %v697
  %v969 = vpop.f32.mrb[0].mxu0
  %v970 = vadd.f32 0.0, %v969
  %v971 = vpop.f32.mrb[0].mxu0
  %972 = vmatprep.mubr.f32.mxu0 0.0
  %973 = vmatmul.mubr.f32.gmra.mrb[0].mxu0 %v700
  %v974 = vpop.f32.mrb[0].mxu0
  %v975 = vadd.f32 0.0, %v974
  %v976 = vpop.f32.mrb[0].mxu0
  %977 = vmatprep.mubr.f32.mxu0 0.0
  %978 = vmatmul.mubr.f32.gmra.mrb[0].mxu0 %v703
  %v979 = vpop.f32.mrb[0].mxu0
  %v980 = vadd.f32 0.0, %v979
  %v981 = vpop.f32.mrb[0].mxu0
  %982 = vmatprep.mubr.f32.mxu0 0.0
  %983 = vmatmul.mubr.f32.gmra.mrb[0].mxu0 %v706
  %v984 = vpop.f32.mrb[0].mxu0
  %v985 = vadd.f32 0.0, %v984
  %v986 = vpop.f32.mrb[0].mxu0
  %987 = vmatprep.mubr.f32.mxu0 0.0
  %988 = vmatmul.mubr.f32.gmra.mrb[0].mxu0 %v709
  %v989 = vpop.f32.mrb[0].mxu0
  %v990 = vadd.f32 0.0, %v989
  %v991 = vpop.f32.mrb[0].mxu0
  %992 = vmatprep.mubr.f32.mxu0 0.0
  %993 = vmatmul.mubr.f32.gmra.mrb[0].mxu0 %v712
  %v994 = vpop.f32.mrb[0].mxu0
  %v995 = vadd.f32 0.0, %v994
  %v996 = vpop.f32.mrb[0].mxu0
  %997 = vmatprep.mubr.f32.mxu0 0.0
  %998 = vmatmul.mubr.f32.gmra.mrb[0].mxu0 %v715
  %v999 = vpop.f32.mrb[0].mxu0
  %v1000 = vadd.f32 0.0, %v999
  %v1001 = vpop.f32.mrb[0].mxu0
  %1002 = vmatprep.mubr.f32.mxu0 0.0
  %1003 = vmatmul.mubr.f32.gmra.mrb[0].mxu0 %v718
  %v1004 = vpop.f32.mrb[0].mxu0
  %v1005 = vadd.f32 0.0, %v1004
  %v1006 = vpop.f32.mrb[0].mxu0
  %1007 = vmatprep.mubr.f32.mxu0 0.0
  %1008 = vmatmul.mubr.f32.gmra.mrb[0].mxu0 %v721
  %v1009 = vpop.f32.mrb[0].mxu0
  %v1010 = vadd.f32 0.0, %v1009
  %v1011 = vpop.f32.mrb[0].mxu0
  %1012 = vdwg.mxu0
  %1013 = vxpose.xlu0.b32.start [1/16] %v935, 128
  %1014 = vxpose.xlu0.b32.cont [2/16] %v940, 128
  %1015 = vxpose.xlu0.b32.cont [3/16] %v945, 128
  %1016 = vxpose.xlu0.b32.cont [4/16] %v950, 128
  %1017 = vxpose.xlu0.b32.cont [5/16] %v955, 128
  %1018 = vxpose.xlu0.b32.cont [6/16] %v960, 128
  %1019 = vxpose.xlu0.b32.cont [7/16] %v965, 128
  %1020 = vxpose.xlu0.b32.cont [8/16] %v970, 128
  %1021 = vxpose.xlu0.b32.cont [9/16] %v975, 128
  %1022 = vxpose.xlu0.b32.cont [10/16] %v980, 128
  %1023 = vxpose.xlu0.b32.cont [11/16] %v985, 128
  %1024 = vxpose.xlu0.b32.cont [12/16] %v990, 128
  %1025 = vxpose.xlu0.b32.cont [13/16] %v995, 128
  %1026 = vxpose.xlu0.b32.cont [14/16] %v1000, 128
  %1027 = vxpose.xlu0.b32.cont [15/16] %v1005, 128
  %1028 = vxpose.xlu0.b32.end [16/16] %v1010, 128
  %v1029 = vpop.trf.xlu0
  %v1030 = vpop.trf.xlu0
  %v1031 = vpop.trf.xlu0
  %v1032 = vpop.trf.xlu0
  %v1033 = vpop.trf.xlu0
  %v1034 = vpop.trf.xlu0
  %v1035 = vpop.trf.xlu0
  %v1036 = vpop.trf.xlu0
  %v1037 = vpop.trf.xlu0
  %v1038 = vpop.trf.xlu0
  %v1039 = vpop.trf.xlu0
  %v1040 = vpop.trf.xlu0
  %v1041 = vpop.trf.xlu0
  %v1042 = vpop.trf.xlu0
  %v1043 = vpop.trf.xlu0
  %v1044 = vpop.trf.xlu0
  %1046 = vset.pattern.permute.xlu0 0
  %1047 = vperm.xlu0 %1046, %v790
  %v1048 = vpop.permute.xlu0 %1047
  %1051 = vset.pattern.permute.xlu0 0
  %1052 = vperm.xlu0 %1051, %v795
  %v1053 = vpop.permute.xlu0 %1052
  %1056 = vset.pattern.permute.xlu0 0
  %1057 = vperm.xlu0 %1056, %v800
  %v1058 = vpop.permute.xlu0 %1057
  %1061 = vset.pattern.permute.xlu0 0
  %1062 = vperm.xlu0 %1061, %v805
  %v1063 = vpop.permute.xlu0 %1062
  %1066 = vset.pattern.permute.xlu0 0
  %1067 = vperm.xlu0 %1066, %v810
  %v1068 = vpop.permute.xlu0 %1067
  %1071 = vset.pattern.permute.xlu0 0
  %1072 = vperm.xlu0 %1071, %v815
  %v1073 = vpop.permute.xlu0 %1072
  %1076 = vset.pattern.permute.xlu0 0
  %1077 = vperm.xlu0 %1076, %v820
  %v1078 = vpop.permute.xlu0 %1077
  %1081 = vset.pattern.permute.xlu0 0
  %1082 = vperm.xlu0 %1081, %v825
  %v1083 = vpop.permute.xlu0 %1082
  %1086 = vset.pattern.permute.xlu0 0
  %1087 = vperm.xlu0 %1086, %v830
  %v1088 = vpop.permute.xlu0 %1087
  %1091 = vset.pattern.permute.xlu0 0
  %1092 = vperm.xlu0 %1091, %v835
  %v1093 = vpop.permute.xlu0 %1092
  %1096 = vset.pattern.permute.xlu0 0
  %1097 = vperm.xlu0 %1096, %v840
  %v1098 = vpop.permute.xlu0 %1097
  %1101 = vset.pattern.permute.xlu0 0
  %1102 = vperm.xlu0 %1101, %v845
  %v1103 = vpop.permute.xlu0 %1102
  %1106 = vset.pattern.permute.xlu0 0
  %1107 = vperm.xlu0 %1106, %v850
  %v1108 = vpop.permute.xlu0 %1107
  %1111 = vset.pattern.permute.xlu0 0
  %1112 = vperm.xlu0 %1111, %v855
  %v1113 = vpop.permute.xlu0 %1112
  %1116 = vset.pattern.permute.xlu0 0
  %1117 = vperm.xlu0 %1116, %v860
  %v1118 = vpop.permute.xlu0 %1117
  %1121 = vset.pattern.permute.xlu0 0
  %1122 = vperm.xlu0 %1121, %v865
  %v1123 = vpop.permute.xlu0 %1122
  %v1125 = vlaneseq
  %v1126 = vshrl.u32 %v1125, 7
  %v1127 = vsub.s32 0, %v1126
  %v1128 = vrot.slane %v1029, %v1127
  %v1129 = vadd.f32 %v1048, %v1128
  %v1130 = vadd.f32 %v1053, %v1128
  %v1131 = vadd.f32 %v1058, %v1128
  %v1132 = vadd.f32 %v1063, %v1128
  %v1133 = vadd.f32 %v1068, %v1128
  %v1134 = vadd.f32 %v1073, %v1128
  %v1135 = vadd.f32 %v1078, %v1128
  %v1136 = vadd.f32 %v1083, %v1128
  %v1137 = vadd.f32 %v1088, %v1128
  %v1138 = vadd.f32 %v1093, %v1128
  %v1139 = vadd.f32 %v1098, %v1128
  %v1140 = vadd.f32 %v1103, %v1128
  %v1141 = vadd.f32 %v1108, %v1128
  %v1142 = vadd.f32 %v1113, %v1128
  %v1143 = vadd.f32 %v1118, %v1128
  %v1144 = vadd.f32 %v1123, %v1128
  %v1145 = vmul.f32 %v1129, 0.2
  %v1146 = vmul.f32 %v1130, 0.2
  %v1147 = vmul.f32 %v1131, 0.2
  %v1148 = vmul.f32 %v1132, 0.2
  %v1149 = vmul.f32 %v1133, 0.2
  %v1150 = vmul.f32 %v1134, 0.2
  %v1151 = vmul.f32 %v1135, 0.2
  %v1152 = vmul.f32 %v1136, 0.2
  %v1153 = vmul.f32 %v1137, 0.2
  %v1154 = vmul.f32 %v1138, 0.2
  %v1155 = vmul.f32 %v1139, 0.2
  %v1156 = vmul.f32 %v1140, 0.2
  %v1157 = vmul.f32 %v1141, 0.2
  %v1158 = vmul.f32 %v1142, 0.2
  %v1159 = vmul.f32 %v1143, 0.2
  %v1160 = vmul.f32 %v1144, 0.2
  %v1161 = vmax.f32 %v1129, %v1145
  %v1162 = vmax.f32 %v1130, %v1146
  %v1163 = vmax.f32 %v1131, %v1147
  %v1164 = vmax.f32 %v1132, %v1148
  %v1165 = vmax.f32 %v1133, %v1149
  %v1166 = vmax.f32 %v1134, %v1150
  %v1167 = vmax.f32 %v1135, %v1151
  %v1168 = vmax.f32 %v1136, %v1152
  %v1169 = vmax.f32 %v1137, %v1153
  %v1170 = vmax.f32 %v1138, %v1154
  %v1171 = vmax.f32 %v1139, %v1155
  %v1172 = vmax.f32 %v1140, %v1156
  %v1173 = vmax.f32 %v1141, %v1157
  %v1174 = vmax.f32 %v1142, %v1158
  %v1175 = vmax.f32 %v1143, %v1159
  %v1176 = vmax.f32 %v1144, %v1160
  %v1177 = vadd.f32 %v1161, %v107
  %v1178 = vadd.f32 %v1162, %v108
  %v1179 = vadd.f32 %v1163, %v109
  %v1180 = vadd.f32 %v1164, %v110
  %v1181 = vadd.f32 %v1165, %v111
  %v1182 = vadd.f32 %v1166, %v112
  %v1183 = vadd.f32 %v1167, %v113
  %v1184 = vadd.f32 %v1168, %v114
  %v1185 = vadd.f32 %v1169, %v115
  %v1186 = vadd.f32 %v1170, %v116
  %v1187 = vadd.f32 %v1171, %v117
  %v1188 = vadd.f32 %v1172, %v118
  %v1189 = vadd.f32 %v1173, %v119
  %v1190 = vadd.f32 %v1174, %v120
  %v1191 = vadd.f32 %v1175, %v121
  %v1192 = vadd.f32 %v1176, %v122
  %1193 = vmax.xlane.f32.xlu0 %v1177
  %v1194 = vpop.xlane.xlu0 %1193
  %1195 = vmax.xlane.f32.xlu0 %v1178
  %v1196 = vpop.xlane.xlu0 %1195
  %1197 = vmax.xlane.f32.xlu0 %v1179
  %v1198 = vpop.xlane.xlu0 %1197
  %1199 = vmax.xlane.f32.xlu0 %v1180
  %v1200 = vpop.xlane.xlu0 %1199
  %1201 = vmax.xlane.f32.xlu0 %v1181
  %v1202 = vpop.xlane.xlu0 %1201
  %1203 = vmax.xlane.f32.xlu0 %v1182
  %v1204 = vpop.xlane.xlu0 %1203
  %1205 = vmax.xlane.f32.xlu0 %v1183
  %v1206 = vpop.xlane.xlu0 %1205
  %1207 = vmax.xlane.f32.xlu0 %v1184
  %v1208 = vpop.xlane.xlu0 %1207
  %1209 = vmax.xlane.f32.xlu0 %v1185
  %v1210 = vpop.xlane.xlu0 %1209
  %1211 = vmax.xlane.f32.xlu0 %v1186
  %v1212 = vpop.xlane.xlu0 %1211
  %1213 = vmax.xlane.f32.xlu0 %v1187
  %v1214 = vpop.xlane.xlu0 %1213
  %1215 = vmax.xlane.f32.xlu0 %v1188
  %v1216 = vpop.xlane.xlu0 %1215
  %1217 = vmax.xlane.f32.xlu0 %v1189
  %v1218 = vpop.xlane.xlu0 %1217
  %1219 = vmax.xlane.f32.xlu0 %v1190
  %v1220 = vpop.xlane.xlu0 %1219
  %1221 = vmax.xlane.f32.xlu0 %v1191
  %v1222 = vpop.xlane.xlu0 %1221
  %1223 = vmax.xlane.f32.xlu0 %v1192
  %v1224 = vpop.xlane.xlu0 %1223
  %v1225 = vsub.f32 %v1177, %v1194
  %v1226 = vsub.f32 %v1178, %v1196
  %v1227 = vsub.f32 %v1179, %v1198
  %v1228 = vsub.f32 %v1180, %v1200
  %v1229 = vsub.f32 %v1181, %v1202
  %v1230 = vsub.f32 %v1182, %v1204
  %v1231 = vsub.f32 %v1183, %v1206
  %v1232 = vsub.f32 %v1184, %v1208
  %v1233 = vsub.f32 %v1185, %v1210
  %v1234 = vsub.f32 %v1186, %v1212
  %v1235 = vsub.f32 %v1187, %v1214
  %v1236 = vsub.f32 %v1188, %v1216
  %v1237 = vsub.f32 %v1189, %v1218
  %v1238 = vsub.f32 %v1190, %v1220
  %v1239 = vsub.f32 %v1191, %v1222
  %v1240 = vsub.f32 %v1192, %v1224
  %v1241 = vmul.f32 %v1225, 1.442695
  %v1242 = vpow.pop %v1241
  %v1243 = vmul.f32 %v1226, 1.442695
  %v1244 = vpow.pop %v1243
  %v1245 = vmul.f32 %v1227, 1.442695
  %v1246 = vpow.pop %v1245
  %v1247 = vmul.f32 %v1228, 1.442695
  %v1248 = vpow.pop %v1247
  %v1249 = vmul.f32 %v1229, 1.442695
  %v1250 = vpow.pop %v1249
  %v1251 = vmul.f32 %v1230, 1.442695
  %v1252 = vpow.pop %v1251
  %v1253 = vmul.f32 %v1231, 1.442695
  %v1254 = vpow.pop %v1253
  %v1255 = vmul.f32 %v1232, 1.442695
  %v1256 = vpow.pop %v1255
  %v1257 = vmul.f32 %v1233, 1.442695
  %v1258 = vpow.pop %v1257
  %v1259 = vmul.f32 %v1234, 1.442695
  %v1260 = vpow.pop %v1259
  %v1261 = vmul.f32 %v1235, 1.442695
  %v1262 = vpow.pop %v1261
  %v1263 = vmul.f32 %v1236, 1.442695
  %v1264 = vpow.pop %v1263
  %v1265 = vmul.f32 %v1237, 1.442695
  %v1266 = vpow.pop %v1265
  %v1267 = vmul.f32 %v1238, 1.442695
  %v1268 = vpow.pop %v1267
  %v1269 = vmul.f32 %v1239, 1.442695
  %v1270 = vpow.pop %v1269
  %v1271 = vmul.f32 %v1240, 1.442695
  %v1272 = vpow.pop %v1271
  %v1273 = vmul.f32 %v1242, %v75
  %v1274 = vmul.f32 %v1244, %v76
  %v1275 = vmul.f32 %v1246, %v77
  %v1276 = vmul.f32 %v1248, %v78
  %v1277 = vmul.f32 %v1250, %v79
  %v1278 = vmul.f32 %v1252, %v80
  %v1279 = vmul.f32 %v1254, %v81
  %v1280 = vmul.f32 %v1256, %v82
  %v1281 = vmul.f32 %v1258, %v83
  %v1282 = vmul.f32 %v1260, %v84
  %v1283 = vmul.f32 %v1262, %v85
  %v1284 = vmul.f32 %v1264, %v86
  %v1285 = vmul.f32 %v1266, %v87
  %v1286 = vmul.f32 %v1268, %v88
  %v1287 = vmul.f32 %v1270, %v89
  %v1288 = vmul.f32 %v1272, %v90
  %1289 = vadd.xlane.f32.xlu0 %v1273
  %v1290 = vpop.xlane.xlu0 %1289
  %1291 = vadd.xlane.f32.xlu0 %v1274
  %v1292 = vpop.xlane.xlu0 %1291
  %1293 = vadd.xlane.f32.xlu0 %v1275
  %v1294 = vpop.xlane.xlu0 %1293
  %1295 = vadd.xlane.f32.xlu0 %v1276
  %v1296 = vpop.xlane.xlu0 %1295
  %1297 = vadd.xlane.f32.xlu0 %v1277
  %v1298 = vpop.xlane.xlu0 %1297
  %1299 = vadd.xlane.f32.xlu0 %v1278
  %v1300 = vpop.xlane.xlu0 %1299
  %1301 = vadd.xlane.f32.xlu0 %v1279
  %v1302 = vpop.xlane.xlu0 %1301
  %1303 = vadd.xlane.f32.xlu0 %v1280
  %v1304 = vpop.xlane.xlu0 %1303
  %1305 = vadd.xlane.f32.xlu0 %v1281
  %v1306 = vpop.xlane.xlu0 %1305
  %1307 = vadd.xlane.f32.xlu0 %v1282
  %v1308 = vpop.xlane.xlu0 %1307
  %1309 = vadd.xlane.f32.xlu0 %v1283
  %v1310 = vpop.xlane.xlu0 %1309
  %1311 = vadd.xlane.f32.xlu0 %v1284
  %v1312 = vpop.xlane.xlu0 %1311
  %1313 = vadd.xlane.f32.xlu0 %v1285
  %v1314 = vpop.xlane.xlu0 %1313
  %1315 = vadd.xlane.f32.xlu0 %v1286
  %v1316 = vpop.xlane.xlu0 %1315
  %1317 = vadd.xlane.f32.xlu0 %v1287
  %v1318 = vpop.xlane.xlu0 %1317
  %1319 = vadd.xlane.f32.xlu0 %v1288
  %v1320 = vpop.xlane.xlu0 %1319
  %1321 = vmatprep.subr.mxu0 0.0
  %1322 = vmatpush1.msra.mxu0 %v597
  %1323 = vmatprep.subr.mxu0 0.0
  %1324 = vmatpush1.msra.mxu0 %v602
  %1325 = vmatprep.subr.mxu0 0.0
  %1326 = vmatpush1.msra.mxu0 %v607
  %1327 = vmatprep.subr.mxu0 0.0
  %1328 = vmatpush1.msra.mxu0 %v612
  %1329 = vmatprep.subr.mxu0 0.0
  %1330 = vmatpush1.msra.mxu0 %v617
  %1331 = vmatprep.subr.mxu0 0.0
  %1332 = vmatpush1.msra.mxu0 %v622
  %1333 = vmatprep.subr.mxu0 0.0
  %1334 = vmatpush1.msra.mxu0 %v627
  %1335 = vmatprep.subr.mxu0 0.0
  %1336 = vmatpush1.msra.mxu0 %v632
  %1337 = vmatprep.subr.mxu0 0.0
  %1338 = vmatpush1.msra.mxu0 %v637
  %1339 = vmatprep.subr.mxu0 0.0
  %1340 = vmatpush1.msra.mxu0 %v642
  %1341 = vmatprep.subr.mxu0 0.0
  %1342 = vmatpush1.msra.mxu0 %v647
  %1343 = vmatprep.subr.mxu0 0.0
  %1344 = vmatpush1.msra.mxu0 %v652
  %1345 = vmatprep.subr.mxu0 0.0
  %1346 = vmatpush1.msra.mxu0 %v657
  %1347 = vmatprep.subr.mxu0 0.0
  %1348 = vmatpush1.msra.mxu0 %v662
  %1349 = vmatprep.subr.mxu0 0.0
  %1350 = vmatpush1.msra.mxu0 %v667
  %1351 = vmatprep.subr.mxu0 0.0
  %1352 = vmatpush1.msra.mxu0 %v672
  %1353 = vmatprep.subr.mxu0 0.0
  %1354 = vmatpush1.msra.mxu0 0.0
  %1355 = vmatprep.subr.mxu0 0.0
  %1356 = vmatpush1.msra.mxu0 0.0
  %1357 = vmatprep.subr.mxu0 0.0
  %1358 = vmatpush1.msra.mxu0 0.0
  %1359 = vmatprep.subr.mxu0 0.0
  %1360 = vmatpush1.msra.mxu0 0.0
  %1361 = vmatprep.subr.mxu0 0.0
  %1362 = vmatpush1.msra.mxu0 0.0
  %1363 = vmatprep.subr.mxu0 0.0
  %1364 = vmatpush1.msra.mxu0 0.0
  %1365 = vmatprep.subr.mxu0 0.0
  %1366 = vmatpush1.msra.mxu0 0.0
  %1367 = vmatprep.subr.mxu0 0.0
  %1368 = vmatpush1.msra.mxu0 0.0
  %1369 = vmatprep.subr.mxu0 0.0
  %1370 = vmatpush1.msra.mxu0 0.0
  %1371 = vmatprep.subr.mxu0 0.0
  %1372 = vmatpush1.msra.mxu0 0.0
  %1373 = vmatprep.subr.mxu0 0.0
  %1374 = vmatpush1.msra.mxu0 0.0
  %1375 = vmatprep.subr.mxu0 0.0
  %1376 = vmatpush1.msra.mxu0 0.0
  %1377 = vmatprep.subr.mxu0 0.0
  %1378 = vmatpush1.msra.mxu0 0.0
  %1379 = vmatprep.subr.mxu0 0.0
  %1380 = vmatpush1.msra.mxu0 0.0
  %1381 = vmatprep.subr.mxu0 0.0
  %1382 = vmatpush1.msra.mxu0 0.0
  %1383 = vmatprep.subr.mxu0 0.0
  %1384 = vmatpush1.msra.mxu0 0.0
  %1385 = vmatprep.mubr.f32.mxu0 0.0
  %1386 = vmatmul.mubr.f32.gmra.mrb[0].mxu0 %v1273
  %v1387 = vpop.f32.mrb[0].mxu0
  %v1388 = vadd.f32 0.0, %v1387
  %v1389 = vpop.f32.mrb[0].mxu0
  %1390 = vmatprep.mubr.f32.mxu0 0.0
  %1391 = vmatmul.mubr.f32.gmra.mrb[0].mxu0 %v1274
  %v1392 = vpop.f32.mrb[0].mxu0
  %v1393 = vadd.f32 0.0, %v1392
  %v1394 = vpop.f32.mrb[0].mxu0
  %1395 = vmatprep.mubr.f32.mxu0 0.0
  %1396 = vmatmul.mubr.f32.gmra.mrb[0].mxu0 %v1275
  %v1397 = vpop.f32.mrb[0].mxu0
  %v1398 = vadd.f32 0.0, %v1397
  %v1399 = vpop.f32.mrb[0].mxu0
  %1400 = vmatprep.mubr.f32.mxu0 0.0
  %1401 = vmatmul.mubr.f32.gmra.mrb[0].mxu0 %v1276
  %v1402 = vpop.f32.mrb[0].mxu0
  %v1403 = vadd.f32 0.0, %v1402
  %v1404 = vpop.f32.mrb[0].mxu0
  %1405 = vmatprep.mubr.f32.mxu0 0.0
  %1406 = vmatmul.mubr.f32.gmra.mrb[0].mxu0 %v1277
  %v1407 = vpop.f32.mrb[0].mxu0
  %v1408 = vadd.f32 0.0, %v1407
  %v1409 = vpop.f32.mrb[0].mxu0
  %1410 = vmatprep.mubr.f32.mxu0 0.0
  %1411 = vmatmul.mubr.f32.gmra.mrb[0].mxu0 %v1278
  %v1412 = vpop.f32.mrb[0].mxu0
  %v1413 = vadd.f32 0.0, %v1412
  %v1414 = vpop.f32.mrb[0].mxu0
  %1415 = vmatprep.mubr.f32.mxu0 0.0
  %1416 = vmatmul.mubr.f32.gmra.mrb[0].mxu0 %v1279
  %v1417 = vpop.f32.mrb[0].mxu0
  %v1418 = vadd.f32 0.0, %v1417
  %v1419 = vpop.f32.mrb[0].mxu0
  %1420 = vmatprep.mubr.f32.mxu0 0.0
  %1421 = vmatmul.mubr.f32.gmra.mrb[0].mxu0 %v1280
  %v1422 = vpop.f32.mrb[0].mxu0
  %v1423 = vadd.f32 0.0, %v1422
  %v1424 = vpop.f32.mrb[0].mxu0
  %1425 = vmatprep.mubr.f32.mxu0 0.0
  %1426 = vmatmul.mubr.f32.gmra.mrb[0].mxu0 %v1281
  %v1427 = vpop.f32.mrb[0].mxu0
  %v1428 = vadd.f32 0.0, %v1427
  %v1429 = vpop.f32.mrb[0].mxu0
  %1430 = vmatprep.mubr.f32.mxu0 0.0
  %1431 = vmatmul.mubr.f32.gmra.mrb[0].mxu0 %v1282
  %v1432 = vpop.f32.mrb[0].mxu0
  %v1433 = vadd.f32 0.0, %v1432
  %v1434 = vpop.f32.mrb[0].mxu0
  %1435 = vmatprep.mubr.f32.mxu0 0.0
  %1436 = vmatmul.mubr.f32.gmra.mrb[0].mxu0 %v1283
  %v1437 = vpop.f32.mrb[0].mxu0
  %v1438 = vadd.f32 0.0, %v1437
  %v1439 = vpop.f32.mrb[0].mxu0
  %1440 = vmatprep.mubr.f32.mxu0 0.0
  %1441 = vmatmul.mubr.f32.gmra.mrb[0].mxu0 %v1284
  %v1442 = vpop.f32.mrb[0].mxu0
  %v1443 = vadd.f32 0.0, %v1442
  %v1444 = vpop.f32.mrb[0].mxu0
  %1445 = vmatprep.mubr.f32.mxu0 0.0
  %1446 = vmatmul.mubr.f32.gmra.mrb[0].mxu0 %v1285
  %v1447 = vpop.f32.mrb[0].mxu0
  %v1448 = vadd.f32 0.0, %v1447
  %v1449 = vpop.f32.mrb[0].mxu0
  %1450 = vmatprep.mubr.f32.mxu0 0.0
  %1451 = vmatmul.mubr.f32.gmra.mrb[0].mxu0 %v1286
  %v1452 = vpop.f32.mrb[0].mxu0
  %v1453 = vadd.f32 0.0, %v1452
  %v1454 = vpop.f32.mrb[0].mxu0
  %1455 = vmatprep.mubr.f32.mxu0 0.0
  %1456 = vmatmul.mubr.f32.gmra.mrb[0].mxu0 %v1287
  %v1457 = vpop.f32.mrb[0].mxu0
  %v1458 = vadd.f32 0.0, %v1457
  %v1459 = vpop.f32.mrb[0].mxu0
  %1460 = vmatprep.mubr.f32.mxu0 0.0
  %1461 = vmatmul.mubr.f32.gmra.mrb[0].mxu0 %v1288
  %v1462 = vpop.f32.mrb[0].mxu0
  %v1463 = vadd.f32 0.0, %v1462
  %v1464 = vpop.f32.mrb[0].mxu0
  %1465 = vdwg.mxu0
  %v1466 = vrcp.pop %v1290
  %v1467 = vrcp.pop %v1292
  %v1468 = vrcp.pop %v1294
  %v1469 = vrcp.pop %v1296
  %v1470 = vrcp.pop %v1298
  %v1471 = vrcp.pop %v1300
  %v1472 = vrcp.pop %v1302
  %v1473 = vrcp.pop %v1304
  %v1474 = vrcp.pop %v1306
  %v1475 = vrcp.pop %v1308
  %v1476 = vrcp.pop %v1310
  %v1477 = vrcp.pop %v1312
  %v1478 = vrcp.pop %v1314
  %v1479 = vrcp.pop %v1316
  %v1480 = vrcp.pop %v1318
  %v1481 = vrcp.pop %v1320
  %v1482 = vmul.f32 %v1388, %v1466
  %v1483 = vmul.f32 %v1393, %v1467
  %v1484 = vmul.f32 %v1398, %v1468
  %v1485 = vmul.f32 %v1403, %v1469
  %v1486 = vmul.f32 %v1408, %v1470
  %v1487 = vmul.f32 %v1413, %v1471
  %v1488 = vmul.f32 %v1418, %v1472
  %v1489 = vmul.f32 %v1423, %v1473
  %v1490 = vmul.f32 %v1428, %v1474
  %v1491 = vmul.f32 %v1433, %v1475
  %v1492 = vmul.f32 %v1438, %v1476
  %v1493 = vmul.f32 %v1443, %v1477
  %v1494 = vmul.f32 %v1448, %v1478
  %v1495 = vmul.f32 %v1453, %v1479
  %v1496 = vmul.f32 %v1458, %v1480
  %v1497 = vmul.f32 %v1463, %v1481
  %1498 = vset.pattern.permute.xlu0 1
  %1499 = vperm.xlu0 %1498, %v790
  %v1500 = vpop.permute.xlu0 %1499
  %1502 = vset.pattern.permute.xlu0 1
  %1503 = vperm.xlu0 %1502, %v795
  %v1504 = vpop.permute.xlu0 %1503
  %1506 = vset.pattern.permute.xlu0 1
  %1507 = vperm.xlu0 %1506, %v800
  %v1508 = vpop.permute.xlu0 %1507
  %1510 = vset.pattern.permute.xlu0 1
  %1511 = vperm.xlu0 %1510, %v805
  %v1512 = vpop.permute.xlu0 %1511
  %1514 = vset.pattern.permute.xlu0 1
  %1515 = vperm.xlu0 %1514, %v810
  %v1516 = vpop.permute.xlu0 %1515
  %1518 = vset.pattern.permute.xlu0 1
  %1519 = vperm.xlu0 %1518, %v815
  %v1520 = vpop.permute.xlu0 %1519
  %1522 = vset.pattern.permute.xlu0 1
  %1523 = vperm.xlu0 %1522, %v820
  %v1524 = vpop.permute.xlu0 %1523
  %1526 = vset.pattern.permute.xlu0 1
  %1527 = vperm.xlu0 %1526, %v825
  %v1528 = vpop.permute.xlu0 %1527
  %1530 = vset.pattern.permute.xlu0 1
  %1531 = vperm.xlu0 %1530, %v830
  %v1532 = vpop.permute.xlu0 %1531
  %1534 = vset.pattern.permute.xlu0 1
  %1535 = vperm.xlu0 %1534, %v835
  %v1536 = vpop.permute.xlu0 %1535
  %1538 = vset.pattern.permute.xlu0 1
  %1539 = vperm.xlu0 %1538, %v840
  %v1540 = vpop.permute.xlu0 %1539
  %1542 = vset.pattern.permute.xlu0 1
  %1543 = vperm.xlu0 %1542, %v845
  %v1544 = vpop.permute.xlu0 %1543
  %1546 = vset.pattern.permute.xlu0 1
  %1547 = vperm.xlu0 %1546, %v850
  %v1548 = vpop.permute.xlu0 %1547
  %1550 = vset.pattern.permute.xlu0 1
  %1551 = vperm.xlu0 %1550, %v855
  %v1552 = vpop.permute.xlu0 %1551
  %1554 = vset.pattern.permute.xlu0 1
  %1555 = vperm.xlu0 %1554, %v860
  %v1556 = vpop.permute.xlu0 %1555
  %1558 = vset.pattern.permute.xlu0 1
  %1559 = vperm.xlu0 %1558, %v865
  %v1560 = vpop.permute.xlu0 %1559
  %v1562 = vlaneseq
  %v1563 = vshrl.u32 %v1562, 7
  %v1564 = vsub.s32 1, %v1563
  %v1565 = vrot.slane %v1029, %v1564
  %v1566 = vadd.f32 %v1500, %v1565
  %v1567 = vadd.f32 %v1504, %v1565
  %v1568 = vadd.f32 %v1508, %v1565
  %v1569 = vadd.f32 %v1512, %v1565
  %v1570 = vadd.f32 %v1516, %v1565
  %v1571 = vadd.f32 %v1520, %v1565
  %v1572 = vadd.f32 %v1524, %v1565
  %v1573 = vadd.f32 %v1528, %v1565
  %v1574 = vadd.f32 %v1532, %v1565
  %v1575 = vadd.f32 %v1536, %v1565
  %v1576 = vadd.f32 %v1540, %v1565
  %v1577 = vadd.f32 %v1544, %v1565
  %v1578 = vadd.f32 %v1548, %v1565
  %v1579 = vadd.f32 %v1552, %v1565
  %v1580 = vadd.f32 %v1556, %v1565
  %v1581 = vadd.f32 %v1560, %v1565
  %v1582 = vmul.f32 %v1566, 0.2
  %v1583 = vmul.f32 %v1567, 0.2
  %v1584 = vmul.f32 %v1568, 0.2
  %v1585 = vmul.f32 %v1569, 0.2
  %v1586 = vmul.f32 %v1570, 0.2
  %v1587 = vmul.f32 %v1571, 0.2
  %v1588 = vmul.f32 %v1572, 0.2
  %v1589 = vmul.f32 %v1573, 0.2
  %v1590 = vmul.f32 %v1574, 0.2
  %v1591 = vmul.f32 %v1575, 0.2
  %v1592 = vmul.f32 %v1576, 0.2
  %v1593 = vmul.f32 %v1577, 0.2
  %v1594 = vmul.f32 %v1578, 0.2
  %v1595 = vmul.f32 %v1579, 0.2
  %v1596 = vmul.f32 %v1580, 0.2
  %v1597 = vmul.f32 %v1581, 0.2
  %v1598 = vmax.f32 %v1566, %v1582
  %v1599 = vmax.f32 %v1567, %v1583
  %v1600 = vmax.f32 %v1568, %v1584
  %v1601 = vmax.f32 %v1569, %v1585
  %v1602 = vmax.f32 %v1570, %v1586
  %v1603 = vmax.f32 %v1571, %v1587
  %v1604 = vmax.f32 %v1572, %v1588
  %v1605 = vmax.f32 %v1573, %v1589
  %v1606 = vmax.f32 %v1574, %v1590
  %v1607 = vmax.f32 %v1575, %v1591
  %v1608 = vmax.f32 %v1576, %v1592
  %v1609 = vmax.f32 %v1577, %v1593
  %v1610 = vmax.f32 %v1578, %v1594
  %v1611 = vmax.f32 %v1579, %v1595
  %v1612 = vmax.f32 %v1580, %v1596
  %v1613 = vmax.f32 %v1581, %v1597
  %v1614 = vadd.f32 %v1598, %v107
  %v1615 = vadd.f32 %v1599, %v108
  %v1616 = vadd.f32 %v1600, %v109
  %v1617 = vadd.f32 %v1601, %v110
  %v1618 = vadd.f32 %v1602, %v111
  %v1619 = vadd.f32 %v1603, %v112
  %v1620 = vadd.f32 %v1604, %v113
  %v1621 = vadd.f32 %v1605, %v114
  %v1622 = vadd.f32 %v1606, %v115
  %v1623 = vadd.f32 %v1607, %v116
  %v1624 = vadd.f32 %v1608, %v117
  %v1625 = vadd.f32 %v1609, %v118
  %v1626 = vadd.f32 %v1610, %v119
  %v1627 = vadd.f32 %v1611, %v120
  %v1628 = vadd.f32 %v1612, %v121
  %v1629 = vadd.f32 %v1613, %v122
  %1630 = vmax.xlane.f32.xlu0 %v1614
  %v1631 = vpop.xlane.xlu0 %1630
  %1632 = vmax.xlane.f32.xlu0 %v1615
  %v1633 = vpop.xlane.xlu0 %1632
  %1634 = vmax.xlane.f32.xlu0 %v1616
  %v1635 = vpop.xlane.xlu0 %1634
  %1636 = vmax.xlane.f32.xlu0 %v1617
  %v1637 = vpop.xlane.xlu0 %1636
  %1638 = vmax.xlane.f32.xlu0 %v1618
  %v1639 = vpop.xlane.xlu0 %1638
  %1640 = vmax.xlane.f32.xlu0 %v1619
  %v1641 = vpop.xlane.xlu0 %1640
  %1642 = vmax.xlane.f32.xlu0 %v1620
  %v1643 = vpop.xlane.xlu0 %1642
  %1644 = vmax.xlane.f32.xlu0 %v1621
  %v1645 = vpop.xlane.xlu0 %1644
  %1646 = vmax.xlane.f32.xlu0 %v1622
  %v1647 = vpop.xlane.xlu0 %1646
  %1648 = vmax.xlane.f32.xlu0 %v1623
  %v1649 = vpop.xlane.xlu0 %1648
  %1650 = vmax.xlane.f32.xlu0 %v1624
  %v1651 = vpop.xlane.xlu0 %1650
  %1652 = vmax.xlane.f32.xlu0 %v1625
  %v1653 = vpop.xlane.xlu0 %1652
  %1654 = vmax.xlane.f32.xlu0 %v1626
  %v1655 = vpop.xlane.xlu0 %1654
  %1656 = vmax.xlane.f32.xlu0 %v1627
  %v1657 = vpop.xlane.xlu0 %1656
  %1658 = vmax.xlane.f32.xlu0 %v1628
  %v1659 = vpop.xlane.xlu0 %1658
  %1660 = vmax.xlane.f32.xlu0 %v1629
  %v1661 = vpop.xlane.xlu0 %1660
  %v1662 = vsub.f32 %v1614, %v1631
  %v1663 = vsub.f32 %v1615, %v1633
  %v1664 = vsub.f32 %v1616, %v1635
  %v1665 = vsub.f32 %v1617, %v1637
  %v1666 = vsub.f32 %v1618, %v1639
  %v1667 = vsub.f32 %v1619, %v1641
  %v1668 = vsub.f32 %v1620, %v1643
  %v1669 = vsub.f32 %v1621, %v1645
  %v1670 = vsub.f32 %v1622, %v1647
  %v1671 = vsub.f32 %v1623, %v1649
  %v1672 = vsub.f32 %v1624, %v1651
  %v1673 = vsub.f32 %v1625, %v1653
  %v1674 = vsub.f32 %v1626, %v1655
  %v1675 = vsub.f32 %v1627, %v1657
  %v1676 = vsub.f32 %v1628, %v1659
  %v1677 = vsub.f32 %v1629, %v1661
  %v1678 = vmul.f32 %v1662, 1.442695
  %v1679 = vpow.pop %v1678
  %v1680 = vmul.f32 %v1663, 1.442695
  %v1681 = vpow.pop %v1680
  %v1682 = vmul.f32 %v1664, 1.442695
  %v1683 = vpow.pop %v1682
  %v1684 = vmul.f32 %v1665, 1.442695
  %v1685 = vpow.pop %v1684
  %v1686 = vmul.f32 %v1666, 1.442695
  %v1687 = vpow.pop %v1686
  %v1688 = vmul.f32 %v1667, 1.442695
  %v1689 = vpow.pop %v1688
  %v1690 = vmul.f32 %v1668, 1.442695
  %v1691 = vpow.pop %v1690
  %v1692 = vmul.f32 %v1669, 1.442695
  %v1693 = vpow.pop %v1692
  %v1694 = vmul.f32 %v1670, 1.442695
  %v1695 = vpow.pop %v1694
  %v1696 = vmul.f32 %v1671, 1.442695
  %v1697 = vpow.pop %v1696
  %v1698 = vmul.f32 %v1672, 1.442695
  %v1699 = vpow.pop %v1698
  %v1700 = vmul.f32 %v1673, 1.442695
  %v1701 = vpow.pop %v1700
  %v1702 = vmul.f32 %v1674, 1.442695
  %v1703 = vpow.pop %v1702
  %v1704 = vmul.f32 %v1675, 1.442695
  %v1705 = vpow.pop %v1704
  %v1706 = vmul.f32 %v1676, 1.442695
  %v1707 = vpow.pop %v1706
  %v1708 = vmul.f32 %v1677, 1.442695
  %v1709 = vpow.pop %v1708
  %v1710 = vmul.f32 %v1679, %v75
  %v1711 = vmul.f32 %v1681, %v76
  %v1712 = vmul.f32 %v1683, %v77
  %v1713 = vmul.f32 %v1685, %v78
  %v1714 = vmul.f32 %v1687, %v79
  %v1715 = vmul.f32 %v1689, %v80
  %v1716 = vmul.f32 %v1691, %v81
  %v1717 = vmul.f32 %v1693, %v82
  %v1718 = vmul.f32 %v1695, %v83
  %v1719 = vmul.f32 %v1697, %v84
  %v1720 = vmul.f32 %v1699, %v85
  %v1721 = vmul.f32 %v1701, %v86
  %v1722 = vmul.f32 %v1703, %v87
  %v1723 = vmul.f32 %v1705, %v88
  %v1724 = vmul.f32 %v1707, %v89
  %v1725 = vmul.f32 %v1709, %v90
  %1726 = vadd.xlane.f32.xlu0 %v1710
  %v1727 = vpop.xlane.xlu0 %1726
  %1728 = vadd.xlane.f32.xlu0 %v1711
  %v1729 = vpop.xlane.xlu0 %1728
  %1730 = vadd.xlane.f32.xlu0 %v1712
  %v1731 = vpop.xlane.xlu0 %1730
  %1732 = vadd.xlane.f32.xlu0 %v1713
  %v1733 = vpop.xlane.xlu0 %1732
  %1734 = vadd.xlane.f32.xlu0 %v1714
  %v1735 = vpop.xlane.xlu0 %1734
  %1736 = vadd.xlane.f32.xlu0 %v1715
  %v1737 = vpop.xlane.xlu0 %1736
  %1738 = vadd.xlane.f32.xlu0 %v1716
  %v1739 = vpop.xlane.xlu0 %1738
  %1740 = vadd.xlane.f32.xlu0 %v1717
  %v1741 = vpop.xlane.xlu0 %1740
  %1742 = vadd.xlane.f32.xlu0 %v1718
  %v1743 = vpop.xlane.xlu0 %1742
  %1744 = vadd.xlane.f32.xlu0 %v1719
  %v1745 = vpop.xlane.xlu0 %1744
  %1746 = vadd.xlane.f32.xlu0 %v1720
  %v1747 = vpop.xlane.xlu0 %1746
  %1748 = vadd.xlane.f32.xlu0 %v1721
  %v1749 = vpop.xlane.xlu0 %1748
  %1750 = vadd.xlane.f32.xlu0 %v1722
  %v1751 = vpop.xlane.xlu0 %1750
  %1752 = vadd.xlane.f32.xlu0 %v1723
  %v1753 = vpop.xlane.xlu0 %1752
  %1754 = vadd.xlane.f32.xlu0 %v1724
  %v1755 = vpop.xlane.xlu0 %1754
  %1756 = vadd.xlane.f32.xlu0 %v1725
  %v1757 = vpop.xlane.xlu0 %1756
  %1758 = vrot.lane.b32.xlu0 %v597, 120
  %v1759 = vpop.permute.xlu0 %1758
  %1760 = vrot.lane.b32.xlu0 %v602, 120
  %v1761 = vpop.permute.xlu0 %1760
  %1762 = vrot.lane.b32.xlu0 %v607, 120
  %v1763 = vpop.permute.xlu0 %1762
  %1764 = vrot.lane.b32.xlu0 %v612, 120
  %v1765 = vpop.permute.xlu0 %1764
  %1766 = vrot.lane.b32.xlu0 %v617, 120
  %v1767 = vpop.permute.xlu0 %1766
  %1768 = vrot.lane.b32.xlu0 %v622, 120
  %v1769 = vpop.permute.xlu0 %1768
  %1770 = vrot.lane.b32.xlu0 %v627, 120
  %v1771 = vpop.permute.xlu0 %1770
  %1772 = vrot.lane.b32.xlu0 %v632, 120
  %v1773 = vpop.permute.xlu0 %1772
  %1774 = vrot.lane.b32.xlu0 %v637, 120
  %v1775 = vpop.permute.xlu0 %1774
  %1776 = vrot.lane.b32.xlu0 %v642, 120
  %v1777 = vpop.permute.xlu0 %1776
  %1778 = vrot.lane.b32.xlu0 %v647, 120
  %v1779 = vpop.permute.xlu0 %1778
  %1780 = vrot.lane.b32.xlu0 %v652, 120
  %v1781 = vpop.permute.xlu0 %1780
  %1782 = vrot.lane.b32.xlu0 %v657, 120
  %v1783 = vpop.permute.xlu0 %1782
  %1784 = vrot.lane.b32.xlu0 %v662, 120
  %v1785 = vpop.permute.xlu0 %1784
  %1786 = vrot.lane.b32.xlu0 %v667, 120
  %v1787 = vpop.permute.xlu0 %1786
  %1788 = vrot.lane.b32.xlu0 %v672, 120
  %v1789 = vpop.permute.xlu0 %1788
  %1806 = vmatprep.subr.mxu0 0.0
  %1807 = vmatpush1.msra.mxu0 %v1759
  %1808 = vmatprep.subr.mxu0 0.0
  %1809 = vmatpush1.msra.mxu0 %v1761
  %1810 = vmatprep.subr.mxu0 0.0
  %1811 = vmatpush1.msra.mxu0 %v1763
  %1812 = vmatprep.subr.mxu0 0.0
  %1813 = vmatpush1.msra.mxu0 %v1765
  %1814 = vmatprep.subr.mxu0 0.0
  %1815 = vmatpush1.msra.mxu0 %v1767
  %1816 = vmatprep.subr.mxu0 0.0
  %1817 = vmatpush1.msra.mxu0 %v1769
  %1818 = vmatprep.subr.mxu0 0.0
  %1819 = vmatpush1.msra.mxu0 %v1771
  %1820 = vmatprep.subr.mxu0 0.0
  %1821 = vmatpush1.msra.mxu0 %v1773
  %1822 = vmatprep.subr.mxu0 0.0
  %1823 = vmatpush1.msra.mxu0 %v1775
  %1824 = vmatprep.subr.mxu0 0.0
  %1825 = vmatpush1.msra.mxu0 %v1777
  %1826 = vmatprep.subr.mxu0 0.0
  %1827 = vmatpush1.msra.mxu0 %v1779
  %1828 = vmatprep.subr.mxu0 0.0
  %1829 = vmatpush1.msra.mxu0 %v1781
  %1830 = vmatprep.subr.mxu0 0.0
  %1831 = vmatpush1.msra.mxu0 %v1783
  %1832 = vmatprep.subr.mxu0 0.0
  %1833 = vmatpush1.msra.mxu0 %v1785
  %1834 = vmatprep.subr.mxu0 0.0
  %1835 = vmatpush1.msra.mxu0 %v1787
  %1836 = vmatprep.subr.mxu0 0.0
  %1837 = vmatpush1.msra.mxu0 %v1789
  %1838 = vmatprep.subr.mxu0 0.0
  %1839 = vmatpush1.msra.mxu0 0.0
  %1840 = vmatprep.subr.mxu0 0.0
  %1841 = vmatpush1.msra.mxu0 0.0
  %1842 = vmatprep.subr.mxu0 0.0
  %1843 = vmatpush1.msra.mxu0 0.0
  %1844 = vmatprep.subr.mxu0 0.0
  %1845 = vmatpush1.msra.mxu0 0.0
  %1846 = vmatprep.subr.mxu0 0.0
  %1847 = vmatpush1.msra.mxu0 0.0
  %1848 = vmatprep.subr.mxu0 0.0
  %1849 = vmatpush1.msra.mxu0 0.0
  %1850 = vmatprep.subr.mxu0 0.0
  %1851 = vmatpush1.msra.mxu0 0.0
  %1852 = vmatprep.subr.mxu0 0.0
  %1853 = vmatpush1.msra.mxu0 0.0
  %1854 = vmatprep.subr.mxu0 0.0
  %1855 = vmatpush1.msra.mxu0 0.0
  %1856 = vmatprep.subr.mxu0 0.0
  %1857 = vmatpush1.msra.mxu0 0.0
  %1858 = vmatprep.subr.mxu0 0.0
  %1859 = vmatpush1.msra.mxu0 0.0
  %1860 = vmatprep.subr.mxu0 0.0
  %1861 = vmatpush1.msra.mxu0 0.0
  %1862 = vmatprep.subr.mxu0 0.0
  %1863 = vmatpush1.msra.mxu0 0.0
  %1864 = vmatprep.subr.mxu0 0.0
  %1865 = vmatpush1.msra.mxu0 0.0
  %1866 = vmatprep.subr.mxu0 0.0
  %1867 = vmatpush1.msra.mxu0 0.0
  %1868 = vmatprep.subr.mxu0 0.0
  %1869 = vmatpush1.msra.mxu0 0.0
  %1870 = vmatprep.mubr.f32.mxu0 0.0
  %1871 = vmatmul.mubr.f32.gmra.mrb[0].mxu0 %v1710
  %v1872 = vpop.f32.mrb[0].mxu0
  %v1873 = vadd.f32 0.0, %v1872
  %v1874 = vpop.f32.mrb[0].mxu0
  %1875 = vmatprep.mubr.f32.mxu0 0.0
  %1876 = vmatmul.mubr.f32.gmra.mrb[0].mxu0 %v1711
  %v1877 = vpop.f32.mrb[0].mxu0
  %v1878 = vadd.f32 0.0, %v1877
  %v1879 = vpop.f32.mrb[0].mxu0
  %1880 = vmatprep.mubr.f32.mxu0 0.0
  %1881 = vmatmul.mubr.f32.gmra.mrb[0].mxu0 %v1712
  %v1882 = vpop.f32.mrb[0].mxu0
  %v1883 = vadd.f32 0.0, %v1882
  %v1884 = vpop.f32.mrb[0].mxu0
  %1885 = vmatprep.mubr.f32.mxu0 0.0
  %1886 = vmatmul.mubr.f32.gmra.mrb[0].mxu0 %v1713
  %v1887 = vpop.f32.mrb[0].mxu0
  %v1888 = vadd.f32 0.0, %v1887
  %v1889 = vpop.f32.mrb[0].mxu0
  %1890 = vmatprep.mubr.f32.mxu0 0.0
  %1891 = vmatmul.mubr.f32.gmra.mrb[0].mxu0 %v1714
  %v1892 = vpop.f32.mrb[0].mxu0
  %v1893 = vadd.f32 0.0, %v1892
  %v1894 = vpop.f32.mrb[0].mxu0
  %1895 = vmatprep.mubr.f32.mxu0 0.0
  %1896 = vmatmul.mubr.f32.gmra.mrb[0].mxu0 %v1715
  %v1897 = vpop.f32.mrb[0].mxu0
  %v1898 = vadd.f32 0.0, %v1897
  %v1899 = vpop.f32.mrb[0].mxu0
  %1900 = vmatprep.mubr.f32.mxu0 0.0
  %1901 = vmatmul.mubr.f32.gmra.mrb[0].mxu0 %v1716
  %v1902 = vpop.f32.mrb[0].mxu0
  %v1903 = vadd.f32 0.0, %v1902
  %v1904 = vpop.f32.mrb[0].mxu0
  %1905 = vmatprep.mubr.f32.mxu0 0.0
  %1906 = vmatmul.mubr.f32.gmra.mrb[0].mxu0 %v1717
  %v1907 = vpop.f32.mrb[0].mxu0
  %v1908 = vadd.f32 0.0, %v1907
  %v1909 = vpop.f32.mrb[0].mxu0
  %1910 = vmatprep.mubr.f32.mxu0 0.0
  %1911 = vmatmul.mubr.f32.gmra.mrb[0].mxu0 %v1718
  %v1912 = vpop.f32.mrb[0].mxu0
  %v1913 = vadd.f32 0.0, %v1912
  %v1914 = vpop.f32.mrb[0].mxu0
  %1915 = vmatprep.mubr.f32.mxu0 0.0
  %1916 = vmatmul.mubr.f32.gmra.mrb[0].mxu0 %v1719
  %v1917 = vpop.f32.mrb[0].mxu0
  %v1918 = vadd.f32 0.0, %v1917
  %v1919 = vpop.f32.mrb[0].mxu0
  %1920 = vmatprep.mubr.f32.mxu0 0.0
  %1921 = vmatmul.mubr.f32.gmra.mrb[0].mxu0 %v1720
  %v1922 = vpop.f32.mrb[0].mxu0
  %v1923 = vadd.f32 0.0, %v1922
  %v1924 = vpop.f32.mrb[0].mxu0
  %1925 = vmatprep.mubr.f32.mxu0 0.0
  %1926 = vmatmul.mubr.f32.gmra.mrb[0].mxu0 %v1721
  %v1927 = vpop.f32.mrb[0].mxu0
  %v1928 = vadd.f32 0.0, %v1927
  %v1929 = vpop.f32.mrb[0].mxu0
  %1930 = vmatprep.mubr.f32.mxu0 0.0
  %1931 = vmatmul.mubr.f32.gmra.mrb[0].mxu0 %v1722
  %v1932 = vpop.f32.mrb[0].mxu0
  %v1933 = vadd.f32 0.0, %v1932
  %v1934 = vpop.f32.mrb[0].mxu0
  %1935 = vmatprep.mubr.f32.mxu0 0.0
  %1936 = vmatmul.mubr.f32.gmra.mrb[0].mxu0 %v1723
  %v1937 = vpop.f32.mrb[0].mxu0
  %v1938 = vadd.f32 0.0, %v1937
  %v1939 = vpop.f32.mrb[0].mxu0
  %1940 = vmatprep.mubr.f32.mxu0 0.0
  %1941 = vmatmul.mubr.f32.gmra.mrb[0].mxu0 %v1724
  %v1942 = vpop.f32.mrb[0].mxu0
  %v1943 = vadd.f32 0.0, %v1942
  %v1944 = vpop.f32.mrb[0].mxu0
  %1945 = vmatprep.mubr.f32.mxu0 0.0
  %1946 = vmatmul.mubr.f32.gmra.mrb[0].mxu0 %v1725
  %v1947 = vpop.f32.mrb[0].mxu0
  %v1948 = vadd.f32 0.0, %v1947
  %v1949 = vpop.f32.mrb[0].mxu0
  %1950 = vdwg.mxu0
  %v1951 = vrcp.pop %v1727
  %v1952 = vrcp.pop %v1729
  %v1953 = vrcp.pop %v1731
  %v1954 = vrcp.pop %v1733
  %v1955 = vrcp.pop %v1735
  %v1956 = vrcp.pop %v1737
  %v1957 = vrcp.pop %v1739
  %v1958 = vrcp.pop %v1741
  %v1959 = vrcp.pop %v1743
  %v1960 = vrcp.pop %v1745
  %v1961 = vrcp.pop %v1747
  %v1962 = vrcp.pop %v1749
  %v1963 = vrcp.pop %v1751
  %v1964 = vrcp.pop %v1753
  %v1965 = vrcp.pop %v1755
  %v1966 = vrcp.pop %v1757
  %v1967 = vmul.f32 %v1873, %v1951
  %v1968 = vmul.f32 %v1878, %v1952
  %v1969 = vmul.f32 %v1883, %v1953
  %v1970 = vmul.f32 %v1888, %v1954
  %v1971 = vmul.f32 %v1893, %v1955
  %v1972 = vmul.f32 %v1898, %v1956
  %v1973 = vmul.f32 %v1903, %v1957
  %v1974 = vmul.f32 %v1908, %v1958
  %v1975 = vmul.f32 %v1913, %v1959
  %v1976 = vmul.f32 %v1918, %v1960
  %v1977 = vmul.f32 %v1923, %v1961
  %v1978 = vmul.f32 %v1928, %v1962
  %v1979 = vmul.f32 %v1933, %v1963
  %v1980 = vmul.f32 %v1938, %v1964
  %v1981 = vmul.f32 %v1943, %v1965
  %v1982 = vmul.f32 %v1948, %v1966
  %1983 = vset.pattern.permute.xlu0 2
  %1984 = vperm.xlu0 %1983, %v790
  %v1985 = vpop.permute.xlu0 %1984
  %1987 = vset.pattern.permute.xlu0 2
  %1988 = vperm.xlu0 %1987, %v795
  %v1989 = vpop.permute.xlu0 %1988
  %1991 = vset.pattern.permute.xlu0 2
  %1992 = vperm.xlu0 %1991, %v800
  %v1993 = vpop.permute.xlu0 %1992
  %1995 = vset.pattern.permute.xlu0 2
  %1996 = vperm.xlu0 %1995, %v805
  %v1997 = vpop.permute.xlu0 %1996
  %1999 = vset.pattern.permute.xlu0 2
  %2000 = vperm.xlu0 %1999, %v810
  %v2001 = vpop.permute.xlu0 %2000
  %2003 = vset.pattern.permute.xlu0 2
  %2004 = vperm.xlu0 %2003, %v815
  %v2005 = vpop.permute.xlu0 %2004
  %2007 = vset.pattern.permute.xlu0 2
  %2008 = vperm.xlu0 %2007, %v820
  %v2009 = vpop.permute.xlu0 %2008
  %2011 = vset.pattern.permute.xlu0 2
  %2012 = vperm.xlu0 %2011, %v825
  %v2013 = vpop.permute.xlu0 %2012
  %2015 = vset.pattern.permute.xlu0 2
  %2016 = vperm.xlu0 %2015, %v830
  %v2017 = vpop.permute.xlu0 %2016
  %2019 = vset.pattern.permute.xlu0 2
  %2020 = vperm.xlu0 %2019, %v835
  %v2021 = vpop.permute.xlu0 %2020
  %2023 = vset.pattern.permute.xlu0 2
  %2024 = vperm.xlu0 %2023, %v840
  %v2025 = vpop.permute.xlu0 %2024
  %2027 = vset.pattern.permute.xlu0 2
  %2028 = vperm.xlu0 %2027, %v845
  %v2029 = vpop.permute.xlu0 %2028
  %2031 = vset.pattern.permute.xlu0 2
  %2032 = vperm.xlu0 %2031, %v850
  %v2033 = vpop.permute.xlu0 %2032
  %2035 = vset.pattern.permute.xlu0 2
  %2036 = vperm.xlu0 %2035, %v855
  %v2037 = vpop.permute.xlu0 %2036
  %2039 = vset.pattern.permute.xlu0 2
  %2040 = vperm.xlu0 %2039, %v860
  %v2041 = vpop.permute.xlu0 %2040
  %2043 = vset.pattern.permute.xlu0 2
  %2044 = vperm.xlu0 %2043, %v865
  %v2045 = vpop.permute.xlu0 %2044
  %v2047 = vlaneseq
  %v2048 = vshrl.u32 %v2047, 7
  %v2049 = vsub.s32 2, %v2048
  %v2050 = vrot.slane %v1029, %v2049
  %v2051 = vadd.f32 %v1985, %v2050
  %v2052 = vadd.f32 %v1989, %v2050
  %v2053 = vadd.f32 %v1993, %v2050
  %v2054 = vadd.f32 %v1997, %v2050
  %v2055 = vadd.f32 %v2001, %v2050
  %v2056 = vadd.f32 %v2005, %v2050
  %v2057 = vadd.f32 %v2009, %v2050
  %v2058 = vadd.f32 %v2013, %v2050
  %v2059 = vadd.f32 %v2017, %v2050
  %v2060 = vadd.f32 %v2021, %v2050
  %v2061 = vadd.f32 %v2025, %v2050
  %v2062 = vadd.f32 %v2029, %v2050
  %v2063 = vadd.f32 %v2033, %v2050
  %v2064 = vadd.f32 %v2037, %v2050
  %v2065 = vadd.f32 %v2041, %v2050
  %v2066 = vadd.f32 %v2045, %v2050
  %v2067 = vmul.f32 %v2051, 0.2
  %v2068 = vmul.f32 %v2052, 0.2
  %v2069 = vmul.f32 %v2053, 0.2
  %v2070 = vmul.f32 %v2054, 0.2
  %v2071 = vmul.f32 %v2055, 0.2
  %v2072 = vmul.f32 %v2056, 0.2
  %v2073 = vmul.f32 %v2057, 0.2
  %v2074 = vmul.f32 %v2058, 0.2
  %v2075 = vmul.f32 %v2059, 0.2
  %v2076 = vmul.f32 %v2060, 0.2
  %v2077 = vmul.f32 %v2061, 0.2
  %v2078 = vmul.f32 %v2062, 0.2
  %v2079 = vmul.f32 %v2063, 0.2
  %v2080 = vmul.f32 %v2064, 0.2
  %v2081 = vmul.f32 %v2065, 0.2
  %v2082 = vmul.f32 %v2066, 0.2
  %v2083 = vmax.f32 %v2051, %v2067
  %v2084 = vmax.f32 %v2052, %v2068
  %v2085 = vmax.f32 %v2053, %v2069
  %v2086 = vmax.f32 %v2054, %v2070
  %v2087 = vmax.f32 %v2055, %v2071
  %v2088 = vmax.f32 %v2056, %v2072
  %v2089 = vmax.f32 %v2057, %v2073
  %v2090 = vmax.f32 %v2058, %v2074
  %v2091 = vmax.f32 %v2059, %v2075
  %v2092 = vmax.f32 %v2060, %v2076
  %v2093 = vmax.f32 %v2061, %v2077
  %v2094 = vmax.f32 %v2062, %v2078
  %v2095 = vmax.f32 %v2063, %v2079
  %v2096 = vmax.f32 %v2064, %v2080
  %v2097 = vmax.f32 %v2065, %v2081
  %v2098 = vmax.f32 %v2066, %v2082
  %v2099 = vadd.f32 %v2083, %v107
  %v2100 = vadd.f32 %v2084, %v108
  %v2101 = vadd.f32 %v2085, %v109
  %v2102 = vadd.f32 %v2086, %v110
  %v2103 = vadd.f32 %v2087, %v111
  %v2104 = vadd.f32 %v2088, %v112
  %v2105 = vadd.f32 %v2089, %v113
  %v2106 = vadd.f32 %v2090, %v114
  %v2107 = vadd.f32 %v2091, %v115
  %v2108 = vadd.f32 %v2092, %v116
  %v2109 = vadd.f32 %v2093, %v117
  %v2110 = vadd.f32 %v2094, %v118
  %v2111 = vadd.f32 %v2095, %v119
  %v2112 = vadd.f32 %v2096, %v120
  %v2113 = vadd.f32 %v2097, %v121
  %v2114 = vadd.f32 %v2098, %v122
  %2115 = vmax.xlane.f32.xlu0 %v2099
  %v2116 = vpop.xlane.xlu0 %2115
  %2117 = vmax.xlane.f32.xlu0 %v2100
  %v2118 = vpop.xlane.xlu0 %2117
  %2119 = vmax.xlane.f32.xlu0 %v2101
  %v2120 = vpop.xlane.xlu0 %2119
  %2121 = vmax.xlane.f32.xlu0 %v2102
  %v2122 = vpop.xlane.xlu0 %2121
  %2123 = vmax.xlane.f32.xlu0 %v2103
  %v2124 = vpop.xlane.xlu0 %2123
  %2125 = vmax.xlane.f32.xlu0 %v2104
  %v2126 = vpop.xlane.xlu0 %2125
  %2127 = vmax.xlane.f32.xlu0 %v2105
  %v2128 = vpop.xlane.xlu0 %2127
  %2129 = vmax.xlane.f32.xlu0 %v2106
  %v2130 = vpop.xlane.xlu0 %2129
  %2131 = vmax.xlane.f32.xlu0 %v2107
  %v2132 = vpop.xlane.xlu0 %2131
  %2133 = vmax.xlane.f32.xlu0 %v2108
  %v2134 = vpop.xlane.xlu0 %2133
  %2135 = vmax.xlane.f32.xlu0 %v2109
  %v2136 = vpop.xlane.xlu0 %2135
  %2137 = vmax.xlane.f32.xlu0 %v2110
  %v2138 = vpop.xlane.xlu0 %2137
  %2139 = vmax.xlane.f32.xlu0 %v2111
  %v2140 = vpop.xlane.xlu0 %2139
  %2141 = vmax.xlane.f32.xlu0 %v2112
  %v2142 = vpop.xlane.xlu0 %2141
  %2143 = vmax.xlane.f32.xlu0 %v2113
  %v2144 = vpop.xlane.xlu0 %2143
  %2145 = vmax.xlane.f32.xlu0 %v2114
  %v2146 = vpop.xlane.xlu0 %2145
  %v2147 = vsub.f32 %v2099, %v2116
  %v2148 = vsub.f32 %v2100, %v2118
  %v2149 = vsub.f32 %v2101, %v2120
  %v2150 = vsub.f32 %v2102, %v2122
  %v2151 = vsub.f32 %v2103, %v2124
  %v2152 = vsub.f32 %v2104, %v2126
  %v2153 = vsub.f32 %v2105, %v2128
  %v2154 = vsub.f32 %v2106, %v2130
  %v2155 = vsub.f32 %v2107, %v2132
  %v2156 = vsub.f32 %v2108, %v2134
  %v2157 = vsub.f32 %v2109, %v2136
  %v2158 = vsub.f32 %v2110, %v2138
  %v2159 = vsub.f32 %v2111, %v2140
  %v2160 = vsub.f32 %v2112, %v2142
  %v2161 = vsub.f32 %v2113, %v2144
  %v2162 = vsub.f32 %v2114, %v2146
  %v2163 = vmul.f32 %v2147, 1.442695
  %v2164 = vpow.pop %v2163
  %v2165 = vmul.f32 %v2148, 1.442695
  %v2166 = vpow.pop %v2165
  %v2167 = vmul.f32 %v2149, 1.442695
  %v2168 = vpow.pop %v2167
  %v2169 = vmul.f32 %v2150, 1.442695
  %v2170 = vpow.pop %v2169
  %v2171 = vmul.f32 %v2151, 1.442695
  %v2172 = vpow.pop %v2171
  %v2173 = vmul.f32 %v2152, 1.442695
  %v2174 = vpow.pop %v2173
  %v2175 = vmul.f32 %v2153, 1.442695
  %v2176 = vpow.pop %v2175
  %v2177 = vmul.f32 %v2154, 1.442695
  %v2178 = vpow.pop %v2177
  %v2179 = vmul.f32 %v2155, 1.442695
  %v2180 = vpow.pop %v2179
  %v2181 = vmul.f32 %v2156, 1.442695
  %v2182 = vpow.pop %v2181
  %v2183 = vmul.f32 %v2157, 1.442695
  %v2184 = vpow.pop %v2183
  %v2185 = vmul.f32 %v2158, 1.442695
  %v2186 = vpow.pop %v2185
  %v2187 = vmul.f32 %v2159, 1.442695
  %v2188 = vpow.pop %v2187
  %v2189 = vmul.f32 %v2160, 1.442695
  %v2190 = vpow.pop %v2189
  %v2191 = vmul.f32 %v2161, 1.442695
  %v2192 = vpow.pop %v2191
  %v2193 = vmul.f32 %v2162, 1.442695
  %v2194 = vpow.pop %v2193
  %v2195 = vmul.f32 %v2164, %v75
  %v2196 = vmul.f32 %v2166, %v76
  %v2197 = vmul.f32 %v2168, %v77
  %v2198 = vmul.f32 %v2170, %v78
  %v2199 = vmul.f32 %v2172, %v79
  %v2200 = vmul.f32 %v2174, %v80
  %v2201 = vmul.f32 %v2176, %v81
  %v2202 = vmul.f32 %v2178, %v82
  %v2203 = vmul.f32 %v2180, %v83
  %v2204 = vmul.f32 %v2182, %v84
  %v2205 = vmul.f32 %v2184, %v85
  %v2206 = vmul.f32 %v2186, %v86
  %v2207 = vmul.f32 %v2188, %v87
  %v2208 = vmul.f32 %v2190, %v88
  %v2209 = vmul.f32 %v2192, %v89
  %v2210 = vmul.f32 %v2194, %v90
  %2211 = vadd.xlane.f32.xlu0 %v2195
  %v2212 = vpop.xlane.xlu0 %2211
  %2213 = vadd.xlane.f32.xlu0 %v2196
  %v2214 = vpop.xlane.xlu0 %2213
  %2215 = vadd.xlane.f32.xlu0 %v2197
  %v2216 = vpop.xlane.xlu0 %2215
  %2217 = vadd.xlane.f32.xlu0 %v2198
  %v2218 = vpop.xlane.xlu0 %2217
  %2219 = vadd.xlane.f32.xlu0 %v2199
  %v2220 = vpop.xlane.xlu0 %2219
  %2221 = vadd.xlane.f32.xlu0 %v2200
  %v2222 = vpop.xlane.xlu0 %2221
  %2223 = vadd.xlane.f32.xlu0 %v2201
  %v2224 = vpop.xlane.xlu0 %2223
  %2225 = vadd.xlane.f32.xlu0 %v2202
  %v2226 = vpop.xlane.xlu0 %2225
  %2227 = vadd.xlane.f32.xlu0 %v2203
  %v2228 = vpop.xlane.xlu0 %2227
  %2229 = vadd.xlane.f32.xlu0 %v2204
  %v2230 = vpop.xlane.xlu0 %2229
  %2231 = vadd.xlane.f32.xlu0 %v2205
  %v2232 = vpop.xlane.xlu0 %2231
  %2233 = vadd.xlane.f32.xlu0 %v2206
  %v2234 = vpop.xlane.xlu0 %2233
  %2235 = vadd.xlane.f32.xlu0 %v2207
  %v2236 = vpop.xlane.xlu0 %2235
  %2237 = vadd.xlane.f32.xlu0 %v2208
  %v2238 = vpop.xlane.xlu0 %2237
  %2239 = vadd.xlane.f32.xlu0 %v2209
  %v2240 = vpop.xlane.xlu0 %2239
  %2241 = vadd.xlane.f32.xlu0 %v2210
  %v2242 = vpop.xlane.xlu0 %2241
  %2243 = vrot.lane.b32.xlu0 %v597, 112
  %v2244 = vpop.permute.xlu0 %2243
  %2245 = vrot.lane.b32.xlu0 %v602, 112
  %v2246 = vpop.permute.xlu0 %2245
  %2247 = vrot.lane.b32.xlu0 %v607, 112
  %v2248 = vpop.permute.xlu0 %2247
  %2249 = vrot.lane.b32.xlu0 %v612, 112
  %v2250 = vpop.permute.xlu0 %2249
  %2251 = vrot.lane.b32.xlu0 %v617, 112
  %v2252 = vpop.permute.xlu0 %2251
  %2253 = vrot.lane.b32.xlu0 %v622, 112
  %v2254 = vpop.permute.xlu0 %2253
  %2255 = vrot.lane.b32.xlu0 %v627, 112
  %v2256 = vpop.permute.xlu0 %2255
  %2257 = vrot.lane.b32.xlu0 %v632, 112
  %v2258 = vpop.permute.xlu0 %2257
  %2259 = vrot.lane.b32.xlu0 %v637, 112
  %v2260 = vpop.permute.xlu0 %2259
  %2261 = vrot.lane.b32.xlu0 %v642, 112
  %v2262 = vpop.permute.xlu0 %2261
  %2263 = vrot.lane.b32.xlu0 %v647, 112
  %v2264 = vpop.permute.xlu0 %2263
  %2265 = vrot.lane.b32.xlu0 %v652, 112
  %v2266 = vpop.permute.xlu0 %2265
  %2267 = vrot.lane.b32.xlu0 %v657, 112
  %v2268 = vpop.permute.xlu0 %2267
  %2269 = vrot.lane.b32.xlu0 %v662, 112
  %v2270 = vpop.permute.xlu0 %2269
  %2271 = vrot.lane.b32.xlu0 %v667, 112
  %v2272 = vpop.permute.xlu0 %2271
  %2273 = vrot.lane.b32.xlu0 %v672, 112
  %v2274 = vpop.permute.xlu0 %2273
  %2291 = vmatprep.subr.mxu0 0.0
  %2292 = vmatpush1.msra.mxu0 %v2244
  %2293 = vmatprep.subr.mxu0 0.0
  %2294 = vmatpush1.msra.mxu0 %v2246
  %2295 = vmatprep.subr.mxu0 0.0
  %2296 = vmatpush1.msra.mxu0 %v2248
  %2297 = vmatprep.subr.mxu0 0.0
  %2298 = vmatpush1.msra.mxu0 %v2250
  %2299 = vmatprep.subr.mxu0 0.0
  %2300 = vmatpush1.msra.mxu0 %v2252
  %2301 = vmatprep.subr.mxu0 0.0
  %2302 = vmatpush1.msra.mxu0 %v2254
  %2303 = vmatprep.subr.mxu0 0.0
  %2304 = vmatpush1.msra.mxu0 %v2256
  %2305 = vmatprep.subr.mxu0 0.0
  %2306 = vmatpush1.msra.mxu0 %v2258
  %2307 = vmatprep.subr.mxu0 0.0
  %2308 = vmatpush1.msra.mxu0 %v2260
  %2309 = vmatprep.subr.mxu0 0.0
  %2310 = vmatpush1.msra.mxu0 %v2262
  %2311 = vmatprep.subr.mxu0 0.0
  %2312 = vmatpush1.msra.mxu0 %v2264
  %2313 = vmatprep.subr.mxu0 0.0
  %2314 = vmatpush1.msra.mxu0 %v2266
  %2315 = vmatprep.subr.mxu0 0.0
  %2316 = vmatpush1.msra.mxu0 %v2268
  %2317 = vmatprep.subr.mxu0 0.0
  %2318 = vmatpush1.msra.mxu0 %v2270
  %2319 = vmatprep.subr.mxu0 0.0
  %2320 = vmatpush1.msra.mxu0 %v2272
  %2321 = vmatprep.subr.mxu0 0.0
  %2322 = vmatpush1.msra.mxu0 %v2274
  %2323 = vmatprep.subr.mxu0 0.0
  %2324 = vmatpush1.msra.mxu0 0.0
  %2325 = vmatprep.subr.mxu0 0.0
  %2326 = vmatpush1.msra.mxu0 0.0
  %2327 = vmatprep.subr.mxu0 0.0
  %2328 = vmatpush1.msra.mxu0 0.0
  %2329 = vmatprep.subr.mxu0 0.0
  %2330 = vmatpush1.msra.mxu0 0.0
  %2331 = vmatprep.subr.mxu0 0.0
  %2332 = vmatpush1.msra.mxu0 0.0
  %2333 = vmatprep.subr.mxu0 0.0
  %2334 = vmatpush1.msra.mxu0 0.0
  %2335 = vmatprep.subr.mxu0 0.0
  %2336 = vmatpush1.msra.mxu0 0.0
  %2337 = vmatprep.subr.mxu0 0.0
  %2338 = vmatpush1.msra.mxu0 0.0
  %2339 = vmatprep.subr.mxu0 0.0
  %2340 = vmatpush1.msra.mxu0 0.0
  %2341 = vmatprep.subr.mxu0 0.0
  %2342 = vmatpush1.msra.mxu0 0.0
  %2343 = vmatprep.subr.mxu0 0.0
  %2344 = vmatpush1.msra.mxu0 0.0
  %2345 = vmatprep.subr.mxu0 0.0
  %2346 = vmatpush1.msra.mxu0 0.0
  %2347 = vmatprep.subr.mxu0 0.0
  %2348 = vmatpush1.msra.mxu0 0.0
  %2349 = vmatprep.subr.mxu0 0.0
  %2350 = vmatpush1.msra.mxu0 0.0
  %2351 = vmatprep.subr.mxu0 0.0
  %2352 = vmatpush1.msra.mxu0 0.0
  %2353 = vmatprep.subr.mxu0 0.0
  %2354 = vmatpush1.msra.mxu0 0.0
  %2355 = vmatprep.mubr.f32.mxu0 0.0
  %2356 = vmatmul.mubr.f32.gmra.mrb[0].mxu0 %v2195
  %v2357 = vpop.f32.mrb[0].mxu0
  %v2358 = vadd.f32 0.0, %v2357
  %v2359 = vpop.f32.mrb[0].mxu0
  %2360 = vmatprep.mubr.f32.mxu0 0.0
  %2361 = vmatmul.mubr.f32.gmra.mrb[0].mxu0 %v2196
  %v2362 = vpop.f32.mrb[0].mxu0
  %v2363 = vadd.f32 0.0, %v2362
  %v2364 = vpop.f32.mrb[0].mxu0
  %2365 = vmatprep.mubr.f32.mxu0 0.0
  %2366 = vmatmul.mubr.f32.gmra.mrb[0].mxu0 %v2197
  %v2367 = vpop.f32.mrb[0].mxu0
  %v2368 = vadd.f32 0.0, %v2367
  %v2369 = vpop.f32.mrb[0].mxu0
  %2370 = vmatprep.mubr.f32.mxu0 0.0
  %2371 = vmatmul.mubr.f32.gmra.mrb[0].mxu0 %v2198
  %v2372 = vpop.f32.mrb[0].mxu0
  %v2373 = vadd.f32 0.0, %v2372
  %v2374 = vpop.f32.mrb[0].mxu0
  %2375 = vmatprep.mubr.f32.mxu0 0.0
  %2376 = vmatmul.mubr.f32.gmra.mrb[0].mxu0 %v2199
  %v2377 = vpop.f32.mrb[0].mxu0
  %v2378 = vadd.f32 0.0, %v2377
  %v2379 = vpop.f32.mrb[0].mxu0
  %2380 = vmatprep.mubr.f32.mxu0 0.0
  %2381 = vmatmul.mubr.f32.gmra.mrb[0].mxu0 %v2200
  %v2382 = vpop.f32.mrb[0].mxu0
  %v2383 = vadd.f32 0.0, %v2382
  %v2384 = vpop.f32.mrb[0].mxu0
  %2385 = vmatprep.mubr.f32.mxu0 0.0
  %2386 = vmatmul.mubr.f32.gmra.mrb[0].mxu0 %v2201
  %v2387 = vpop.f32.mrb[0].mxu0
  %v2388 = vadd.f32 0.0, %v2387
  %v2389 = vpop.f32.mrb[0].mxu0
  %2390 = vmatprep.mubr.f32.mxu0 0.0
  %2391 = vmatmul.mubr.f32.gmra.mrb[0].mxu0 %v2202
  %v2392 = vpop.f32.mrb[0].mxu0
  %v2393 = vadd.f32 0.0, %v2392
  %v2394 = vpop.f32.mrb[0].mxu0
  %2395 = vmatprep.mubr.f32.mxu0 0.0
  %2396 = vmatmul.mubr.f32.gmra.mrb[0].mxu0 %v2203
  %v2397 = vpop.f32.mrb[0].mxu0
  %v2398 = vadd.f32 0.0, %v2397
  %v2399 = vpop.f32.mrb[0].mxu0
  %2400 = vmatprep.mubr.f32.mxu0 0.0
  %2401 = vmatmul.mubr.f32.gmra.mrb[0].mxu0 %v2204
  %v2402 = vpop.f32.mrb[0].mxu0
  %v2403 = vadd.f32 0.0, %v2402
  %v2404 = vpop.f32.mrb[0].mxu0
  %2405 = vmatprep.mubr.f32.mxu0 0.0
  %2406 = vmatmul.mubr.f32.gmra.mrb[0].mxu0 %v2205
  %v2407 = vpop.f32.mrb[0].mxu0
  %v2408 = vadd.f32 0.0, %v2407
  %v2409 = vpop.f32.mrb[0].mxu0
  %2410 = vmatprep.mubr.f32.mxu0 0.0
  %2411 = vmatmul.mubr.f32.gmra.mrb[0].mxu0 %v2206
  %v2412 = vpop.f32.mrb[0].mxu0
  %v2413 = vadd.f32 0.0, %v2412
  %v2414 = vpop.f32.mrb[0].mxu0
  %2415 = vmatprep.mubr.f32.mxu0 0.0
  %2416 = vmatmul.mubr.f32.gmra.mrb[0].mxu0 %v2207
  %v2417 = vpop.f32.mrb[0].mxu0
  %v2418 = vadd.f32 0.0, %v2417
  %v2419 = vpop.f32.mrb[0].mxu0
  %2420 = vmatprep.mubr.f32.mxu0 0.0
  %2421 = vmatmul.mubr.f32.gmra.mrb[0].mxu0 %v2208
  %v2422 = vpop.f32.mrb[0].mxu0
  %v2423 = vadd.f32 0.0, %v2422
  %v2424 = vpop.f32.mrb[0].mxu0
  %2425 = vmatprep.mubr.f32.mxu0 0.0
  %2426 = vmatmul.mubr.f32.gmra.mrb[0].mxu0 %v2209
  %v2427 = vpop.f32.mrb[0].mxu0
  %v2428 = vadd.f32 0.0, %v2427
  %v2429 = vpop.f32.mrb[0].mxu0
  %2430 = vmatprep.mubr.f32.mxu0 0.0
  %2431 = vmatmul.mubr.f32.gmra.mrb[0].mxu0 %v2210
  %v2432 = vpop.f32.mrb[0].mxu0
  %v2433 = vadd.f32 0.0, %v2432
  %v2434 = vpop.f32.mrb[0].mxu0
  %2435 = vdwg.mxu0
  %v2436 = vrcp.pop %v2212
  %v2437 = vrcp.pop %v2214
  %v2438 = vrcp.pop %v2216
  %v2439 = vrcp.pop %v2218
  %v2440 = vrcp.pop %v2220
  %v2441 = vrcp.pop %v2222
  %v2442 = vrcp.pop %v2224
  %v2443 = vrcp.pop %v2226
  %v2444 = vrcp.pop %v2228
  %v2445 = vrcp.pop %v2230
  %v2446 = vrcp.pop %v2232
  %v2447 = vrcp.pop %v2234
  %v2448 = vrcp.pop %v2236
  %v2449 = vrcp.pop %v2238
  %v2450 = vrcp.pop %v2240
  %v2451 = vrcp.pop %v2242
  %v2452 = vmul.f32 %v2358, %v2436
  %v2453 = vmul.f32 %v2363, %v2437
  %v2454 = vmul.f32 %v2368, %v2438
  %v2455 = vmul.f32 %v2373, %v2439
  %v2456 = vmul.f32 %v2378, %v2440
  %v2457 = vmul.f32 %v2383, %v2441
  %v2458 = vmul.f32 %v2388, %v2442
  %v2459 = vmul.f32 %v2393, %v2443
  %v2460 = vmul.f32 %v2398, %v2444
  %v2461 = vmul.f32 %v2403, %v2445
  %v2462 = vmul.f32 %v2408, %v2446
  %v2463 = vmul.f32 %v2413, %v2447
  %v2464 = vmul.f32 %v2418, %v2448
  %v2465 = vmul.f32 %v2423, %v2449
  %v2466 = vmul.f32 %v2428, %v2450
  %v2467 = vmul.f32 %v2433, %v2451
  %2468 = vset.pattern.permute.xlu0 3
  %2469 = vperm.xlu0 %2468, %v790
  %v2470 = vpop.permute.xlu0 %2469
  %2472 = vset.pattern.permute.xlu0 3
  %2473 = vperm.xlu0 %2472, %v795
  %v2474 = vpop.permute.xlu0 %2473
  %2476 = vset.pattern.permute.xlu0 3
  %2477 = vperm.xlu0 %2476, %v800
  %v2478 = vpop.permute.xlu0 %2477
  %2480 = vset.pattern.permute.xlu0 3
  %2481 = vperm.xlu0 %2480, %v805
  %v2482 = vpop.permute.xlu0 %2481
  %2484 = vset.pattern.permute.xlu0 3
  %2485 = vperm.xlu0 %2484, %v810
  %v2486 = vpop.permute.xlu0 %2485
  %2488 = vset.pattern.permute.xlu0 3
  %2489 = vperm.xlu0 %2488, %v815
  %v2490 = vpop.permute.xlu0 %2489
  %2492 = vset.pattern.permute.xlu0 3
  %2493 = vperm.xlu0 %2492, %v820
  %v2494 = vpop.permute.xlu0 %2493
  %2496 = vset.pattern.permute.xlu0 3
  %2497 = vperm.xlu0 %2496, %v825
  %v2498 = vpop.permute.xlu0 %2497
  %2500 = vset.pattern.permute.xlu0 3
  %2501 = vperm.xlu0 %2500, %v830
  %v2502 = vpop.permute.xlu0 %2501
  %2504 = vset.pattern.permute.xlu0 3
  %2505 = vperm.xlu0 %2504, %v835
  %v2506 = vpop.permute.xlu0 %2505
  %2508 = vset.pattern.permute.xlu0 3
  %2509 = vperm.xlu0 %2508, %v840
  %v2510 = vpop.permute.xlu0 %2509
  %2512 = vset.pattern.permute.xlu0 3
  %2513 = vperm.xlu0 %2512, %v845
  %v2514 = vpop.permute.xlu0 %2513
  %2516 = vset.pattern.permute.xlu0 3
  %2517 = vperm.xlu0 %2516, %v850
  %v2518 = vpop.permute.xlu0 %2517
  %2520 = vset.pattern.permute.xlu0 3
  %2521 = vperm.xlu0 %2520, %v855
  %v2522 = vpop.permute.xlu0 %2521
  %2524 = vset.pattern.permute.xlu0 3
  %2525 = vperm.xlu0 %2524, %v860
  %v2526 = vpop.permute.xlu0 %2525
  %2528 = vset.pattern.permute.xlu0 3
  %2529 = vperm.xlu0 %2528, %v865
  %v2530 = vpop.permute.xlu0 %2529
  %v2532 = vlaneseq
  %v2533 = vshrl.u32 %v2532, 7
  %v2534 = vsub.s32 3, %v2533
  %v2535 = vrot.slane %v1029, %v2534
  %v2536 = vadd.f32 %v2470, %v2535
  %v2537 = vadd.f32 %v2474, %v2535
  %v2538 = vadd.f32 %v2478, %v2535
  %v2539 = vadd.f32 %v2482, %v2535
  %v2540 = vadd.f32 %v2486, %v2535
  %v2541 = vadd.f32 %v2490, %v2535
  %v2542 = vadd.f32 %v2494, %v2535
  %v2543 = vadd.f32 %v2498, %v2535
  %v2544 = vadd.f32 %v2502, %v2535
  %v2545 = vadd.f32 %v2506, %v2535
  %v2546 = vadd.f32 %v2510, %v2535
  %v2547 = vadd.f32 %v2514, %v2535
  %v2548 = vadd.f32 %v2518, %v2535
  %v2549 = vadd.f32 %v2522, %v2535
  %v2550 = vadd.f32 %v2526, %v2535
  %v2551 = vadd.f32 %v2530, %v2535
  %v2552 = vmul.f32 %v2536, 0.2
  %v2553 = vmul.f32 %v2537, 0.2
  %v2554 = vmul.f32 %v2538, 0.2
  %v2555 = vmul.f32 %v2539, 0.2
  %v2556 = vmul.f32 %v2540, 0.2
  %v2557 = vmul.f32 %v2541, 0.2
  %v2558 = vmul.f32 %v2542, 0.2
  %v2559 = vmul.f32 %v2543, 0.2
  %v2560 = vmul.f32 %v2544, 0.2
  %v2561 = vmul.f32 %v2545, 0.2
  %v2562 = vmul.f32 %v2546, 0.2
  %v2563 = vmul.f32 %v2547, 0.2
  %v2564 = vmul.f32 %v2548, 0.2
  %v2565 = vmul.f32 %v2549, 0.2
  %v2566 = vmul.f32 %v2550, 0.2
  %v2567 = vmul.f32 %v2551, 0.2
  %v2568 = vmax.f32 %v2536, %v2552
  %v2569 = vmax.f32 %v2537, %v2553
  %v2570 = vmax.f32 %v2538, %v2554
  %v2571 = vmax.f32 %v2539, %v2555
  %v2572 = vmax.f32 %v2540, %v2556
  %v2573 = vmax.f32 %v2541, %v2557
  %v2574 = vmax.f32 %v2542, %v2558
  %v2575 = vmax.f32 %v2543, %v2559
  %v2576 = vmax.f32 %v2544, %v2560
  %v2577 = vmax.f32 %v2545, %v2561
  %v2578 = vmax.f32 %v2546, %v2562
  %v2579 = vmax.f32 %v2547, %v2563
  %v2580 = vmax.f32 %v2548, %v2564
  %v2581 = vmax.f32 %v2549, %v2565
  %v2582 = vmax.f32 %v2550, %v2566
  %v2583 = vmax.f32 %v2551, %v2567
  %v2584 = vadd.f32 %v2568, %v107
  %v2585 = vadd.f32 %v2569, %v108
  %v2586 = vadd.f32 %v2570, %v109
  %v2587 = vadd.f32 %v2571, %v110
  %v2588 = vadd.f32 %v2572, %v111
  %v2589 = vadd.f32 %v2573, %v112
  %v2590 = vadd.f32 %v2574, %v113
  %v2591 = vadd.f32 %v2575, %v114
  %v2592 = vadd.f32 %v2576, %v115
  %v2593 = vadd.f32 %v2577, %v116
  %v2594 = vadd.f32 %v2578, %v117
  %v2595 = vadd.f32 %v2579, %v118
  %v2596 = vadd.f32 %v2580, %v119
  %v2597 = vadd.f32 %v2581, %v120
  %v2598 = vadd.f32 %v2582, %v121
  %v2599 = vadd.f32 %v2583, %v122
  %2600 = vmax.xlane.f32.xlu0 %v2584
  %v2601 = vpop.xlane.xlu0 %2600
  %2602 = vmax.xlane.f32.xlu0 %v2585
  %v2603 = vpop.xlane.xlu0 %2602
  %2604 = vmax.xlane.f32.xlu0 %v2586
  %v2605 = vpop.xlane.xlu0 %2604
  %2606 = vmax.xlane.f32.xlu0 %v2587
  %v2607 = vpop.xlane.xlu0 %2606
  %2608 = vmax.xlane.f32.xlu0 %v2588
  %v2609 = vpop.xlane.xlu0 %2608
  %2610 = vmax.xlane.f32.xlu0 %v2589
  %v2611 = vpop.xlane.xlu0 %2610
  %2612 = vmax.xlane.f32.xlu0 %v2590
  %v2613 = vpop.xlane.xlu0 %2612
  %2614 = vmax.xlane.f32.xlu0 %v2591
  %v2615 = vpop.xlane.xlu0 %2614
  %2616 = vmax.xlane.f32.xlu0 %v2592
  %v2617 = vpop.xlane.xlu0 %2616
  %2618 = vmax.xlane.f32.xlu0 %v2593
  %v2619 = vpop.xlane.xlu0 %2618
  %2620 = vmax.xlane.f32.xlu0 %v2594
  %v2621 = vpop.xlane.xlu0 %2620
  %2622 = vmax.xlane.f32.xlu0 %v2595
  %v2623 = vpop.xlane.xlu0 %2622
  %2624 = vmax.xlane.f32.xlu0 %v2596
  %v2625 = vpop.xlane.xlu0 %2624
  %2626 = vmax.xlane.f32.xlu0 %v2597
  %v2627 = vpop.xlane.xlu0 %2626
  %2628 = vmax.xlane.f32.xlu0 %v2598
  %v2629 = vpop.xlane.xlu0 %2628
  %2630 = vmax.xlane.f32.xlu0 %v2599
  %v2631 = vpop.xlane.xlu0 %2630
  %v2632 = vsub.f32 %v2584, %v2601
  %v2633 = vsub.f32 %v2585, %v2603
  %v2634 = vsub.f32 %v2586, %v2605
  %v2635 = vsub.f32 %v2587, %v2607
  %v2636 = vsub.f32 %v2588, %v2609
  %v2637 = vsub.f32 %v2589, %v2611
  %v2638 = vsub.f32 %v2590, %v2613
  %v2639 = vsub.f32 %v2591, %v2615
  %v2640 = vsub.f32 %v2592, %v2617
  %v2641 = vsub.f32 %v2593, %v2619
  %v2642 = vsub.f32 %v2594, %v2621
  %v2643 = vsub.f32 %v2595, %v2623
  %v2644 = vsub.f32 %v2596, %v2625
  %v2645 = vsub.f32 %v2597, %v2627
  %v2646 = vsub.f32 %v2598, %v2629
  %v2647 = vsub.f32 %v2599, %v2631
  %v2648 = vmul.f32 %v2632, 1.442695
  %v2649 = vpow.pop %v2648
  %v2650 = vmul.f32 %v2633, 1.442695
  %v2651 = vpow.pop %v2650
  %v2652 = vmul.f32 %v2634, 1.442695
  %v2653 = vpow.pop %v2652
  %v2654 = vmul.f32 %v2635, 1.442695
  %v2655 = vpow.pop %v2654
  %v2656 = vmul.f32 %v2636, 1.442695
  %v2657 = vpow.pop %v2656
  %v2658 = vmul.f32 %v2637, 1.442695
  %v2659 = vpow.pop %v2658
  %v2660 = vmul.f32 %v2638, 1.442695
  %v2661 = vpow.pop %v2660
  %v2662 = vmul.f32 %v2639, 1.442695
  %v2663 = vpow.pop %v2662
  %v2664 = vmul.f32 %v2640, 1.442695
  %v2665 = vpow.pop %v2664
  %v2666 = vmul.f32 %v2641, 1.442695
  %v2667 = vpow.pop %v2666
  %v2668 = vmul.f32 %v2642, 1.442695
  %v2669 = vpow.pop %v2668
  %v2670 = vmul.f32 %v2643, 1.442695
  %v2671 = vpow.pop %v2670
  %v2672 = vmul.f32 %v2644, 1.442695
  %v2673 = vpow.pop %v2672
  %v2674 = vmul.f32 %v2645, 1.442695
  %v2675 = vpow.pop %v2674
  %v2676 = vmul.f32 %v2646, 1.442695
  %v2677 = vpow.pop %v2676
  %v2678 = vmul.f32 %v2647, 1.442695
  %v2679 = vpow.pop %v2678
  %v2680 = vmul.f32 %v2649, %v75
  %v2681 = vmul.f32 %v2651, %v76
  %v2682 = vmul.f32 %v2653, %v77
  %v2683 = vmul.f32 %v2655, %v78
  %v2684 = vmul.f32 %v2657, %v79
  %v2685 = vmul.f32 %v2659, %v80
  %v2686 = vmul.f32 %v2661, %v81
  %v2687 = vmul.f32 %v2663, %v82
  %v2688 = vmul.f32 %v2665, %v83
  %v2689 = vmul.f32 %v2667, %v84
  %v2690 = vmul.f32 %v2669, %v85
  %v2691 = vmul.f32 %v2671, %v86
  %v2692 = vmul.f32 %v2673, %v87
  %v2693 = vmul.f32 %v2675, %v88
  %v2694 = vmul.f32 %v2677, %v89
  %v2695 = vmul.f32 %v2679, %v90
  %2696 = vadd.xlane.f32.xlu0 %v2680
  %v2697 = vpop.xlane.xlu0 %2696
  %2698 = vadd.xlane.f32.xlu0 %v2681
  %v2699 = vpop.xlane.xlu0 %2698
  %2700 = vadd.xlane.f32.xlu0 %v2682
  %v2701 = vpop.xlane.xlu0 %2700
  %2702 = vadd.xlane.f32.xlu0 %v2683
  %v2703 = vpop.xlane.xlu0 %2702
  %2704 = vadd.xlane.f32.xlu0 %v2684
  %v2705 = vpop.xlane.xlu0 %2704
  %2706 = vadd.xlane.f32.xlu0 %v2685
  %v2707 = vpop.xlane.xlu0 %2706
  %2708 = vadd.xlane.f32.xlu0 %v2686
  %v2709 = vpop.xlane.xlu0 %2708
  %2710 = vadd.xlane.f32.xlu0 %v2687
  %v2711 = vpop.xlane.xlu0 %2710
  %2712 = vadd.xlane.f32.xlu0 %v2688
  %v2713 = vpop.xlane.xlu0 %2712
  %2714 = vadd.xlane.f32.xlu0 %v2689
  %v2715 = vpop.xlane.xlu0 %2714
  %2716 = vadd.xlane.f32.xlu0 %v2690
  %v2717 = vpop.xlane.xlu0 %2716
  %2718 = vadd.xlane.f32.xlu0 %v2691
  %v2719 = vpop.xlane.xlu0 %2718
  %2720 = vadd.xlane.f32.xlu0 %v2692
  %v2721 = vpop.xlane.xlu0 %2720
  %2722 = vadd.xlane.f32.xlu0 %v2693
  %v2723 = vpop.xlane.xlu0 %2722
  %2724 = vadd.xlane.f32.xlu0 %v2694
  %v2725 = vpop.xlane.xlu0 %2724
  %2726 = vadd.xlane.f32.xlu0 %v2695
  %v2727 = vpop.xlane.xlu0 %2726
  %2728 = vrot.lane.b32.xlu0 %v597, 104
  %v2729 = vpop.permute.xlu0 %2728
  %2730 = vrot.lane.b32.xlu0 %v602, 104
  %v2731 = vpop.permute.xlu0 %2730
  %2732 = vrot.lane.b32.xlu0 %v607, 104
  %v2733 = vpop.permute.xlu0 %2732
  %2734 = vrot.lane.b32.xlu0 %v612, 104
  %v2735 = vpop.permute.xlu0 %2734
  %2736 = vrot.lane.b32.xlu0 %v617, 104
  %v2737 = vpop.permute.xlu0 %2736
  %2738 = vrot.lane.b32.xlu0 %v622, 104
  %v2739 = vpop.permute.xlu0 %2738
  %2740 = vrot.lane.b32.xlu0 %v627, 104
  %v2741 = vpop.permute.xlu0 %2740
  %2742 = vrot.lane.b32.xlu0 %v632, 104
  %v2743 = vpop.permute.xlu0 %2742
  %2744 = vrot.lane.b32.xlu0 %v637, 104
  %v2745 = vpop.permute.xlu0 %2744
  %2746 = vrot.lane.b32.xlu0 %v642, 104
  %v2747 = vpop.permute.xlu0 %2746
  %2748 = vrot.lane.b32.xlu0 %v647, 104
  %v2749 = vpop.permute.xlu0 %2748
  %2750 = vrot.lane.b32.xlu0 %v652, 104
  %v2751 = vpop.permute.xlu0 %2750
  %2752 = vrot.lane.b32.xlu0 %v657, 104
  %v2753 = vpop.permute.xlu0 %2752
  %2754 = vrot.lane.b32.xlu0 %v662, 104
  %v2755 = vpop.permute.xlu0 %2754
  %2756 = vrot.lane.b32.xlu0 %v667, 104
  %v2757 = vpop.permute.xlu0 %2756
  %2758 = vrot.lane.b32.xlu0 %v672, 104
  %v2759 = vpop.permute.xlu0 %2758
  %2776 = vmatprep.subr.mxu0 0.0
  %2777 = vmatpush1.msra.mxu0 %v2729
  %2778 = vmatprep.subr.mxu0 0.0
  %2779 = vmatpush1.msra.mxu0 %v2731
  %2780 = vmatprep.subr.mxu0 0.0
  %2781 = vmatpush1.msra.mxu0 %v2733
  %2782 = vmatprep.subr.mxu0 0.0
  %2783 = vmatpush1.msra.mxu0 %v2735
  %2784 = vmatprep.subr.mxu0 0.0
  %2785 = vmatpush1.msra.mxu0 %v2737
  %2786 = vmatprep.subr.mxu0 0.0
  %2787 = vmatpush1.msra.mxu0 %v2739
  %2788 = vmatprep.subr.mxu0 0.0
  %2789 = vmatpush1.msra.mxu0 %v2741
  %2790 = vmatprep.subr.mxu0 0.0
  %2791 = vmatpush1.msra.mxu0 %v2743
  %2792 = vmatprep.subr.mxu0 0.0
  %2793 = vmatpush1.msra.mxu0 %v2745
  %2794 = vmatprep.subr.mxu0 0.0
  %2795 = vmatpush1.msra.mxu0 %v2747
  %2796 = vmatprep.subr.mxu0 0.0
  %2797 = vmatpush1.msra.mxu0 %v2749
  %2798 = vmatprep.subr.mxu0 0.0
  %2799 = vmatpush1.msra.mxu0 %v2751
  %2800 = vmatprep.subr.mxu0 0.0
  %2801 = vmatpush1.msra.mxu0 %v2753
  %2802 = vmatprep.subr.mxu0 0.0
  %2803 = vmatpush1.msra.mxu0 %v2755
  %2804 = vmatprep.subr.mxu0 0.0
  %2805 = vmatpush1.msra.mxu0 %v2757
  %2806 = vmatprep.subr.mxu0 0.0
  %2807 = vmatpush1.msra.mxu0 %v2759
  %2808 = vmatprep.subr.mxu0 0.0
  %2809 = vmatpush1.msra.mxu0 0.0
  %2810 = vmatprep.subr.mxu0 0.0
  %2811 = vmatpush1.msra.mxu0 0.0
  %2812 = vmatprep.subr.mxu0 0.0
  %2813 = vmatpush1.msra.mxu0 0.0
  %2814 = vmatprep.subr.mxu0 0.0
  %2815 = vmatpush1.msra.mxu0 0.0
  %2816 = vmatprep.subr.mxu0 0.0
  %2817 = vmatpush1.msra.mxu0 0.0
  %2818 = vmatprep.subr.mxu0 0.0
  %2819 = vmatpush1.msra.mxu0 0.0
  %2820 = vmatprep.subr.mxu0 0.0
  %2821 = vmatpush1.msra.mxu0 0.0
  %2822 = vmatprep.subr.mxu0 0.0
  %2823 = vmatpush1.msra.mxu0 0.0
  %2824 = vmatprep.subr.mxu0 0.0
  %2825 = vmatpush1.msra.mxu0 0.0
  %2826 = vmatprep.subr.mxu0 0.0
  %2827 = vmatpush1.msra.mxu0 0.0
  %2828 = vmatprep.subr.mxu0 0.0
  %2829 = vmatpush1.msra.mxu0 0.0
  %2830 = vmatprep.subr.mxu0 0.0
  %2831 = vmatpush1.msra.mxu0 0.0
  %2832 = vmatprep.subr.mxu0 0.0
  %2833 = vmatpush1.msra.mxu0 0.0
  %2834 = vmatprep.subr.mxu0 0.0
  %2835 = vmatpush1.msra.mxu0 0.0
  %2836 = vmatprep.subr.mxu0 0.0
  %2837 = vmatpush1.msra.mxu0 0.0
  %2838 = vmatprep.subr.mxu0 0.0
  %2839 = vmatpush1.msra.mxu0 0.0
  %2840 = vmatprep.mubr.f32.mxu0 0.0
  %2841 = vmatmul.mubr.f32.gmra.mrb[0].mxu0 %v2680
  %v2842 = vpop.f32.mrb[0].mxu0
  %v2843 = vadd.f32 0.0, %v2842
  %v2844 = vpop.f32.mrb[0].mxu0
  %2845 = vmatprep.mubr.f32.mxu0 0.0
  %2846 = vmatmul.mubr.f32.gmra.mrb[0].mxu0 %v2681
  %v2847 = vpop.f32.mrb[0].mxu0
  %v2848 = vadd.f32 0.0, %v2847
  %v2849 = vpop.f32.mrb[0].mxu0
  %2850 = vmatprep.mubr.f32.mxu0 0.0
  %2851 = vmatmul.mubr.f32.gmra.mrb[0].mxu0 %v2682
  %v2852 = vpop.f32.mrb[0].mxu0
  %v2853 = vadd.f32 0.0, %v2852
  %v2854 = vpop.f32.mrb[0].mxu0
  %2855 = vmatprep.mubr.f32.mxu0 0.0
  %2856 = vmatmul.mubr.f32.gmra.mrb[0].mxu0 %v2683
  %v2857 = vpop.f32.mrb[0].mxu0
  %v2858 = vadd.f32 0.0, %v2857
  %v2859 = vpop.f32.mrb[0].mxu0
  %2860 = vmatprep.mubr.f32.mxu0 0.0
  %2861 = vmatmul.mubr.f32.gmra.mrb[0].mxu0 %v2684
  %v2862 = vpop.f32.mrb[0].mxu0
  %v2863 = vadd.f32 0.0, %v2862
  %v2864 = vpop.f32.mrb[0].mxu0
  %2865 = vmatprep.mubr.f32.mxu0 0.0
  %2866 = vmatmul.mubr.f32.gmra.mrb[0].mxu0 %v2685
  %v2867 = vpop.f32.mrb[0].mxu0
  %v2868 = vadd.f32 0.0, %v2867
  %v2869 = vpop.f32.mrb[0].mxu0
  %2870 = vmatprep.mubr.f32.mxu0 0.0
  %2871 = vmatmul.mubr.f32.gmra.mrb[0].mxu0 %v2686
  %v2872 = vpop.f32.mrb[0].mxu0
  %v2873 = vadd.f32 0.0, %v2872
  %v2874 = vpop.f32.mrb[0].mxu0
  %2875 = vmatprep.mubr.f32.mxu0 0.0
  %2876 = vmatmul.mubr.f32.gmra.mrb[0].mxu0 %v2687
  %v2877 = vpop.f32.mrb[0].mxu0
  %v2878 = vadd.f32 0.0, %v2877
  %v2879 = vpop.f32.mrb[0].mxu0
  %2880 = vmatprep.mubr.f32.mxu0 0.0
  %2881 = vmatmul.mubr.f32.gmra.mrb[0].mxu0 %v2688
  %v2882 = vpop.f32.mrb[0].mxu0
  %v2883 = vadd.f32 0.0, %v2882
  %v2884 = vpop.f32.mrb[0].mxu0
  %2885 = vmatprep.mubr.f32.mxu0 0.0
  %2886 = vmatmul.mubr.f32.gmra.mrb[0].mxu0 %v2689
  %v2887 = vpop.f32.mrb[0].mxu0
  %v2888 = vadd.f32 0.0, %v2887
  %v2889 = vpop.f32.mrb[0].mxu0
  %2890 = vmatprep.mubr.f32.mxu0 0.0
  %2891 = vmatmul.mubr.f32.gmra.mrb[0].mxu0 %v2690
  %v2892 = vpop.f32.mrb[0].mxu0
  %v2893 = vadd.f32 0.0, %v2892
  %v2894 = vpop.f32.mrb[0].mxu0
  %2895 = vmatprep.mubr.f32.mxu0 0.0
  %2896 = vmatmul.mubr.f32.gmra.mrb[0].mxu0 %v2691
  %v2897 = vpop.f32.mrb[0].mxu0
  %v2898 = vadd.f32 0.0, %v2897
  %v2899 = vpop.f32.mrb[0].mxu0
  %2900 = vmatprep.mubr.f32.mxu0 0.0
  %2901 = vmatmul.mubr.f32.gmra.mrb[0].mxu0 %v2692
  %v2902 = vpop.f32.mrb[0].mxu0
  %v2903 = vadd.f32 0.0, %v2902
  %v2904 = vpop.f32.mrb[0].mxu0
  %2905 = vmatprep.mubr.f32.mxu0 0.0
  %2906 = vmatmul.mubr.f32.gmra.mrb[0].mxu0 %v2693
  %v2907 = vpop.f32.mrb[0].mxu0
  %v2908 = vadd.f32 0.0, %v2907
  %v2909 = vpop.f32.mrb[0].mxu0
  %2910 = vmatprep.mubr.f32.mxu0 0.0
  %2911 = vmatmul.mubr.f32.gmra.mrb[0].mxu0 %v2694
  %v2912 = vpop.f32.mrb[0].mxu0
  %v2913 = vadd.f32 0.0, %v2912
  %v2914 = vpop.f32.mrb[0].mxu0
  %2915 = vmatprep.mubr.f32.mxu0 0.0
  %2916 = vmatmul.mubr.f32.gmra.mrb[0].mxu0 %v2695
  %v2917 = vpop.f32.mrb[0].mxu0
  %v2918 = vadd.f32 0.0, %v2917
  %v2919 = vpop.f32.mrb[0].mxu0
  %2920 = vdwg.mxu0
  %v2921 = vrcp.pop %v2697
  %v2922 = vrcp.pop %v2699
  %v2923 = vrcp.pop %v2701
  %v2924 = vrcp.pop %v2703
  %v2925 = vrcp.pop %v2705
  %v2926 = vrcp.pop %v2707
  %v2927 = vrcp.pop %v2709
  %v2928 = vrcp.pop %v2711
  %v2929 = vrcp.pop %v2713
  %v2930 = vrcp.pop %v2715
  %v2931 = vrcp.pop %v2717
  %v2932 = vrcp.pop %v2719
  %v2933 = vrcp.pop %v2721
  %v2934 = vrcp.pop %v2723
  %v2935 = vrcp.pop %v2725
  %v2936 = vrcp.pop %v2727
  %v2937 = vmul.f32 %v2843, %v2921
  %v2938 = vmul.f32 %v2848, %v2922
  %v2939 = vmul.f32 %v2853, %v2923
  %v2940 = vmul.f32 %v2858, %v2924
  %v2941 = vmul.f32 %v2863, %v2925
  %v2942 = vmul.f32 %v2868, %v2926
  %v2943 = vmul.f32 %v2873, %v2927
  %v2944 = vmul.f32 %v2878, %v2928
  %v2945 = vmul.f32 %v2883, %v2929
  %v2946 = vmul.f32 %v2888, %v2930
  %v2947 = vmul.f32 %v2893, %v2931
  %v2948 = vmul.f32 %v2898, %v2932
  %v2949 = vmul.f32 %v2903, %v2933
  %v2950 = vmul.f32 %v2908, %v2934
  %v2951 = vmul.f32 %v2913, %v2935
  %v2952 = vmul.f32 %v2918, %v2936
  %2969 = vrot.lane.b32.xlu0 %v1967, 8
  %v2970 = vpop.permute.xlu0 %2969
  %2971 = vrot.lane.b32.xlu0 %v1968, 8
  %v2972 = vpop.permute.xlu0 %2971
  %2973 = vrot.lane.b32.xlu0 %v1969, 8
  %v2974 = vpop.permute.xlu0 %2973
  %2975 = vrot.lane.b32.xlu0 %v1970, 8
  %v2976 = vpop.permute.xlu0 %2975
  %2977 = vrot.lane.b32.xlu0 %v1971, 8
  %v2978 = vpop.permute.xlu0 %2977
  %2979 = vrot.lane.b32.xlu0 %v1972, 8
  %v2980 = vpop.permute.xlu0 %2979
  %2981 = vrot.lane.b32.xlu0 %v1973, 8
  %v2982 = vpop.permute.xlu0 %2981
  %2983 = vrot.lane.b32.xlu0 %v1974, 8
  %v2984 = vpop.permute.xlu0 %2983
  %2985 = vrot.lane.b32.xlu0 %v1975, 8
  %v2986 = vpop.permute.xlu0 %2985
  %2987 = vrot.lane.b32.xlu0 %v1976, 8
  %v2988 = vpop.permute.xlu0 %2987
  %2989 = vrot.lane.b32.xlu0 %v1977, 8
  %v2990 = vpop.permute.xlu0 %2989
  %2991 = vrot.lane.b32.xlu0 %v1978, 8
  %v2992 = vpop.permute.xlu0 %2991
  %2993 = vrot.lane.b32.xlu0 %v1979, 8
  %v2994 = vpop.permute.xlu0 %2993
  %2995 = vrot.lane.b32.xlu0 %v1980, 8
  %v2996 = vpop.permute.xlu0 %2995
  %2997 = vrot.lane.b32.xlu0 %v1981, 8
  %v2998 = vpop.permute.xlu0 %2997
  %2999 = vrot.lane.b32.xlu0 %v1982, 8
  %v3000 = vpop.permute.xlu0 %2999
  %3033 = vrot.lane.b32.xlu0 %v2452, 16
  %v3034 = vpop.permute.xlu0 %3033
  %3035 = vrot.lane.b32.xlu0 %v2453, 16
  %v3036 = vpop.permute.xlu0 %3035
  %3037 = vrot.lane.b32.xlu0 %v2454, 16
  %v3038 = vpop.permute.xlu0 %3037
  %3039 = vrot.lane.b32.xlu0 %v2455, 16
  %v3040 = vpop.permute.xlu0 %3039
  %3041 = vrot.lane.b32.xlu0 %v2456, 16
  %v3042 = vpop.permute.xlu0 %3041
  %3043 = vrot.lane.b32.xlu0 %v2457, 16
  %v3044 = vpop.permute.xlu0 %3043
  %3045 = vrot.lane.b32.xlu0 %v2458, 16
  %v3046 = vpop.permute.xlu0 %3045
  %3047 = vrot.lane.b32.xlu0 %v2459, 16
  %v3048 = vpop.permute.xlu0 %3047
  %3049 = vrot.lane.b32.xlu0 %v2460, 16
  %v3050 = vpop.permute.xlu0 %3049
  %3051 = vrot.lane.b32.xlu0 %v2461, 16
  %v3052 = vpop.permute.xlu0 %3051
  %3053 = vrot.lane.b32.xlu0 %v2462, 16
  %v3054 = vpop.permute.xlu0 %3053
  %3055 = vrot.lane.b32.xlu0 %v2463, 16
  %v3056 = vpop.permute.xlu0 %3055
  %3057 = vrot.lane.b32.xlu0 %v2464, 16
  %v3058 = vpop.permute.xlu0 %3057
  %3059 = vrot.lane.b32.xlu0 %v2465, 16
  %v3060 = vpop.permute.xlu0 %3059
  %3061 = vrot.lane.b32.xlu0 %v2466, 16
  %v3062 = vpop.permute.xlu0 %3061
  %3063 = vrot.lane.b32.xlu0 %v2467, 16
  %v3064 = vpop.permute.xlu0 %3063
  %3097 = vrot.lane.b32.xlu0 %v2937, 24
  %v3098 = vpop.permute.xlu0 %3097
  %3099 = vrot.lane.b32.xlu0 %v2938, 24
  %v3100 = vpop.permute.xlu0 %3099
  %3101 = vrot.lane.b32.xlu0 %v2939, 24
  %v3102 = vpop.permute.xlu0 %3101
  %3103 = vrot.lane.b32.xlu0 %v2940, 24
  %v3104 = vpop.permute.xlu0 %3103
  %3105 = vrot.lane.b32.xlu0 %v2941, 24
  %v3106 = vpop.permute.xlu0 %3105
  %3107 = vrot.lane.b32.xlu0 %v2942, 24
  %v3108 = vpop.permute.xlu0 %3107
  %3109 = vrot.lane.b32.xlu0 %v2943, 24
  %v3110 = vpop.permute.xlu0 %3109
  %3111 = vrot.lane.b32.xlu0 %v2944, 24
  %v3112 = vpop.permute.xlu0 %3111
  %3113 = vrot.lane.b32.xlu0 %v2945, 24
  %v3114 = vpop.permute.xlu0 %3113
  %3115 = vrot.lane.b32.xlu0 %v2946, 24
  %v3116 = vpop.permute.xlu0 %3115
  %3117 = vrot.lane.b32.xlu0 %v2947, 24
  %v3118 = vpop.permute.xlu0 %3117
  %3119 = vrot.lane.b32.xlu0 %v2948, 24
  %v3120 = vpop.permute.xlu0 %3119
  %3121 = vrot.lane.b32.xlu0 %v2949, 24
  %v3122 = vpop.permute.xlu0 %3121
  %3123 = vrot.lane.b32.xlu0 %v2950, 24
  %v3124 = vpop.permute.xlu0 %3123
  %3125 = vrot.lane.b32.xlu0 %v2951, 24
  %v3126 = vpop.permute.xlu0 %3125
  %3127 = vrot.lane.b32.xlu0 %v2952, 24
  %v3128 = vpop.permute.xlu0 %3127
  %vm3145 = vcmask 64512
  %v3146 = vsel %vm3145, %v1482, %v2970
  %v3147 = vsel %vm3145, %v1483, %v2972
  %v3148 = vsel %vm3145, %v1484, %v2974
  %v3149 = vsel %vm3145, %v1485, %v2976
  %v3150 = vsel %vm3145, %v1486, %v2978
  %v3151 = vsel %vm3145, %v1487, %v2980
  %v3152 = vsel %vm3145, %v1488, %v2982
  %v3153 = vsel %vm3145, %v1489, %v2984
  %v3154 = vsel %vm3145, %v1490, %v2986
  %v3155 = vsel %vm3145, %v1491, %v2988
  %v3156 = vsel %vm3145, %v1492, %v2990
  %v3157 = vsel %vm3145, %v1493, %v2992
  %v3158 = vsel %vm3145, %v1494, %v2994
  %v3159 = vsel %vm3145, %v1495, %v2996
  %v3160 = vsel %vm3145, %v1496, %v2998
  %v3161 = vsel %vm3145, %v1497, %v3000
  %vm3162 = vcmask 130048
  %v3163 = vsel %vm3162, %v3146, %v3034
  %v3164 = vsel %vm3162, %v3147, %v3036
  %v3165 = vsel %vm3162, %v3148, %v3038
  %v3166 = vsel %vm3162, %v3149, %v3040
  %v3167 = vsel %vm3162, %v3150, %v3042
  %v3168 = vsel %vm3162, %v3151, %v3044
  %v3169 = vsel %vm3162, %v3152, %v3046
  %v3170 = vsel %vm3162, %v3153, %v3048
  %v3171 = vsel %vm3162, %v3154, %v3050
  %v3172 = vsel %vm3162, %v3155, %v3052
  %v3173 = vsel %vm3162, %v3156, %v3054
  %v3174 = vsel %vm3162, %v3157, %v3056
  %v3175 = vsel %vm3162, %v3158, %v3058
  %v3176 = vsel %vm3162, %v3159, %v3060
  %v3177 = vsel %vm3162, %v3160, %v3062
  %v3178 = vsel %vm3162, %v3161, %v3064
  %vm3179 = vcmask 195584
  %v3180 = vsel %vm3179, %v3163, %v3098
  %v3181 = vsel %vm3179, %v3164, %v3100
  %v3182 = vsel %vm3179, %v3165, %v3102
  %v3183 = vsel %vm3179, %v3166, %v3104
  %v3184 = vsel %vm3179, %v3167, %v3106
  %v3185 = vsel %vm3179, %v3168, %v3108
  %v3186 = vsel %vm3179, %v3169, %v3110
  %v3187 = vsel %vm3179, %v3170, %v3112
  %v3188 = vsel %vm3179, %v3171, %v3114
  %v3189 = vsel %vm3179, %v3172, %v3116
  %v3190 = vsel %vm3179, %v3173, %v3118
  %v3191 = vsel %vm3179, %v3174, %v3120
  %v3192 = vsel %vm3179, %v3175, %v3122
  %v3193 = vsel %vm3179, %v3176, %v3124
  %v3194 = vsel %vm3179, %v3177, %v3126
  %v3195 = vsel %vm3179, %v3178, %v3128
  %v3196 = vadd.f32 %v452, %v3180
  %v3197 = vadd.f32 %v457, %v3181
  %v3198 = vadd.f32 %v462, %v3182
  %v3199 = vadd.f32 %v467, %v3183
  %v3200 = vadd.f32 %v472, %v3184
  %v3201 = vadd.f32 %v477, %v3185
  %v3202 = vadd.f32 %v482, %v3186
  %v3203 = vadd.f32 %v487, %v3187
  %v3204 = vadd.f32 %v492, %v3188
  %v3205 = vadd.f32 %v497, %v3189
  %v3206 = vadd.f32 %v502, %v3190
  %v3207 = vadd.f32 %v507, %v3191
  %v3208 = vadd.f32 %v512, %v3192
  %v3209 = vadd.f32 %v517, %v3193
  %v3210 = vadd.f32 %v522, %v3194
  %v3211 = vadd.f32 %v527, %v3195
  %v3213 = vlaneseq
  %v3214 = vshrl.u32 %v3213, 7
  %v3215 = vsub.s32 0, %v3214
  %v3216 = vrot.slane %v322, %v3215
  %v3218 = vadd.f32 %v3196, %v3216
  %v3219 = vadd.f32 %v3197, %v3216
  %v3220 = vadd.f32 %v3198, %v3216
  %v3221 = vadd.f32 %v3199, %v3216
  %v3222 = vadd.f32 %v3200, %v3216
  %v3223 = vadd.f32 %v3201, %v3216
  %v3224 = vadd.f32 %v3202, %v3216
  %v3225 = vadd.f32 %v3203, %v3216
  %v3226 = vadd.f32 %v3204, %v3216
  %v3227 = vadd.f32 %v3205, %v3216
  %v3228 = vadd.f32 %v3206, %v3216
  %v3229 = vadd.f32 %v3207, %v3216
  %v3230 = vadd.f32 %v3208, %v3216
  %v3231 = vadd.f32 %v3209, %v3216
  %v3232 = vadd.f32 %v3210, %v3216
  %v3233 = vadd.f32 %v3211, %v3216
  %v3234 = vmax.f32 %v3218, 0.0
  %v3235 = vmax.f32 %v3219, 0.0
  %v3236 = vmax.f32 %v3220, 0.0
  %v3237 = vmax.f32 %v3221, 0.0
  %v3238 = vmax.f32 %v3222, 0.0
  %v3239 = vmax.f32 %v3223, 0.0
  %v3240 = vmax.f32 %v3224, 0.0
  %v3241 = vmax.f32 %v3225, 0.0
  %v3242 = vmax.f32 %v3226, 0.0
  %v3243 = vmax.f32 %v3227, 0.0
  %v3244 = vmax.f32 %v3228, 0.0
  %v3245 = vmax.f32 %v3229, 0.0
  %v3246 = vmax.f32 %v3230, 0.0
  %v3247 = vmax.f32 %v3231, 0.0
  %v3248 = vmax.f32 %v3232, 0.0
  %v3249 = vmax.f32 %v3233, 0.0
  %v3250 = vld [vmem:[%s10] sm:$0x1]
  %v3251 = vld [vmem:[%s11] sm:$0x1]
  %v3252 = vsel %vm141, %v3234, 0.0
  %v3253 = vsel %vm141, %v3235, 0.0
  %v3254 = vadd.f32 %v3252, %v3253
  %v3255 = vsel %vm141, %v3236, 0.0
  %v3256 = vadd.f32 %v3254, %v3255
  %v3257 = vsel %vm141, %v3237, 0.0
  %v3258 = vadd.f32 %v3256, %v3257
  %v3259 = vsel %vm141, %v3238, 0.0
  %v3260 = vadd.f32 %v3258, %v3259
  %v3261 = vsel %vm141, %v3239, 0.0
  %v3262 = vadd.f32 %v3260, %v3261
  %v3263 = vsel %vm141, %v3240, 0.0
  %v3264 = vadd.f32 %v3262, %v3263
  %v3265 = vsel %vm141, %v3241, 0.0
  %v3266 = vadd.f32 %v3264, %v3265
  %v3267 = vsel %vm141, %v3242, 0.0
  %v3268 = vadd.f32 %v3266, %v3267
  %v3269 = vsel %vm141, %v3243, 0.0
  %v3270 = vadd.f32 %v3268, %v3269
  %v3271 = vsel %vm141, %v3244, 0.0
  %v3272 = vadd.f32 %v3270, %v3271
  %v3273 = vsel %vm141, %v3245, 0.0
  %v3274 = vadd.f32 %v3272, %v3273
  %v3275 = vsel %vm141, %v3246, 0.0
  %v3276 = vadd.f32 %v3274, %v3275
  %v3277 = vsel %vm141, %v3247, 0.0
  %v3278 = vadd.f32 %v3276, %v3277
  %v3279 = vsel %vm141, %v3248, 0.0
  %v3280 = vadd.f32 %v3278, %v3279
  %v3281 = vsel %vm141, %v3249, 0.0
  %v3282 = vadd.f32 %v3280, %v3281
  %v3283 = vrot.slane %v3282, 4
  %v3284 = vadd.f32 %v3282, %v3283
  %v3285 = vrot.slane %v3284, 2
  %v3286 = vadd.f32 %v3284, %v3285
  %v3287 = vrot.slane %v3286, 1
  %v3288 = vadd.f32 %v3286, %v3287
  %v3289 = vmul.f32 %v3288, %v179
  %v3290 = vsub.f32 %v3234, %v3289
  %v3291 = vsub.f32 %v3235, %v3289
  %v3292 = vsub.f32 %v3236, %v3289
  %v3293 = vsub.f32 %v3237, %v3289
  %v3294 = vsub.f32 %v3238, %v3289
  %v3295 = vsub.f32 %v3239, %v3289
  %v3296 = vsub.f32 %v3240, %v3289
  %v3297 = vsub.f32 %v3241, %v3289
  %v3298 = vsub.f32 %v3242, %v3289
  %v3299 = vsub.f32 %v3243, %v3289
  %v3300 = vsub.f32 %v3244, %v3289
  %v3301 = vsub.f32 %v3245, %v3289
  %v3302 = vsub.f32 %v3246, %v3289
  %v3303 = vsub.f32 %v3247, %v3289
  %v3304 = vsub.f32 %v3248, %v3289
  %v3305 = vsub.f32 %v3249, %v3289
  %v3306 = vmul.f32 %v3290, %v3290
  %v3307 = vmul.f32 %v3291, %v3291
  %v3308 = vmul.f32 %v3292, %v3292
  %v3309 = vmul.f32 %v3293, %v3293
  %v3310 = vmul.f32 %v3294, %v3294
  %v3311 = vmul.f32 %v3295, %v3295
  %v3312 = vmul.f32 %v3296, %v3296
  %v3313 = vmul.f32 %v3297, %v3297
  %v3314 = vmul.f32 %v3298, %v3298
  %v3315 = vmul.f32 %v3299, %v3299
  %v3316 = vmul.f32 %v3300, %v3300
  %v3317 = vmul.f32 %v3301, %v3301
  %v3318 = vmul.f32 %v3302, %v3302
  %v3319 = vmul.f32 %v3303, %v3303
  %v3320 = vmul.f32 %v3304, %v3304
  %v3321 = vmul.f32 %v3305, %v3305
  %v3322 = vsel %vm141, %v3306, 0.0
  %v3323 = vsel %vm141, %v3307, 0.0
  %v3324 = vadd.f32 %v3322, %v3323
  %v3325 = vsel %vm141, %v3308, 0.0
  %v3326 = vadd.f32 %v3324, %v3325
  %v3327 = vsel %vm141, %v3309, 0.0
  %v3328 = vadd.f32 %v3326, %v3327
  %v3329 = vsel %vm141, %v3310, 0.0
  %v3330 = vadd.f32 %v3328, %v3329
  %v3331 = vsel %vm141, %v3311, 0.0
  %v3332 = vadd.f32 %v3330, %v3331
  %v3333 = vsel %vm141, %v3312, 0.0
  %v3334 = vadd.f32 %v3332, %v3333
  %v3335 = vsel %vm141, %v3313, 0.0
  %v3336 = vadd.f32 %v3334, %v3335
  %v3337 = vsel %vm141, %v3314, 0.0
  %v3338 = vadd.f32 %v3336, %v3337
  %v3339 = vsel %vm141, %v3315, 0.0
  %v3340 = vadd.f32 %v3338, %v3339
  %v3341 = vsel %vm141, %v3316, 0.0
  %v3342 = vadd.f32 %v3340, %v3341
  %v3343 = vsel %vm141, %v3317, 0.0
  %v3344 = vadd.f32 %v3342, %v3343
  %v3345 = vsel %vm141, %v3318, 0.0
  %v3346 = vadd.f32 %v3344, %v3345
  %v3347 = vsel %vm141, %v3319, 0.0
  %v3348 = vadd.f32 %v3346, %v3347
  %v3349 = vsel %vm141, %v3320, 0.0
  %v3350 = vadd.f32 %v3348, %v3349
  %v3351 = vsel %vm141, %v3321, 0.0
  %v3352 = vadd.f32 %v3350, %v3351
  %v3353 = vrot.slane %v3352, 4
  %v3354 = vadd.f32 %v3352, %v3353
  %v3355 = vrot.slane %v3354, 2
  %v3356 = vadd.f32 %v3354, %v3355
  %v3357 = vrot.slane %v3356, 1
  %v3358 = vadd.f32 %v3356, %v3357
  %v3359 = vmul.f32 %v3358, %v179
  %v3360 = vadd.f32 %v3359, 1e-05
  %v3361 = vrsqrt.pop %v3360
  %v3362 = vmul.f32 %v3290, %v3361
  %v3363 = vmul.f32 %v3291, %v3361
  %v3364 = vmul.f32 %v3292, %v3361
  %v3365 = vmul.f32 %v3293, %v3361
  %v3366 = vmul.f32 %v3294, %v3361
  %v3367 = vmul.f32 %v3295, %v3361
  %v3368 = vmul.f32 %v3296, %v3361
  %v3369 = vmul.f32 %v3297, %v3361
  %v3370 = vmul.f32 %v3298, %v3361
  %v3371 = vmul.f32 %v3299, %v3361
  %v3372 = vmul.f32 %v3300, %v3361
  %v3373 = vmul.f32 %v3301, %v3361
  %v3374 = vmul.f32 %v3302, %v3361
  %v3375 = vmul.f32 %v3303, %v3361
  %v3376 = vmul.f32 %v3304, %v3361
  %v3377 = vmul.f32 %v3305, %v3361
  %v3379 = vlaneseq
  %v3380 = vshrl.u32 %v3379, 7
  %v3381 = vsub.s32 0, %v3380
  %v3382 = vrot.slane %v3250, %v3381
  %v3384 = vmul.f32 %v3362, %v3382
  %v3385 = vmul.f32 %v3363, %v3382
  %v3386 = vmul.f32 %v3364, %v3382
  %v3387 = vmul.f32 %v3365, %v3382
  %v3388 = vmul.f32 %v3366, %v3382
  %v3389 = vmul.f32 %v3367, %v3382
  %v3390 = vmul.f32 %v3368, %v3382
  %v3391 = vmul.f32 %v3369, %v3382
  %v3392 = vmul.f32 %v3370, %v3382
  %v3393 = vmul.f32 %v3371, %v3382
  %v3394 = vmul.f32 %v3372, %v3382
  %v3395 = vmul.f32 %v3373, %v3382
  %v3396 = vmul.f32 %v3374, %v3382
  %v3397 = vmul.f32 %v3375, %v3382
  %v3398 = vmul.f32 %v3376, %v3382
  %v3399 = vmul.f32 %v3377, %v3382
  %v3401 = vlaneseq
  %v3402 = vshrl.u32 %v3401, 7
  %v3403 = vsub.s32 0, %v3402
  %v3404 = vrot.slane %v3251, %v3403
  %v3406 = vadd.f32 %v3384, %v3404
  %v3407 = vadd.f32 %v3385, %v3404
  %v3408 = vadd.f32 %v3386, %v3404
  %v3409 = vadd.f32 %v3387, %v3404
  %v3410 = vadd.f32 %v3388, %v3404
  %v3411 = vadd.f32 %v3389, %v3404
  %v3412 = vadd.f32 %v3390, %v3404
  %v3413 = vadd.f32 %v3391, %v3404
  %v3414 = vadd.f32 %v3392, %v3404
  %v3415 = vadd.f32 %v3393, %v3404
  %v3416 = vadd.f32 %v3394, %v3404
  %v3417 = vadd.f32 %v3395, %v3404
  %v3418 = vadd.f32 %v3396, %v3404
  %v3419 = vadd.f32 %v3397, %v3404
  %v3420 = vadd.f32 %v3398, %v3404
  %v3421 = vadd.f32 %v3399, %v3404
  %v3422 = vld [vmem:[%s12] sm:$0xff]
  %v3423 = vld [vmem:[%s12 + $0x8] sm:$0xff]
  %v3424 = vld [vmem:[%s12 + $0x10] sm:$0xff]
  %v3425 = vld [vmem:[%s12 + $0x18] sm:$0xff]
  %v3426 = vld [vmem:[%s13] sm:$0x1]
  %v3427 = vld [vmem:[%s14] sm:$0xff]
  %v3428 = vld [vmem:[%s14 + $0x8] sm:$0xff]
  %v3429 = vld [vmem:[%s14 + $0x10] sm:$0xff]
  %v3430 = vld [vmem:[%s14 + $0x18] sm:$0xff]
  %v3431 = vld [vmem:[%s15] sm:$0x1]
  %v3432 = vld [vmem:[%s16] sm:$0xff]
  %v3433 = vld [vmem:[%s16 + $0x8] sm:$0xff]
  %v3434 = vld [vmem:[%s16 + $0x10] sm:$0xff]
  %v3435 = vld [vmem:[%s16 + $0x18] sm:$0xff]
  %v3436 = vld [vmem:[%s16 + $0x20] sm:$0xff]
  %v3437 = vld [vmem:[%s16 + $0x28] sm:$0xff]
  %v3438 = vld [vmem:[%s16 + $0x30] sm:$0xff]
  %v3439 = vld [vmem:[%s16 + $0x38] sm:$0xff]
  %v3440 = vld [vmem:[%s16 + $0x40] sm:$0xff]
  %v3441 = vld [vmem:[%s16 + $0x48] sm:$0xff]
  %v3442 = vld [vmem:[%s16 + $0x50] sm:$0xff]
  %v3443 = vld [vmem:[%s16 + $0x58] sm:$0xff]
  %v3444 = vld [vmem:[%s16 + $0x60] sm:$0xff]
  %v3445 = vld [vmem:[%s16 + $0x68] sm:$0xff]
  %v3446 = vld [vmem:[%s16 + $0x70] sm:$0xff]
  %v3447 = vld [vmem:[%s16 + $0x78] sm:$0xff]
  %v3448 = vld [vmem:[%s17] sm:$0xff]
  %v3449 = vld [vmem:[%s17 + $0x8] sm:$0xff]
  %v3450 = vld [vmem:[%s17 + $0x10] sm:$0xff]
  %v3451 = vld [vmem:[%s17 + $0x18] sm:$0xff]
  %v3452 = vld [vmem:[%s17 + $0x20] sm:$0xff]
  %v3453 = vld [vmem:[%s17 + $0x28] sm:$0xff]
  %v3454 = vld [vmem:[%s17 + $0x30] sm:$0xff]
  %v3455 = vld [vmem:[%s17 + $0x38] sm:$0xff]
  %v3456 = vld [vmem:[%s17 + $0x40] sm:$0xff]
  %v3457 = vld [vmem:[%s17 + $0x48] sm:$0xff]
  %v3458 = vld [vmem:[%s17 + $0x50] sm:$0xff]
  %v3459 = vld [vmem:[%s17 + $0x58] sm:$0xff]
  %v3460 = vld [vmem:[%s17 + $0x60] sm:$0xff]
  %v3461 = vld [vmem:[%s17 + $0x68] sm:$0xff]
  %v3462 = vld [vmem:[%s17 + $0x70] sm:$0xff]
  %v3463 = vld [vmem:[%s17 + $0x78] sm:$0xff]
  %v3465 = vlaneseq
  %v3466 = vshrl.u32 %v3465, 7
  %v3467 = vsub.s32 0, %v3466
  %v3468 = vrot.slane %v3426, %v3467
  %v3471 = vsel %vm141, %v3406, 0
  %v3474 = vsel %vm141, %v3407, 0
  %v3477 = vsel %vm141, %v3408, 0
  %v3480 = vsel %vm141, %v3409, 0
  %v3483 = vsel %vm141, %v3410, 0
  %v3486 = vsel %vm141, %v3411, 0
  %v3489 = vsel %vm141, %v3412, 0
  %v3492 = vsel %vm141, %v3413, 0
  %v3495 = vsel %vm141, %v3414, 0
  %v3498 = vsel %vm141, %v3415, 0
  %v3501 = vsel %vm141, %v3416, 0
  %v3504 = vsel %vm141, %v3417, 0
  %v3507 = vsel %vm141, %v3418, 0
  %v3510 = vsel %vm141, %v3419, 0
  %v3513 = vsel %vm141, %v3420, 0
  %v3516 = vsel %vm141, %v3421, 0
  %3518 = vmatprep.subr.mxu0 0.0
  %3519 = vmatpush1.msra.mxu0 %v3422
  %3520 = vmatprep.subr.mxu0 0.0
  %3521 = vmatpush1.msra.mxu0 %v3423
  %3522 = vmatprep.subr.mxu0 0.0
  %3523 = vmatpush1.msra.mxu0 %v3424
  %3524 = vmatprep.subr.mxu0 0.0
  %3525 = vmatpush1.msra.mxu0 %v3425
  %3526 = vmatprep.subr.mxu0 0.0
  %3527 = vmatpush1.msra.mxu0 0.0
  %3528 = vmatprep.subr.mxu0 0.0
  %3529 = vmatpush1.msra.mxu0 0.0
  %3530 = vmatprep.subr.mxu0 0.0
  %3531 = vmatpush1.msra.mxu0 0.0
  %3532 = vmatprep.subr.mxu0 0.0
  %3533 = vmatpush1.msra.mxu0 0.0
  %3534 = vmatprep.subr.mxu0 0.0
  %3535 = vmatpush1.msra.mxu0 0.0
  %3536 = vmatprep.subr.mxu0 0.0
  %3537 = vmatpush1.msra.mxu0 0.0
  %3538 = vmatprep.subr.mxu0 0.0
  %3539 = vmatpush1.msra.mxu0 0.0
  %3540 = vmatprep.subr.mxu0 0.0
  %3541 = vmatpush1.msra.mxu0 0.0
  %3542 = vmatprep.subr.mxu0 0.0
  %3543 = vmatpush1.msra.mxu0 0.0
  %3544 = vmatprep.subr.mxu0 0.0
  %3545 = vmatpush1.msra.mxu0 0.0
  %3546 = vmatprep.subr.mxu0 0.0
  %3547 = vmatpush1.msra.mxu0 0.0
  %3548 = vmatprep.subr.mxu0 0.0
  %3549 = vmatpush1.msra.mxu0 0.0
  %3550 = vmatprep.subr.mxu0 0.0
  %3551 = vmatpush1.msra.mxu0 0.0
  %3552 = vmatprep.subr.mxu0 0.0
  %3553 = vmatpush1.msra.mxu0 0.0
  %3554 = vmatprep.subr.mxu0 0.0
  %3555 = vmatpush1.msra.mxu0 0.0
  %3556 = vmatprep.subr.mxu0 0.0
  %3557 = vmatpush1.msra.mxu0 0.0
  %3558 = vmatprep.subr.mxu0 0.0
  %3559 = vmatpush1.msra.mxu0 0.0
  %3560 = vmatprep.subr.mxu0 0.0
  %3561 = vmatpush1.msra.mxu0 0.0
  %3562 = vmatprep.subr.mxu0 0.0
  %3563 = vmatpush1.msra.mxu0 0.0
  %3564 = vmatprep.subr.mxu0 0.0
  %3565 = vmatpush1.msra.mxu0 0.0
  %3566 = vmatprep.subr.mxu0 0.0
  %3567 = vmatpush1.msra.mxu0 0.0
  %3568 = vmatprep.subr.mxu0 0.0
  %3569 = vmatpush1.msra.mxu0 0.0
  %3570 = vmatprep.subr.mxu0 0.0
  %3571 = vmatpush1.msra.mxu0 0.0
  %3572 = vmatprep.subr.mxu0 0.0
  %3573 = vmatpush1.msra.mxu0 0.0
  %3574 = vmatprep.subr.mxu0 0.0
  %3575 = vmatpush1.msra.mxu0 0.0
  %3576 = vmatprep.subr.mxu0 0.0
  %3577 = vmatpush1.msra.mxu0 0.0
  %3578 = vmatprep.subr.mxu0 0.0
  %3579 = vmatpush1.msra.mxu0 0.0
  %3580 = vmatprep.subr.mxu0 0.0
  %3581 = vmatpush1.msra.mxu0 0.0
  %3582 = vmatprep.mubr.f32.mxu0 0.0
  %3583 = vmatmul.mubr.f32.gmra.mrb[0].mxu0 %v3471
  %v3584 = vpop.f32.mrb[0].mxu0
  %v3585 = vadd.f32 %v3468, %v3584
  %v3586 = vpop.f32.mrb[0].mxu0
  %3587 = vmatprep.mubr.f32.mxu0 0.0
  %3588 = vmatmul.mubr.f32.gmra.mrb[0].mxu0 %v3474
  %v3589 = vpop.f32.mrb[0].mxu0
  %v3590 = vadd.f32 %v3468, %v3589
  %v3591 = vpop.f32.mrb[0].mxu0
  %3592 = vmatprep.mubr.f32.mxu0 0.0
  %3593 = vmatmul.mubr.f32.gmra.mrb[0].mxu0 %v3477
  %v3594 = vpop.f32.mrb[0].mxu0
  %v3595 = vadd.f32 %v3468, %v3594
  %v3596 = vpop.f32.mrb[0].mxu0
  %3597 = vmatprep.mubr.f32.mxu0 0.0
  %3598 = vmatmul.mubr.f32.gmra.mrb[0].mxu0 %v3480
  %v3599 = vpop.f32.mrb[0].mxu0
  %v3600 = vadd.f32 %v3468, %v3599
  %v3601 = vpop.f32.mrb[0].mxu0
  %3602 = vmatprep.mubr.f32.mxu0 0.0
  %3603 = vmatmul.mubr.f32.gmra.mrb[0].mxu0 %v3483
  %v3604 = vpop.f32.mrb[0].mxu0
  %v3605 = vadd.f32 %v3468, %v3604
  %v3606 = vpop.f32.mrb[0].mxu0
  %3607 = vmatprep.mubr.f32.mxu0 0.0
  %3608 = vmatmul.mubr.f32.gmra.mrb[0].mxu0 %v3486
  %v3609 = vpop.f32.mrb[0].mxu0
  %v3610 = vadd.f32 %v3468, %v3609
  %v3611 = vpop.f32.mrb[0].mxu0
  %3612 = vmatprep.mubr.f32.mxu0 0.0
  %3613 = vmatmul.mubr.f32.gmra.mrb[0].mxu0 %v3489
  %v3614 = vpop.f32.mrb[0].mxu0
  %v3615 = vadd.f32 %v3468, %v3614
  %v3616 = vpop.f32.mrb[0].mxu0
  %3617 = vmatprep.mubr.f32.mxu0 0.0
  %3618 = vmatmul.mubr.f32.gmra.mrb[0].mxu0 %v3492
  %v3619 = vpop.f32.mrb[0].mxu0
  %v3620 = vadd.f32 %v3468, %v3619
  %v3621 = vpop.f32.mrb[0].mxu0
  %3622 = vmatprep.mubr.f32.mxu0 0.0
  %3623 = vmatmul.mubr.f32.gmra.mrb[0].mxu0 %v3495
  %v3624 = vpop.f32.mrb[0].mxu0
  %v3625 = vadd.f32 %v3468, %v3624
  %v3626 = vpop.f32.mrb[0].mxu0
  %3627 = vmatprep.mubr.f32.mxu0 0.0
  %3628 = vmatmul.mubr.f32.gmra.mrb[0].mxu0 %v3498
  %v3629 = vpop.f32.mrb[0].mxu0
  %v3630 = vadd.f32 %v3468, %v3629
  %v3631 = vpop.f32.mrb[0].mxu0
  %3632 = vmatprep.mubr.f32.mxu0 0.0
  %3633 = vmatmul.mubr.f32.gmra.mrb[0].mxu0 %v3501
  %v3634 = vpop.f32.mrb[0].mxu0
  %v3635 = vadd.f32 %v3468, %v3634
  %v3636 = vpop.f32.mrb[0].mxu0
  %3637 = vmatprep.mubr.f32.mxu0 0.0
  %3638 = vmatmul.mubr.f32.gmra.mrb[0].mxu0 %v3504
  %v3639 = vpop.f32.mrb[0].mxu0
  %v3640 = vadd.f32 %v3468, %v3639
  %v3641 = vpop.f32.mrb[0].mxu0
  %3642 = vmatprep.mubr.f32.mxu0 0.0
  %3643 = vmatmul.mubr.f32.gmra.mrb[0].mxu0 %v3507
  %v3644 = vpop.f32.mrb[0].mxu0
  %v3645 = vadd.f32 %v3468, %v3644
  %v3646 = vpop.f32.mrb[0].mxu0
  %3647 = vmatprep.mubr.f32.mxu0 0.0
  %3648 = vmatmul.mubr.f32.gmra.mrb[0].mxu0 %v3510
  %v3649 = vpop.f32.mrb[0].mxu0
  %v3650 = vadd.f32 %v3468, %v3649
  %v3651 = vpop.f32.mrb[0].mxu0
  %3652 = vmatprep.mubr.f32.mxu0 0.0
  %3653 = vmatmul.mubr.f32.gmra.mrb[0].mxu0 %v3513
  %v3654 = vpop.f32.mrb[0].mxu0
  %v3655 = vadd.f32 %v3468, %v3654
  %v3656 = vpop.f32.mrb[0].mxu0
  %3657 = vmatprep.mubr.f32.mxu0 0.0
  %3658 = vmatmul.mubr.f32.gmra.mrb[0].mxu0 %v3516
  %v3659 = vpop.f32.mrb[0].mxu0
  %v3660 = vadd.f32 %v3468, %v3659
  %v3661 = vpop.f32.mrb[0].mxu0
  %3662 = vdwg.mxu0
  %3663 = vmatprep.subr.mxu0 0.0
  %3664 = vmatpush1.msra.mxu0 %v3427
  %3665 = vmatprep.subr.mxu0 0.0
  %3666 = vmatpush1.msra.mxu0 %v3428
  %3667 = vmatprep.subr.mxu0 0.0
  %3668 = vmatpush1.msra.mxu0 %v3429
  %3669 = vmatprep.subr.mxu0 0.0
  %3670 = vmatpush1.msra.mxu0 %v3430
  %3671 = vmatprep.subr.mxu0 0.0
  %3672 = vmatpush1.msra.mxu0 0.0
  %3673 = vmatprep.subr.mxu0 0.0
  %3674 = vmatpush1.msra.mxu0 0.0
  %3675 = vmatprep.subr.mxu0 0.0
  %3676 = vmatpush1.msra.mxu0 0.0
  %3677 = vmatprep.subr.mxu0 0.0
  %3678 = vmatpush1.msra.mxu0 0.0
  %3679 = vmatprep.subr.mxu0 0.0
  %3680 = vmatpush1.msra.mxu0 0.0
  %3681 = vmatprep.subr.mxu0 0.0
  %3682 = vmatpush1.msra.mxu0 0.0
  %3683 = vmatprep.subr.mxu0 0.0
  %3684 = vmatpush1.msra.mxu0 0.0
  %3685 = vmatprep.subr.mxu0 0.0
  %3686 = vmatpush1.msra.mxu0 0.0
  %3687 = vmatprep.subr.mxu0 0.0
  %3688 = vmatpush1.msra.mxu0 0.0
  %3689 = vmatprep.subr.mxu0 0.0
  %3690 = vmatpush1.msra.mxu0 0.0
  %3691 = vmatprep.subr.mxu0 0.0
  %3692 = vmatpush1.msra.mxu0 0.0
  %3693 = vmatprep.subr.mxu0 0.0
  %3694 = vmatpush1.msra.mxu0 0.0
  %3695 = vmatprep.subr.mxu0 0.0
  %3696 = vmatpush1.msra.mxu0 0.0
  %3697 = vmatprep.subr.mxu0 0.0
  %3698 = vmatpush1.msra.mxu0 0.0
  %3699 = vmatprep.subr.mxu0 0.0
  %3700 = vmatpush1.msra.mxu0 0.0
  %3701 = vmatprep.subr.mxu0 0.0
  %3702 = vmatpush1.msra.mxu0 0.0
  %3703 = vmatprep.subr.mxu0 0.0
  %3704 = vmatpush1.msra.mxu0 0.0
  %3705 = vmatprep.subr.mxu0 0.0
  %3706 = vmatpush1.msra.mxu0 0.0
  %3707 = vmatprep.subr.mxu0 0.0
  %3708 = vmatpush1.msra.mxu0 0.0
  %3709 = vmatprep.subr.mxu0 0.0
  %3710 = vmatpush1.msra.mxu0 0.0
  %3711 = vmatprep.subr.mxu0 0.0
  %3712 = vmatpush1.msra.mxu0 0.0
  %3713 = vmatprep.subr.mxu0 0.0
  %3714 = vmatpush1.msra.mxu0 0.0
  %3715 = vmatprep.subr.mxu0 0.0
  %3716 = vmatpush1.msra.mxu0 0.0
  %3717 = vmatprep.subr.mxu0 0.0
  %3718 = vmatpush1.msra.mxu0 0.0
  %3719 = vmatprep.subr.mxu0 0.0
  %3720 = vmatpush1.msra.mxu0 0.0
  %3721 = vmatprep.subr.mxu0 0.0
  %3722 = vmatpush1.msra.mxu0 0.0
  %3723 = vmatprep.subr.mxu0 0.0
  %3724 = vmatpush1.msra.mxu0 0.0
  %3725 = vmatprep.subr.mxu0 0.0
  %3726 = vmatpush1.msra.mxu0 0.0
  %3727 = vmatprep.mubr.f32.mxu0 0.0
  %3728 = vmatmul.mubr.f32.gmra.mrb[0].mxu0 %v3471
  %v3729 = vpop.f32.mrb[0].mxu0
  %v3730 = vadd.f32 0.0, %v3729
  %v3731 = vpop.f32.mrb[0].mxu0
  %3732 = vmatprep.mubr.f32.mxu0 0.0
  %3733 = vmatmul.mubr.f32.gmra.mrb[0].mxu0 %v3474
  %v3734 = vpop.f32.mrb[0].mxu0
  %v3735 = vadd.f32 0.0, %v3734
  %v3736 = vpop.f32.mrb[0].mxu0
  %3737 = vmatprep.mubr.f32.mxu0 0.0
  %3738 = vmatmul.mubr.f32.gmra.mrb[0].mxu0 %v3477
  %v3739 = vpop.f32.mrb[0].mxu0
  %v3740 = vadd.f32 0.0, %v3739
  %v3741 = vpop.f32.mrb[0].mxu0
  %3742 = vmatprep.mubr.f32.mxu0 0.0
  %3743 = vmatmul.mubr.f32.gmra.mrb[0].mxu0 %v3480
  %v3744 = vpop.f32.mrb[0].mxu0
  %v3745 = vadd.f32 0.0, %v3744
  %v3746 = vpop.f32.mrb[0].mxu0
  %3747 = vmatprep.mubr.f32.mxu0 0.0
  %3748 = vmatmul.mubr.f32.gmra.mrb[0].mxu0 %v3483
  %v3749 = vpop.f32.mrb[0].mxu0
  %v3750 = vadd.f32 0.0, %v3749
  %v3751 = vpop.f32.mrb[0].mxu0
  %3752 = vmatprep.mubr.f32.mxu0 0.0
  %3753 = vmatmul.mubr.f32.gmra.mrb[0].mxu0 %v3486
  %v3754 = vpop.f32.mrb[0].mxu0
  %v3755 = vadd.f32 0.0, %v3754
  %v3756 = vpop.f32.mrb[0].mxu0
  %3757 = vmatprep.mubr.f32.mxu0 0.0
  %3758 = vmatmul.mubr.f32.gmra.mrb[0].mxu0 %v3489
  %v3759 = vpop.f32.mrb[0].mxu0
  %v3760 = vadd.f32 0.0, %v3759
  %v3761 = vpop.f32.mrb[0].mxu0
  %3762 = vmatprep.mubr.f32.mxu0 0.0
  %3763 = vmatmul.mubr.f32.gmra.mrb[0].mxu0 %v3492
  %v3764 = vpop.f32.mrb[0].mxu0
  %v3765 = vadd.f32 0.0, %v3764
  %v3766 = vpop.f32.mrb[0].mxu0
  %3767 = vmatprep.mubr.f32.mxu0 0.0
  %3768 = vmatmul.mubr.f32.gmra.mrb[0].mxu0 %v3495
  %v3769 = vpop.f32.mrb[0].mxu0
  %v3770 = vadd.f32 0.0, %v3769
  %v3771 = vpop.f32.mrb[0].mxu0
  %3772 = vmatprep.mubr.f32.mxu0 0.0
  %3773 = vmatmul.mubr.f32.gmra.mrb[0].mxu0 %v3498
  %v3774 = vpop.f32.mrb[0].mxu0
  %v3775 = vadd.f32 0.0, %v3774
  %v3776 = vpop.f32.mrb[0].mxu0
  %3777 = vmatprep.mubr.f32.mxu0 0.0
  %3778 = vmatmul.mubr.f32.gmra.mrb[0].mxu0 %v3501
  %v3779 = vpop.f32.mrb[0].mxu0
  %v3780 = vadd.f32 0.0, %v3779
  %v3781 = vpop.f32.mrb[0].mxu0
  %3782 = vmatprep.mubr.f32.mxu0 0.0
  %3783 = vmatmul.mubr.f32.gmra.mrb[0].mxu0 %v3504
  %v3784 = vpop.f32.mrb[0].mxu0
  %v3785 = vadd.f32 0.0, %v3784
  %v3786 = vpop.f32.mrb[0].mxu0
  %3787 = vmatprep.mubr.f32.mxu0 0.0
  %3788 = vmatmul.mubr.f32.gmra.mrb[0].mxu0 %v3507
  %v3789 = vpop.f32.mrb[0].mxu0
  %v3790 = vadd.f32 0.0, %v3789
  %v3791 = vpop.f32.mrb[0].mxu0
  %3792 = vmatprep.mubr.f32.mxu0 0.0
  %3793 = vmatmul.mubr.f32.gmra.mrb[0].mxu0 %v3510
  %v3794 = vpop.f32.mrb[0].mxu0
  %v3795 = vadd.f32 0.0, %v3794
  %v3796 = vpop.f32.mrb[0].mxu0
  %3797 = vmatprep.mubr.f32.mxu0 0.0
  %3798 = vmatmul.mubr.f32.gmra.mrb[0].mxu0 %v3513
  %v3799 = vpop.f32.mrb[0].mxu0
  %v3800 = vadd.f32 0.0, %v3799
  %v3801 = vpop.f32.mrb[0].mxu0
  %3802 = vmatprep.mubr.f32.mxu0 0.0
  %3803 = vmatmul.mubr.f32.gmra.mrb[0].mxu0 %v3516
  %v3804 = vpop.f32.mrb[0].mxu0
  %v3805 = vadd.f32 0.0, %v3804
  %v3806 = vpop.f32.mrb[0].mxu0
  %3807 = vdwg.mxu0
  %3808 = vmatprep.subr.mxu0 0.0
  %3809 = vmatpush1.msra.mxu0 %v3448
  %3810 = vmatprep.subr.mxu0 0.0
  %3811 = vmatpush1.msra.mxu0 %v3449
  %3812 = vmatprep.subr.mxu0 0.0
  %3813 = vmatpush1.msra.mxu0 %v3450
  %3814 = vmatprep.subr.mxu0 0.0
  %3815 = vmatpush1.msra.mxu0 %v3451
  %3816 = vmatprep.subr.mxu0 0.0
  %3817 = vmatpush1.msra.mxu0 %v3452
  %3818 = vmatprep.subr.mxu0 0.0
  %3819 = vmatpush1.msra.mxu0 %v3453
  %3820 = vmatprep.subr.mxu0 0.0
  %3821 = vmatpush1.msra.mxu0 %v3454
  %3822 = vmatprep.subr.mxu0 0.0
  %3823 = vmatpush1.msra.mxu0 %v3455
  %3824 = vmatprep.subr.mxu0 0.0
  %3825 = vmatpush1.msra.mxu0 %v3456
  %3826 = vmatprep.subr.mxu0 0.0
  %3827 = vmatpush1.msra.mxu0 %v3457
  %3828 = vmatprep.subr.mxu0 0.0
  %3829 = vmatpush1.msra.mxu0 %v3458
  %3830 = vmatprep.subr.mxu0 0.0
  %3831 = vmatpush1.msra.mxu0 %v3459
  %3832 = vmatprep.subr.mxu0 0.0
  %3833 = vmatpush1.msra.mxu0 %v3460
  %3834 = vmatprep.subr.mxu0 0.0
  %3835 = vmatpush1.msra.mxu0 %v3461
  %3836 = vmatprep.subr.mxu0 0.0
  %3837 = vmatpush1.msra.mxu0 %v3462
  %3838 = vmatprep.subr.mxu0 0.0
  %3839 = vmatpush1.msra.mxu0 %v3463
  %3840 = vmatprep.subr.mxu0 0.0
  %3841 = vmatpush1.msra.mxu0 0.0
  %3842 = vmatprep.subr.mxu0 0.0
  %3843 = vmatpush1.msra.mxu0 0.0
  %3844 = vmatprep.subr.mxu0 0.0
  %3845 = vmatpush1.msra.mxu0 0.0
  %3846 = vmatprep.subr.mxu0 0.0
  %3847 = vmatpush1.msra.mxu0 0.0
  %3848 = vmatprep.subr.mxu0 0.0
  %3849 = vmatpush1.msra.mxu0 0.0
  %3850 = vmatprep.subr.mxu0 0.0
  %3851 = vmatpush1.msra.mxu0 0.0
  %3852 = vmatprep.subr.mxu0 0.0
  %3853 = vmatpush1.msra.mxu0 0.0
  %3854 = vmatprep.subr.mxu0 0.0
  %3855 = vmatpush1.msra.mxu0 0.0
  %3856 = vmatprep.subr.mxu0 0.0
  %3857 = vmatpush1.msra.mxu0 0.0
  %3858 = vmatprep.subr.mxu0 0.0
  %3859 = vmatpush1.msra.mxu0 0.0
  %3860 = vmatprep.subr.mxu0 0.0
  %3861 = vmatpush1.msra.mxu0 0.0
  %3862 = vmatprep.subr.mxu0 0.0
  %3863 = vmatpush1.msra.mxu0 0.0
  %3864 = vmatprep.subr.mxu0 0.0
  %3865 = vmatpush1.msra.mxu0 0.0
  %3866 = vmatprep.subr.mxu0 0.0
  %3867 = vmatpush1.msra.mxu0 0.0
  %3868 = vmatprep.subr.mxu0 0.0
  %3869 = vmatpush1.msra.mxu0 0.0
  %3870 = vmatprep.subr.mxu0 0.0
  %3871 = vmatpush1.msra.mxu0 0.0
  %3872 = vmatprep.mubr.f32.mxu0 0.0
  %3873 = vmatmul.mubr.f32.gmra.mrb[0].mxu0 %v3730
  %v3874 = vpop.f32.mrb[0].mxu0
  %v3875 = vadd.f32 0.0, %v3874
  %v3876 = vpop.f32.mrb[0].mxu0
  %3877 = vmatprep.mubr.f32.mxu0 0.0
  %3878 = vmatmul.mubr.f32.gmra.mrb[0].mxu0 %v3735
  %v3879 = vpop.f32.mrb[0].mxu0
  %v3880 = vadd.f32 0.0, %v3879
  %v3881 = vpop.f32.mrb[0].mxu0
  %3882 = vmatprep.mubr.f32.mxu0 0.0
  %3883 = vmatmul.mubr.f32.gmra.mrb[0].mxu0 %v3740
  %v3884 = vpop.f32.mrb[0].mxu0
  %v3885 = vadd.f32 0.0, %v3884
  %v3886 = vpop.f32.mrb[0].mxu0
  %3887 = vmatprep.mubr.f32.mxu0 0.0
  %3888 = vmatmul.mubr.f32.gmra.mrb[0].mxu0 %v3745
  %v3889 = vpop.f32.mrb[0].mxu0
  %v3890 = vadd.f32 0.0, %v3889
  %v3891 = vpop.f32.mrb[0].mxu0
  %3892 = vmatprep.mubr.f32.mxu0 0.0
  %3893 = vmatmul.mubr.f32.gmra.mrb[0].mxu0 %v3750
  %v3894 = vpop.f32.mrb[0].mxu0
  %v3895 = vadd.f32 0.0, %v3894
  %v3896 = vpop.f32.mrb[0].mxu0
  %3897 = vmatprep.mubr.f32.mxu0 0.0
  %3898 = vmatmul.mubr.f32.gmra.mrb[0].mxu0 %v3755
  %v3899 = vpop.f32.mrb[0].mxu0
  %v3900 = vadd.f32 0.0, %v3899
  %v3901 = vpop.f32.mrb[0].mxu0
  %3902 = vmatprep.mubr.f32.mxu0 0.0
  %3903 = vmatmul.mubr.f32.gmra.mrb[0].mxu0 %v3760
  %v3904 = vpop.f32.mrb[0].mxu0
  %v3905 = vadd.f32 0.0, %v3904
  %v3906 = vpop.f32.mrb[0].mxu0
  %3907 = vmatprep.mubr.f32.mxu0 0.0
  %3908 = vmatmul.mubr.f32.gmra.mrb[0].mxu0 %v3765
  %v3909 = vpop.f32.mrb[0].mxu0
  %v3910 = vadd.f32 0.0, %v3909
  %v3911 = vpop.f32.mrb[0].mxu0
  %3912 = vmatprep.mubr.f32.mxu0 0.0
  %3913 = vmatmul.mubr.f32.gmra.mrb[0].mxu0 %v3770
  %v3914 = vpop.f32.mrb[0].mxu0
  %v3915 = vadd.f32 0.0, %v3914
  %v3916 = vpop.f32.mrb[0].mxu0
  %3917 = vmatprep.mubr.f32.mxu0 0.0
  %3918 = vmatmul.mubr.f32.gmra.mrb[0].mxu0 %v3775
  %v3919 = vpop.f32.mrb[0].mxu0
  %v3920 = vadd.f32 0.0, %v3919
  %v3921 = vpop.f32.mrb[0].mxu0
  %3922 = vmatprep.mubr.f32.mxu0 0.0
  %3923 = vmatmul.mubr.f32.gmra.mrb[0].mxu0 %v3780
  %v3924 = vpop.f32.mrb[0].mxu0
  %v3925 = vadd.f32 0.0, %v3924
  %v3926 = vpop.f32.mrb[0].mxu0
  %3927 = vmatprep.mubr.f32.mxu0 0.0
  %3928 = vmatmul.mubr.f32.gmra.mrb[0].mxu0 %v3785
  %v3929 = vpop.f32.mrb[0].mxu0
  %v3930 = vadd.f32 0.0, %v3929
  %v3931 = vpop.f32.mrb[0].mxu0
  %3932 = vmatprep.mubr.f32.mxu0 0.0
  %3933 = vmatmul.mubr.f32.gmra.mrb[0].mxu0 %v3790
  %v3934 = vpop.f32.mrb[0].mxu0
  %v3935 = vadd.f32 0.0, %v3934
  %v3936 = vpop.f32.mrb[0].mxu0
  %3937 = vmatprep.mubr.f32.mxu0 0.0
  %3938 = vmatmul.mubr.f32.gmra.mrb[0].mxu0 %v3795
  %v3939 = vpop.f32.mrb[0].mxu0
  %v3940 = vadd.f32 0.0, %v3939
  %v3941 = vpop.f32.mrb[0].mxu0
  %3942 = vmatprep.mubr.f32.mxu0 0.0
  %3943 = vmatmul.mubr.f32.gmra.mrb[0].mxu0 %v3800
  %v3944 = vpop.f32.mrb[0].mxu0
  %v3945 = vadd.f32 0.0, %v3944
  %v3946 = vpop.f32.mrb[0].mxu0
  %3947 = vmatprep.mubr.f32.mxu0 0.0
  %3948 = vmatmul.mubr.f32.gmra.mrb[0].mxu0 %v3805
  %v3949 = vpop.f32.mrb[0].mxu0
  %v3950 = vadd.f32 0.0, %v3949
  %v3951 = vpop.f32.mrb[0].mxu0
  %3952 = vdwg.mxu0
  %3953 = vmatprep.subr.mxu0 0.0
  %3954 = vmatpush1.msra.mxu0 %v3432
  %3955 = vmatprep.subr.mxu0 0.0
  %3956 = vmatpush1.msra.mxu0 %v3433
  %3957 = vmatprep.subr.mxu0 0.0
  %3958 = vmatpush1.msra.mxu0 %v3434
  %3959 = vmatprep.subr.mxu0 0.0
  %3960 = vmatpush1.msra.mxu0 %v3435
  %3961 = vmatprep.subr.mxu0 0.0
  %3962 = vmatpush1.msra.mxu0 %v3436
  %3963 = vmatprep.subr.mxu0 0.0
  %3964 = vmatpush1.msra.mxu0 %v3437
  %3965 = vmatprep.subr.mxu0 0.0
  %3966 = vmatpush1.msra.mxu0 %v3438
  %3967 = vmatprep.subr.mxu0 0.0
  %3968 = vmatpush1.msra.mxu0 %v3439
  %3969 = vmatprep.subr.mxu0 0.0
  %3970 = vmatpush1.msra.mxu0 %v3440
  %3971 = vmatprep.subr.mxu0 0.0
  %3972 = vmatpush1.msra.mxu0 %v3441
  %3973 = vmatprep.subr.mxu0 0.0
  %3974 = vmatpush1.msra.mxu0 %v3442
  %3975 = vmatprep.subr.mxu0 0.0
  %3976 = vmatpush1.msra.mxu0 %v3443
  %3977 = vmatprep.subr.mxu0 0.0
  %3978 = vmatpush1.msra.mxu0 %v3444
  %3979 = vmatprep.subr.mxu0 0.0
  %3980 = vmatpush1.msra.mxu0 %v3445
  %3981 = vmatprep.subr.mxu0 0.0
  %3982 = vmatpush1.msra.mxu0 %v3446
  %3983 = vmatprep.subr.mxu0 0.0
  %3984 = vmatpush1.msra.mxu0 %v3447
  %3985 = vmatprep.subr.mxu0 0.0
  %3986 = vmatpush1.msra.mxu0 0.0
  %3987 = vmatprep.subr.mxu0 0.0
  %3988 = vmatpush1.msra.mxu0 0.0
  %3989 = vmatprep.subr.mxu0 0.0
  %3990 = vmatpush1.msra.mxu0 0.0
  %3991 = vmatprep.subr.mxu0 0.0
  %3992 = vmatpush1.msra.mxu0 0.0
  %3993 = vmatprep.subr.mxu0 0.0
  %3994 = vmatpush1.msra.mxu0 0.0
  %3995 = vmatprep.subr.mxu0 0.0
  %3996 = vmatpush1.msra.mxu0 0.0
  %3997 = vmatprep.subr.mxu0 0.0
  %3998 = vmatpush1.msra.mxu0 0.0
  %3999 = vmatprep.subr.mxu0 0.0
  %4000 = vmatpush1.msra.mxu0 0.0
  %4001 = vmatprep.subr.mxu0 0.0
  %4002 = vmatpush1.msra.mxu0 0.0
  %4003 = vmatprep.subr.mxu0 0.0
  %4004 = vmatpush1.msra.mxu0 0.0
  %4005 = vmatprep.subr.mxu0 0.0
  %4006 = vmatpush1.msra.mxu0 0.0
  %4007 = vmatprep.subr.mxu0 0.0
  %4008 = vmatpush1.msra.mxu0 0.0
  %4009 = vmatprep.subr.mxu0 0.0
  %4010 = vmatpush1.msra.mxu0 0.0
  %4011 = vmatprep.subr.mxu0 0.0
  %4012 = vmatpush1.msra.mxu0 0.0
  %4013 = vmatprep.subr.mxu0 0.0
  %4014 = vmatpush1.msra.mxu0 0.0
  %4015 = vmatprep.subr.mxu0 0.0
  %4016 = vmatpush1.msra.mxu0 0.0
  %4017 = vmatprep.mubr.f32.mxu0 0.0
  %4018 = vmatmul.mubr.f32.gmra.mrb[0].mxu0 %v3730
  %v4019 = vpop.f32.mrb[0].mxu0
  %v4020 = vadd.f32 0.0, %v4019
  %v4021 = vpop.f32.mrb[0].mxu0
  %4022 = vmatprep.mubr.f32.mxu0 0.0
  %4023 = vmatmul.mubr.f32.gmra.mrb[0].mxu0 %v3735
  %v4024 = vpop.f32.mrb[0].mxu0
  %v4025 = vadd.f32 0.0, %v4024
  %v4026 = vpop.f32.mrb[0].mxu0
  %4027 = vmatprep.mubr.f32.mxu0 0.0
  %4028 = vmatmul.mubr.f32.gmra.mrb[0].mxu0 %v3740
  %v4029 = vpop.f32.mrb[0].mxu0
  %v4030 = vadd.f32 0.0, %v4029
  %v4031 = vpop.f32.mrb[0].mxu0
  %4032 = vmatprep.mubr.f32.mxu0 0.0
  %4033 = vmatmul.mubr.f32.gmra.mrb[0].mxu0 %v3745
  %v4034 = vpop.f32.mrb[0].mxu0
  %v4035 = vadd.f32 0.0, %v4034
  %v4036 = vpop.f32.mrb[0].mxu0
  %4037 = vmatprep.mubr.f32.mxu0 0.0
  %4038 = vmatmul.mubr.f32.gmra.mrb[0].mxu0 %v3750
  %v4039 = vpop.f32.mrb[0].mxu0
  %v4040 = vadd.f32 0.0, %v4039
  %v4041 = vpop.f32.mrb[0].mxu0
  %4042 = vmatprep.mubr.f32.mxu0 0.0
  %4043 = vmatmul.mubr.f32.gmra.mrb[0].mxu0 %v3755
  %v4044 = vpop.f32.mrb[0].mxu0
  %v4045 = vadd.f32 0.0, %v4044
  %v4046 = vpop.f32.mrb[0].mxu0
  %4047 = vmatprep.mubr.f32.mxu0 0.0
  %4048 = vmatmul.mubr.f32.gmra.mrb[0].mxu0 %v3760
  %v4049 = vpop.f32.mrb[0].mxu0
  %v4050 = vadd.f32 0.0, %v4049
  %v4051 = vpop.f32.mrb[0].mxu0
  %4052 = vmatprep.mubr.f32.mxu0 0.0
  %4053 = vmatmul.mubr.f32.gmra.mrb[0].mxu0 %v3765
  %v4054 = vpop.f32.mrb[0].mxu0
  %v4055 = vadd.f32 0.0, %v4054
  %v4056 = vpop.f32.mrb[0].mxu0
  %4057 = vmatprep.mubr.f32.mxu0 0.0
  %4058 = vmatmul.mubr.f32.gmra.mrb[0].mxu0 %v3770
  %v4059 = vpop.f32.mrb[0].mxu0
  %v4060 = vadd.f32 0.0, %v4059
  %v4061 = vpop.f32.mrb[0].mxu0
  %4062 = vmatprep.mubr.f32.mxu0 0.0
  %4063 = vmatmul.mubr.f32.gmra.mrb[0].mxu0 %v3775
  %v4064 = vpop.f32.mrb[0].mxu0
  %v4065 = vadd.f32 0.0, %v4064
  %v4066 = vpop.f32.mrb[0].mxu0
  %4067 = vmatprep.mubr.f32.mxu0 0.0
  %4068 = vmatmul.mubr.f32.gmra.mrb[0].mxu0 %v3780
  %v4069 = vpop.f32.mrb[0].mxu0
  %v4070 = vadd.f32 0.0, %v4069
  %v4071 = vpop.f32.mrb[0].mxu0
  %4072 = vmatprep.mubr.f32.mxu0 0.0
  %4073 = vmatmul.mubr.f32.gmra.mrb[0].mxu0 %v3785
  %v4074 = vpop.f32.mrb[0].mxu0
  %v4075 = vadd.f32 0.0, %v4074
  %v4076 = vpop.f32.mrb[0].mxu0
  %4077 = vmatprep.mubr.f32.mxu0 0.0
  %4078 = vmatmul.mubr.f32.gmra.mrb[0].mxu0 %v3790
  %v4079 = vpop.f32.mrb[0].mxu0
  %v4080 = vadd.f32 0.0, %v4079
  %v4081 = vpop.f32.mrb[0].mxu0
  %4082 = vmatprep.mubr.f32.mxu0 0.0
  %4083 = vmatmul.mubr.f32.gmra.mrb[0].mxu0 %v3795
  %v4084 = vpop.f32.mrb[0].mxu0
  %v4085 = vadd.f32 0.0, %v4084
  %v4086 = vpop.f32.mrb[0].mxu0
  %4087 = vmatprep.mubr.f32.mxu0 0.0
  %4088 = vmatmul.mubr.f32.gmra.mrb[0].mxu0 %v3800
  %v4089 = vpop.f32.mrb[0].mxu0
  %v4090 = vadd.f32 0.0, %v4089
  %v4091 = vpop.f32.mrb[0].mxu0
  %4092 = vmatprep.mubr.f32.mxu0 0.0
  %4093 = vmatmul.mubr.f32.gmra.mrb[0].mxu0 %v3805
  %v4094 = vpop.f32.mrb[0].mxu0
  %v4095 = vadd.f32 0.0, %v4094
  %v4096 = vpop.f32.mrb[0].mxu0
  %4097 = vdwg.mxu0
  %4098 = vxpose.xlu0.b32.start [1/16] %v4020, 128
  %4099 = vxpose.xlu0.b32.cont [2/16] %v4025, 128
  %4100 = vxpose.xlu0.b32.cont [3/16] %v4030, 128
  %4101 = vxpose.xlu0.b32.cont [4/16] %v4035, 128
  %4102 = vxpose.xlu0.b32.cont [5/16] %v4040, 128
  %4103 = vxpose.xlu0.b32.cont [6/16] %v4045, 128
  %4104 = vxpose.xlu0.b32.cont [7/16] %v4050, 128
  %4105 = vxpose.xlu0.b32.cont [8/16] %v4055, 128
  %4106 = vxpose.xlu0.b32.cont [9/16] %v4060, 128
  %4107 = vxpose.xlu0.b32.cont [10/16] %v4065, 128
  %4108 = vxpose.xlu0.b32.cont [11/16] %v4070, 128
  %4109 = vxpose.xlu0.b32.cont [12/16] %v4075, 128
  %4110 = vxpose.xlu0.b32.cont [13/16] %v4080, 128
  %4111 = vxpose.xlu0.b32.cont [14/16] %v4085, 128
  %4112 = vxpose.xlu0.b32.cont [15/16] %v4090, 128
  %4113 = vxpose.xlu0.b32.end [16/16] %v4095, 128
  %v4114 = vpop.trf.xlu0
  %v4115 = vpop.trf.xlu0
  %v4116 = vpop.trf.xlu0
  %v4117 = vpop.trf.xlu0
  %v4118 = vpop.trf.xlu0
  %v4119 = vpop.trf.xlu0
  %v4120 = vpop.trf.xlu0
  %v4121 = vpop.trf.xlu0
  %v4122 = vpop.trf.xlu0
  %v4123 = vpop.trf.xlu0
  %v4124 = vpop.trf.xlu0
  %v4125 = vpop.trf.xlu0
  %v4126 = vpop.trf.xlu0
  %v4127 = vpop.trf.xlu0
  %v4128 = vpop.trf.xlu0
  %v4129 = vpop.trf.xlu0
  %4131 = vset.pattern.permute.xlu0 0
  %4132 = vperm.xlu0 %4131, %v3875
  %v4133 = vpop.permute.xlu0 %4132
  %4136 = vset.pattern.permute.xlu0 0
  %4137 = vperm.xlu0 %4136, %v3880
  %v4138 = vpop.permute.xlu0 %4137
  %4141 = vset.pattern.permute.xlu0 0
  %4142 = vperm.xlu0 %4141, %v3885
  %v4143 = vpop.permute.xlu0 %4142
  %4146 = vset.pattern.permute.xlu0 0
  %4147 = vperm.xlu0 %4146, %v3890
  %v4148 = vpop.permute.xlu0 %4147
  %4151 = vset.pattern.permute.xlu0 0
  %4152 = vperm.xlu0 %4151, %v3895
  %v4153 = vpop.permute.xlu0 %4152
  %4156 = vset.pattern.permute.xlu0 0
  %4157 = vperm.xlu0 %4156, %v3900
  %v4158 = vpop.permute.xlu0 %4157
  %4161 = vset.pattern.permute.xlu0 0
  %4162 = vperm.xlu0 %4161, %v3905
  %v4163 = vpop.permute.xlu0 %4162
  %4166 = vset.pattern.permute.xlu0 0
  %4167 = vperm.xlu0 %4166, %v3910
  %v4168 = vpop.permute.xlu0 %4167
  %4171 = vset.pattern.permute.xlu0 0
  %4172 = vperm.xlu0 %4171, %v3915
  %v4173 = vpop.permute.xlu0 %4172
  %4176 = vset.pattern.permute.xlu0 0
  %4177 = vperm.xlu0 %4176, %v3920
  %v4178 = vpop.permute.xlu0 %4177
  %4181 = vset.pattern.permute.xlu0 0
  %4182 = vperm.xlu0 %4181, %v3925
  %v4183 = vpop.permute.xlu0 %4182
  %4186 = vset.pattern.permute.xlu0 0
  %4187 = vperm.xlu0 %4186, %v3930
  %v4188 = vpop.permute.xlu0 %4187
  %4191 = vset.pattern.permute.xlu0 0
  %4192 = vperm.xlu0 %4191, %v3935
  %v4193 = vpop.permute.xlu0 %4192
  %4196 = vset.pattern.permute.xlu0 0
  %4197 = vperm.xlu0 %4196, %v3940
  %v4198 = vpop.permute.xlu0 %4197
  %4201 = vset.pattern.permute.xlu0 0
  %4202 = vperm.xlu0 %4201, %v3945
  %v4203 = vpop.permute.xlu0 %4202
  %4206 = vset.pattern.permute.xlu0 0
  %4207 = vperm.xlu0 %4206, %v3950
  %v4208 = vpop.permute.xlu0 %4207
  %v4210 = vlaneseq
  %v4211 = vshrl.u32 %v4210, 7
  %v4212 = vsub.s32 0, %v4211
  %v4213 = vrot.slane %v4114, %v4212
  %v4214 = vadd.f32 %v4133, %v4213
  %v4215 = vadd.f32 %v4138, %v4213
  %v4216 = vadd.f32 %v4143, %v4213
  %v4217 = vadd.f32 %v4148, %v4213
  %v4218 = vadd.f32 %v4153, %v4213
  %v4219 = vadd.f32 %v4158, %v4213
  %v4220 = vadd.f32 %v4163, %v4213
  %v4221 = vadd.f32 %v4168, %v4213
  %v4222 = vadd.f32 %v4173, %v4213
  %v4223 = vadd.f32 %v4178, %v4213
  %v4224 = vadd.f32 %v4183, %v4213
  %v4225 = vadd.f32 %v4188, %v4213
  %v4226 = vadd.f32 %v4193, %v4213
  %v4227 = vadd.f32 %v4198, %v4213
  %v4228 = vadd.f32 %v4203, %v4213
  %v4229 = vadd.f32 %v4208, %v4213
  %v4230 = vmul.f32 %v4214, 0.2
  %v4231 = vmul.f32 %v4215, 0.2
  %v4232 = vmul.f32 %v4216, 0.2
  %v4233 = vmul.f32 %v4217, 0.2
  %v4234 = vmul.f32 %v4218, 0.2
  %v4235 = vmul.f32 %v4219, 0.2
  %v4236 = vmul.f32 %v4220, 0.2
  %v4237 = vmul.f32 %v4221, 0.2
  %v4238 = vmul.f32 %v4222, 0.2
  %v4239 = vmul.f32 %v4223, 0.2
  %v4240 = vmul.f32 %v4224, 0.2
  %v4241 = vmul.f32 %v4225, 0.2
  %v4242 = vmul.f32 %v4226, 0.2
  %v4243 = vmul.f32 %v4227, 0.2
  %v4244 = vmul.f32 %v4228, 0.2
  %v4245 = vmul.f32 %v4229, 0.2
  %v4246 = vmax.f32 %v4214, %v4230
  %v4247 = vmax.f32 %v4215, %v4231
  %v4248 = vmax.f32 %v4216, %v4232
  %v4249 = vmax.f32 %v4217, %v4233
  %v4250 = vmax.f32 %v4218, %v4234
  %v4251 = vmax.f32 %v4219, %v4235
  %v4252 = vmax.f32 %v4220, %v4236
  %v4253 = vmax.f32 %v4221, %v4237
  %v4254 = vmax.f32 %v4222, %v4238
  %v4255 = vmax.f32 %v4223, %v4239
  %v4256 = vmax.f32 %v4224, %v4240
  %v4257 = vmax.f32 %v4225, %v4241
  %v4258 = vmax.f32 %v4226, %v4242
  %v4259 = vmax.f32 %v4227, %v4243
  %v4260 = vmax.f32 %v4228, %v4244
  %v4261 = vmax.f32 %v4229, %v4245
  %v4262 = vadd.f32 %v4246, %v107
  %v4263 = vadd.f32 %v4247, %v108
  %v4264 = vadd.f32 %v4248, %v109
  %v4265 = vadd.f32 %v4249, %v110
  %v4266 = vadd.f32 %v4250, %v111
  %v4267 = vadd.f32 %v4251, %v112
  %v4268 = vadd.f32 %v4252, %v113
  %v4269 = vadd.f32 %v4253, %v114
  %v4270 = vadd.f32 %v4254, %v115
  %v4271 = vadd.f32 %v4255, %v116
  %v4272 = vadd.f32 %v4256, %v117
  %v4273 = vadd.f32 %v4257, %v118
  %v4274 = vadd.f32 %v4258, %v119
  %v4275 = vadd.f32 %v4259, %v120
  %v4276 = vadd.f32 %v4260, %v121
  %v4277 = vadd.f32 %v4261, %v122
  %4278 = vmax.xlane.f32.xlu0 %v4262
  %v4279 = vpop.xlane.xlu0 %4278
  %4280 = vmax.xlane.f32.xlu0 %v4263
  %v4281 = vpop.xlane.xlu0 %4280
  %4282 = vmax.xlane.f32.xlu0 %v4264
  %v4283 = vpop.xlane.xlu0 %4282
  %4284 = vmax.xlane.f32.xlu0 %v4265
  %v4285 = vpop.xlane.xlu0 %4284
  %4286 = vmax.xlane.f32.xlu0 %v4266
  %v4287 = vpop.xlane.xlu0 %4286
  %4288 = vmax.xlane.f32.xlu0 %v4267
  %v4289 = vpop.xlane.xlu0 %4288
  %4290 = vmax.xlane.f32.xlu0 %v4268
  %v4291 = vpop.xlane.xlu0 %4290
  %4292 = vmax.xlane.f32.xlu0 %v4269
  %v4293 = vpop.xlane.xlu0 %4292
  %4294 = vmax.xlane.f32.xlu0 %v4270
  %v4295 = vpop.xlane.xlu0 %4294
  %4296 = vmax.xlane.f32.xlu0 %v4271
  %v4297 = vpop.xlane.xlu0 %4296
  %4298 = vmax.xlane.f32.xlu0 %v4272
  %v4299 = vpop.xlane.xlu0 %4298
  %4300 = vmax.xlane.f32.xlu0 %v4273
  %v4301 = vpop.xlane.xlu0 %4300
  %4302 = vmax.xlane.f32.xlu0 %v4274
  %v4303 = vpop.xlane.xlu0 %4302
  %4304 = vmax.xlane.f32.xlu0 %v4275
  %v4305 = vpop.xlane.xlu0 %4304
  %4306 = vmax.xlane.f32.xlu0 %v4276
  %v4307 = vpop.xlane.xlu0 %4306
  %4308 = vmax.xlane.f32.xlu0 %v4277
  %v4309 = vpop.xlane.xlu0 %4308
  %v4310 = vsub.f32 %v4262, %v4279
  %v4311 = vsub.f32 %v4263, %v4281
  %v4312 = vsub.f32 %v4264, %v4283
  %v4313 = vsub.f32 %v4265, %v4285
  %v4314 = vsub.f32 %v4266, %v4287
  %v4315 = vsub.f32 %v4267, %v4289
  %v4316 = vsub.f32 %v4268, %v4291
  %v4317 = vsub.f32 %v4269, %v4293
  %v4318 = vsub.f32 %v4270, %v4295
  %v4319 = vsub.f32 %v4271, %v4297
  %v4320 = vsub.f32 %v4272, %v4299
  %v4321 = vsub.f32 %v4273, %v4301
  %v4322 = vsub.f32 %v4274, %v4303
  %v4323 = vsub.f32 %v4275, %v4305
  %v4324 = vsub.f32 %v4276, %v4307
  %v4325 = vsub.f32 %v4277, %v4309
  %v4326 = vmul.f32 %v4310, 1.442695
  %v4327 = vpow.pop %v4326
  %v4328 = vmul.f32 %v4311, 1.442695
  %v4329 = vpow.pop %v4328
  %v4330 = vmul.f32 %v4312, 1.442695
  %v4331 = vpow.pop %v4330
  %v4332 = vmul.f32 %v4313, 1.442695
  %v4333 = vpow.pop %v4332
  %v4334 = vmul.f32 %v4314, 1.442695
  %v4335 = vpow.pop %v4334
  %v4336 = vmul.f32 %v4315, 1.442695
  %v4337 = vpow.pop %v4336
  %v4338 = vmul.f32 %v4316, 1.442695
  %v4339 = vpow.pop %v4338
  %v4340 = vmul.f32 %v4317, 1.442695
  %v4341 = vpow.pop %v4340
  %v4342 = vmul.f32 %v4318, 1.442695
  %v4343 = vpow.pop %v4342
  %v4344 = vmul.f32 %v4319, 1.442695
  %v4345 = vpow.pop %v4344
  %v4346 = vmul.f32 %v4320, 1.442695
  %v4347 = vpow.pop %v4346
  %v4348 = vmul.f32 %v4321, 1.442695
  %v4349 = vpow.pop %v4348
  %v4350 = vmul.f32 %v4322, 1.442695
  %v4351 = vpow.pop %v4350
  %v4352 = vmul.f32 %v4323, 1.442695
  %v4353 = vpow.pop %v4352
  %v4354 = vmul.f32 %v4324, 1.442695
  %v4355 = vpow.pop %v4354
  %v4356 = vmul.f32 %v4325, 1.442695
  %v4357 = vpow.pop %v4356
  %v4358 = vmul.f32 %v4327, %v75
  %v4359 = vmul.f32 %v4329, %v76
  %v4360 = vmul.f32 %v4331, %v77
  %v4361 = vmul.f32 %v4333, %v78
  %v4362 = vmul.f32 %v4335, %v79
  %v4363 = vmul.f32 %v4337, %v80
  %v4364 = vmul.f32 %v4339, %v81
  %v4365 = vmul.f32 %v4341, %v82
  %v4366 = vmul.f32 %v4343, %v83
  %v4367 = vmul.f32 %v4345, %v84
  %v4368 = vmul.f32 %v4347, %v85
  %v4369 = vmul.f32 %v4349, %v86
  %v4370 = vmul.f32 %v4351, %v87
  %v4371 = vmul.f32 %v4353, %v88
  %v4372 = vmul.f32 %v4355, %v89
  %v4373 = vmul.f32 %v4357, %v90
  %4374 = vadd.xlane.f32.xlu0 %v4358
  %v4375 = vpop.xlane.xlu0 %4374
  %4376 = vadd.xlane.f32.xlu0 %v4359
  %v4377 = vpop.xlane.xlu0 %4376
  %4378 = vadd.xlane.f32.xlu0 %v4360
  %v4379 = vpop.xlane.xlu0 %4378
  %4380 = vadd.xlane.f32.xlu0 %v4361
  %v4381 = vpop.xlane.xlu0 %4380
  %4382 = vadd.xlane.f32.xlu0 %v4362
  %v4383 = vpop.xlane.xlu0 %4382
  %4384 = vadd.xlane.f32.xlu0 %v4363
  %v4385 = vpop.xlane.xlu0 %4384
  %4386 = vadd.xlane.f32.xlu0 %v4364
  %v4387 = vpop.xlane.xlu0 %4386
  %4388 = vadd.xlane.f32.xlu0 %v4365
  %v4389 = vpop.xlane.xlu0 %4388
  %4390 = vadd.xlane.f32.xlu0 %v4366
  %v4391 = vpop.xlane.xlu0 %4390
  %4392 = vadd.xlane.f32.xlu0 %v4367
  %v4393 = vpop.xlane.xlu0 %4392
  %4394 = vadd.xlane.f32.xlu0 %v4368
  %v4395 = vpop.xlane.xlu0 %4394
  %4396 = vadd.xlane.f32.xlu0 %v4369
  %v4397 = vpop.xlane.xlu0 %4396
  %4398 = vadd.xlane.f32.xlu0 %v4370
  %v4399 = vpop.xlane.xlu0 %4398
  %4400 = vadd.xlane.f32.xlu0 %v4371
  %v4401 = vpop.xlane.xlu0 %4400
  %4402 = vadd.xlane.f32.xlu0 %v4372
  %v4403 = vpop.xlane.xlu0 %4402
  %4404 = vadd.xlane.f32.xlu0 %v4373
  %v4405 = vpop.xlane.xlu0 %4404
  %4406 = vmatprep.subr.mxu0 0.0
  %4407 = vmatpush1.msra.mxu0 %v3730
  %4408 = vmatprep.subr.mxu0 0.0
  %4409 = vmatpush1.msra.mxu0 %v3735
  %4410 = vmatprep.subr.mxu0 0.0
  %4411 = vmatpush1.msra.mxu0 %v3740
  %4412 = vmatprep.subr.mxu0 0.0
  %4413 = vmatpush1.msra.mxu0 %v3745
  %4414 = vmatprep.subr.mxu0 0.0
  %4415 = vmatpush1.msra.mxu0 %v3750
  %4416 = vmatprep.subr.mxu0 0.0
  %4417 = vmatpush1.msra.mxu0 %v3755
  %4418 = vmatprep.subr.mxu0 0.0
  %4419 = vmatpush1.msra.mxu0 %v3760
  %4420 = vmatprep.subr.mxu0 0.0
  %4421 = vmatpush1.msra.mxu0 %v3765
  %4422 = vmatprep.subr.mxu0 0.0
  %4423 = vmatpush1.msra.mxu0 %v3770
  %4424 = vmatprep.subr.mxu0 0.0
  %4425 = vmatpush1.msra.mxu0 %v3775
  %4426 = vmatprep.subr.mxu0 0.0
  %4427 = vmatpush1.msra.mxu0 %v3780
  %4428 = vmatprep.subr.mxu0 0.0
  %4429 = vmatpush1.msra.mxu0 %v3785
  %4430 = vmatprep.subr.mxu0 0.0
  %4431 = vmatpush1.msra.mxu0 %v3790
  %4432 = vmatprep.subr.mxu0 0.0
  %4433 = vmatpush1.msra.mxu0 %v3795
  %4434 = vmatprep.subr.mxu0 0.0
  %4435 = vmatpush1.msra.mxu0 %v3800
  %4436 = vmatprep.subr.mxu0 0.0
  %4437 = vmatpush1.msra.mxu0 %v3805
  %4438 = vmatprep.subr.mxu0 0.0
  %4439 = vmatpush1.msra.mxu0 0.0
  %4440 = vmatprep.subr.mxu0 0.0
  %4441 = vmatpush1.msra.mxu0 0.0
  %4442 = vmatprep.subr.mxu0 0.0
  %4443 = vmatpush1.msra.mxu0 0.0
  %4444 = vmatprep.subr.mxu0 0.0
  %4445 = vmatpush1.msra.mxu0 0.0
  %4446 = vmatprep.subr.mxu0 0.0
  %4447 = vmatpush1.msra.mxu0 0.0
  %4448 = vmatprep.subr.mxu0 0.0
  %4449 = vmatpush1.msra.mxu0 0.0
  %4450 = vmatprep.subr.mxu0 0.0
  %4451 = vmatpush1.msra.mxu0 0.0
  %4452 = vmatprep.subr.mxu0 0.0
  %4453 = vmatpush1.msra.mxu0 0.0
  %4454 = vmatprep.subr.mxu0 0.0
  %4455 = vmatpush1.msra.mxu0 0.0
  %4456 = vmatprep.subr.mxu0 0.0
  %4457 = vmatpush1.msra.mxu0 0.0
  %4458 = vmatprep.subr.mxu0 0.0
  %4459 = vmatpush1.msra.mxu0 0.0
  %4460 = vmatprep.subr.mxu0 0.0
  %4461 = vmatpush1.msra.mxu0 0.0
  %4462 = vmatprep.subr.mxu0 0.0
  %4463 = vmatpush1.msra.mxu0 0.0
  %4464 = vmatprep.subr.mxu0 0.0
  %4465 = vmatpush1.msra.mxu0 0.0
  %4466 = vmatprep.subr.mxu0 0.0
  %4467 = vmatpush1.msra.mxu0 0.0
  %4468 = vmatprep.subr.mxu0 0.0
  %4469 = vmatpush1.msra.mxu0 0.0
  %4470 = vmatprep.mubr.f32.mxu0 0.0
  %4471 = vmatmul.mubr.f32.gmra.mrb[0].mxu0 %v4358
  %v4472 = vpop.f32.mrb[0].mxu0
  %v4473 = vadd.f32 0.0, %v4472
  %v4474 = vpop.f32.mrb[0].mxu0
  %4475 = vmatprep.mubr.f32.mxu0 0.0
  %4476 = vmatmul.mubr.f32.gmra.mrb[0].mxu0 %v4359
  %v4477 = vpop.f32.mrb[0].mxu0
  %v4478 = vadd.f32 0.0, %v4477
  %v4479 = vpop.f32.mrb[0].mxu0
  %4480 = vmatprep.mubr.f32.mxu0 0.0
  %4481 = vmatmul.mubr.f32.gmra.mrb[0].mxu0 %v4360
  %v4482 = vpop.f32.mrb[0].mxu0
  %v4483 = vadd.f32 0.0, %v4482
  %v4484 = vpop.f32.mrb[0].mxu0
  %4485 = vmatprep.mubr.f32.mxu0 0.0
  %4486 = vmatmul.mubr.f32.gmra.mrb[0].mxu0 %v4361
  %v4487 = vpop.f32.mrb[0].mxu0
  %v4488 = vadd.f32 0.0, %v4487
  %v4489 = vpop.f32.mrb[0].mxu0
  %4490 = vmatprep.mubr.f32.mxu0 0.0
  %4491 = vmatmul.mubr.f32.gmra.mrb[0].mxu0 %v4362
  %v4492 = vpop.f32.mrb[0].mxu0
  %v4493 = vadd.f32 0.0, %v4492
  %v4494 = vpop.f32.mrb[0].mxu0
  %4495 = vmatprep.mubr.f32.mxu0 0.0
  %4496 = vmatmul.mubr.f32.gmra.mrb[0].mxu0 %v4363
  %v4497 = vpop.f32.mrb[0].mxu0
  %v4498 = vadd.f32 0.0, %v4497
  %v4499 = vpop.f32.mrb[0].mxu0
  %4500 = vmatprep.mubr.f32.mxu0 0.0
  %4501 = vmatmul.mubr.f32.gmra.mrb[0].mxu0 %v4364
  %v4502 = vpop.f32.mrb[0].mxu0
  %v4503 = vadd.f32 0.0, %v4502
  %v4504 = vpop.f32.mrb[0].mxu0
  %4505 = vmatprep.mubr.f32.mxu0 0.0
  %4506 = vmatmul.mubr.f32.gmra.mrb[0].mxu0 %v4365
  %v4507 = vpop.f32.mrb[0].mxu0
  %v4508 = vadd.f32 0.0, %v4507
  %v4509 = vpop.f32.mrb[0].mxu0
  %4510 = vmatprep.mubr.f32.mxu0 0.0
  %4511 = vmatmul.mubr.f32.gmra.mrb[0].mxu0 %v4366
  %v4512 = vpop.f32.mrb[0].mxu0
  %v4513 = vadd.f32 0.0, %v4512
  %v4514 = vpop.f32.mrb[0].mxu0
  %4515 = vmatprep.mubr.f32.mxu0 0.0
  %4516 = vmatmul.mubr.f32.gmra.mrb[0].mxu0 %v4367
  %v4517 = vpop.f32.mrb[0].mxu0
  %v4518 = vadd.f32 0.0, %v4517
  %v4519 = vpop.f32.mrb[0].mxu0
  %4520 = vmatprep.mubr.f32.mxu0 0.0
  %4521 = vmatmul.mubr.f32.gmra.mrb[0].mxu0 %v4368
  %v4522 = vpop.f32.mrb[0].mxu0
  %v4523 = vadd.f32 0.0, %v4522
  %v4524 = vpop.f32.mrb[0].mxu0
  %4525 = vmatprep.mubr.f32.mxu0 0.0
  %4526 = vmatmul.mubr.f32.gmra.mrb[0].mxu0 %v4369
  %v4527 = vpop.f32.mrb[0].mxu0
  %v4528 = vadd.f32 0.0, %v4527
  %v4529 = vpop.f32.mrb[0].mxu0
  %4530 = vmatprep.mubr.f32.mxu0 0.0
  %4531 = vmatmul.mubr.f32.gmra.mrb[0].mxu0 %v4370
  %v4532 = vpop.f32.mrb[0].mxu0
  %v4533 = vadd.f32 0.0, %v4532
  %v4534 = vpop.f32.mrb[0].mxu0
  %4535 = vmatprep.mubr.f32.mxu0 0.0
  %4536 = vmatmul.mubr.f32.gmra.mrb[0].mxu0 %v4371
  %v4537 = vpop.f32.mrb[0].mxu0
  %v4538 = vadd.f32 0.0, %v4537
  %v4539 = vpop.f32.mrb[0].mxu0
  %4540 = vmatprep.mubr.f32.mxu0 0.0
  %4541 = vmatmul.mubr.f32.gmra.mrb[0].mxu0 %v4372
  %v4542 = vpop.f32.mrb[0].mxu0
  %v4543 = vadd.f32 0.0, %v4542
  %v4544 = vpop.f32.mrb[0].mxu0
  %4545 = vmatprep.mubr.f32.mxu0 0.0
  %4546 = vmatmul.mubr.f32.gmra.mrb[0].mxu0 %v4373
  %v4547 = vpop.f32.mrb[0].mxu0
  %v4548 = vadd.f32 0.0, %v4547
  %v4549 = vpop.f32.mrb[0].mxu0
  %4550 = vdwg.mxu0
  %v4551 = vrcp.pop %v4375
  %v4552 = vrcp.pop %v4377
  %v4553 = vrcp.pop %v4379
  %v4554 = vrcp.pop %v4381
  %v4555 = vrcp.pop %v4383
  %v4556 = vrcp.pop %v4385
  %v4557 = vrcp.pop %v4387
  %v4558 = vrcp.pop %v4389
  %v4559 = vrcp.pop %v4391
  %v4560 = vrcp.pop %v4393
  %v4561 = vrcp.pop %v4395
  %v4562 = vrcp.pop %v4397
  %v4563 = vrcp.pop %v4399
  %v4564 = vrcp.pop %v4401
  %v4565 = vrcp.pop %v4403
  %v4566 = vrcp.pop %v4405
  %v4567 = vmul.f32 %v4473, %v4551
  %v4568 = vmul.f32 %v4478, %v4552
  %v4569 = vmul.f32 %v4483, %v4553
  %v4570 = vmul.f32 %v4488, %v4554
  %v4571 = vmul.f32 %v4493, %v4555
  %v4572 = vmul.f32 %v4498, %v4556
  %v4573 = vmul.f32 %v4503, %v4557
  %v4574 = vmul.f32 %v4508, %v4558
  %v4575 = vmul.f32 %v4513, %v4559
  %v4576 = vmul.f32 %v4518, %v4560
  %v4577 = vmul.f32 %v4523, %v4561
  %v4578 = vmul.f32 %v4528, %v4562
  %v4579 = vmul.f32 %v4533, %v4563
  %v4580 = vmul.f32 %v4538, %v4564
  %v4581 = vmul.f32 %v4543, %v4565
  %v4582 = vmul.f32 %v4548, %v4566
  %v4583 = vadd.f32 %v3585, %v4567
  %v4584 = vadd.f32 %v3590, %v4568
  %v4585 = vadd.f32 %v3595, %v4569
  %v4586 = vadd.f32 %v3600, %v4570
  %v4587 = vadd.f32 %v3605, %v4571
  %v4588 = vadd.f32 %v3610, %v4572
  %v4589 = vadd.f32 %v3615, %v4573
  %v4590 = vadd.f32 %v3620, %v4574
  %v4591 = vadd.f32 %v3625, %v4575
  %v4592 = vadd.f32 %v3630, %v4576
  %v4593 = vadd.f32 %v3635, %v4577
  %v4594 = vadd.f32 %v3640, %v4578
  %v4595 = vadd.f32 %v3645, %v4579
  %v4596 = vadd.f32 %v3650, %v4580
  %v4597 = vadd.f32 %v3655, %v4581
  %v4598 = vadd.f32 %v3660, %v4582
  %v4600 = vlaneseq
  %v4601 = vshrl.u32 %v4600, 7
  %v4602 = vsub.s32 0, %v4601
  %v4603 = vrot.slane %v3431, %v4602
  %v4605 = vadd.f32 %v4583, %v4603
  %v4606 = vadd.f32 %v4584, %v4603
  %v4607 = vadd.f32 %v4585, %v4603
  %v4608 = vadd.f32 %v4586, %v4603
  %v4609 = vadd.f32 %v4587, %v4603
  %v4610 = vadd.f32 %v4588, %v4603
  %v4611 = vadd.f32 %v4589, %v4603
  %v4612 = vadd.f32 %v4590, %v4603
  %v4613 = vadd.f32 %v4591, %v4603
  %v4614 = vadd.f32 %v4592, %v4603
  %v4615 = vadd.f32 %v4593, %v4603
  %v4616 = vadd.f32 %v4594, %v4603
  %v4617 = vadd.f32 %v4595, %v4603
  %v4618 = vadd.f32 %v4596, %v4603
  %v4619 = vadd.f32 %v4597, %v4603
  %v4620 = vadd.f32 %v4598, %v4603
  %v4621 = vmax.f32 %v4605, 0.0
  %v4622 = vmax.f32 %v4606, 0.0
  %v4623 = vmax.f32 %v4607, 0.0
  %v4624 = vmax.f32 %v4608, 0.0
  %v4625 = vmax.f32 %v4609, 0.0
  %v4626 = vmax.f32 %v4610, 0.0
  %v4627 = vmax.f32 %v4611, 0.0
  %v4628 = vmax.f32 %v4612, 0.0
  %v4629 = vmax.f32 %v4613, 0.0
  %v4630 = vmax.f32 %v4614, 0.0
  %v4631 = vmax.f32 %v4615, 0.0
  %v4632 = vmax.f32 %v4616, 0.0
  %v4633 = vmax.f32 %v4617, 0.0
  %v4634 = vmax.f32 %v4618, 0.0
  %v4635 = vmax.f32 %v4619, 0.0
  %v4636 = vmax.f32 %v4620, 0.0
  %4637 = vst [vmem:[%s18] sm:$0xff] %v4621
  %4638 = vst [vmem:[%s18 + $0x8] sm:$0xff] %v4622
  %4639 = vst [vmem:[%s18 + $0x10] sm:$0xff] %v4623
  %4640 = vst [vmem:[%s18 + $0x18] sm:$0xff] %v4624
  %4641 = vst [vmem:[%s18 + $0x20] sm:$0xff] %v4625
  %4642 = vst [vmem:[%s18 + $0x28] sm:$0xff] %v4626
  %4643 = vst [vmem:[%s18 + $0x30] sm:$0xff] %v4627
  %4644 = vst [vmem:[%s18 + $0x38] sm:$0xff] %v4628
  %4645 = vst [vmem:[%s18 + $0x40] sm:$0xff] %v4629
  %4646 = vst [vmem:[%s18 + $0x48] sm:$0xff] %v4630
  %4647 = vst [vmem:[%s18 + $0x50] sm:$0xff] %v4631
  %4648 = vst [vmem:[%s18 + $0x58] sm:$0xff] %v4632
  %4649 = vst [vmem:[%s18 + $0x60] sm:$0xff] %v4633
  %4650 = vst [vmem:[%s18 + $0x68] sm:$0xff] %v4634
  %4651 = vst [vmem:[%s18 + $0x70] sm:$0xff] %v4635
  %4652 = vst [vmem:[%s18 + $0x78] sm:$0xff] %v4636
  // Predicated region
  $region74: #{net_forward.1} parent=0 // pred_check
    _
  $region75: #{net_forward.1} parent=0 // pred_check_branch
    %4654 = sbr.rel (0) target = $region77
  $region76: #{net_forward.1} parent=0 // pred_region
    _
  $region77: #{net_forward.1} parent=0 // pred_fallthru
    _
  // Predicated region
  $region78: #{net_forward.1} parent=0 // pred_check
    _
  $region79: #{net_forward.1} parent=0 // pred_check_branch
    %4656 = sbr.rel (0) target = $region81
  $region80: #{net_forward.1} parent=0 // pred_region
    _
  $region81: #{net_forward.1} parent=0 // pred_fallthru
    _

</llo_original>
